<compile_context>
chip_gen: v7x
topology: tpu7x:2x2x1
jax: 0.10.0
libtpu: 0.0.40
codegen_flags: <defaults>
</compile_context>

<pallas_src>
import jax
import jax.numpy as jnp
from jax.experimental import pallas as pl
from jax.experimental.pallas import tpu as pltpu

NPAD = 128          # lane-dense output width for every matmul
MAX_TILE_M = 512    # row-tile upper bound (block VMEM stays well under limits)
C1_OUT, C2_OUT = 6, 16
_VMEM_LIMIT = 32 * 1024 * 1024


def _round_up(x, m):
    return (x + m - 1) // m * m


def _row_tiling(m, max_tile=MAX_TILE_M, granule=16):
    """Row tile (multiple of 16 for bf16 sublane packing) and padded row count."""
    tile = min(max_tile, _round_up(m, granule))
    return tile, _round_up(m, tile)


# --------------------------------------------------------------------------
# Pallas kernels
# --------------------------------------------------------------------------
def _conv_relu_pool_kernel(x_ref, w_ref, b_ref, o_ref):
    """x_ref: (4, TM, K) bf16 im2col blocks (one per 2x2 pool corner),
    w_ref: (K, 128) bf16, b_ref: (1, 128) f32.
    out = relu(max_corner(x_c @ w) + b)  ==  maxpool2x2(relu(conv(x) + b))."""
    w = w_ref[...]
    acc = jnp.dot(x_ref[0], w, preferred_element_type=jnp.float32)
    for c in range(1, 4):
        acc = jnp.maximum(
            acc, jnp.dot(x_ref[c], w, preferred_element_type=jnp.float32))
    acc = jnp.maximum(acc + b_ref[...], 0.0)
    o_ref[...] = acc.astype(o_ref.dtype)


def _fc_fused_kernel(x_ref, w1_ref, b1_ref, w2_ref, b2_ref, w3_ref, b3_ref, o_ref):
    """Fused fc1(+ReLU) -> fc2(+ReLU) -> fc3; intermediates never leave VMEM."""
    h = jnp.dot(x_ref[...], w1_ref[...], preferred_element_type=jnp.float32)
    h = jnp.maximum(h + b1_ref[...], 0.0)
    h = jnp.dot(h.astype(jnp.bfloat16), w2_ref[...],
                preferred_element_type=jnp.float32)
    h = jnp.maximum(h + b2_ref[...], 0.0)
    h = jnp.dot(h.astype(jnp.bfloat16), w3_ref[...],
                preferred_element_type=jnp.float32)
    o_ref[...] = (h + b3_ref[...]).astype(o_ref.dtype)


# --------------------------------------------------------------------------
# pallas_call wrappers
# --------------------------------------------------------------------------
def conv_relu_pool(cols, w_pad, b_pad):
    """cols: (4, M, K) bf16, w_pad: (K, 128) bf16, b_pad: (1, 128) f32.
    Returns (M_pad, 128) bf16 lane-dense pooled activation (extra rows = pad)."""
    _, m, k = cols.shape
    tile_m, m_pad = _row_tiling(m)
    if m_pad != m:
        cols = jnp.pad(cols, ((0, 0), (0, m_pad - m), (0, 0)))
    grid = (m_pad // tile_m,)
    cost = pl.CostEstimate(
        flops=2 * 4 * m_pad * k * NPAD,
        transcendentals=0,
        bytes_accessed=cols.size * 2 + w_pad.size * 2 + b_pad.size * 4
        + m_pad * NPAD * 2,
    )
    return pl.pallas_call(
        _conv_relu_pool_kernel,
        out_shape=jax.ShapeDtypeStruct((m_pad, NPAD), jnp.bfloat16),
        grid=grid,
        in_specs=[
            pl.BlockSpec((4, tile_m, k), lambda i: (0, i, 0)),
            pl.BlockSpec((k, NPAD), lambda i: (0, 0)),
            pl.BlockSpec((1, NPAD), lambda i: (0, 0)),
        ],
        out_specs=pl.BlockSpec((tile_m, NPAD), lambda i: (i, 0)),
        compiler_params=pltpu.CompilerParams(
            dimension_semantics=("parallel",),
            vmem_limit_bytes=_VMEM_LIMIT),
        cost_estimate=cost,
    )(cols, w_pad, b_pad)


def fc_fused(x, w1, b1, w2, b2, w3, b3):
    """x: (B, 3200) bf16; w*: bf16 (K, 128)-padded; b*: (1, 128) f32 -> (Bp, 128) f32."""
    m, k = x.shape
    tile_m, m_pad = _row_tiling(m)
    if m_pad != m:
        x = jnp.pad(x, ((0, m_pad - m), (0, 0)))
    grid = (m_pad // tile_m,)
    cost = pl.CostEstimate(
        flops=2 * m_pad * (k * NPAD + NPAD * NPAD + NPAD * NPAD),
        transcendentals=0,
        bytes_accessed=x.size * 2 + (w1.size + w2.size + w3.size) * 2
        + (b1.size + b2.size + b3.size) * 4 + m_pad * NPAD * 4,
    )
    return pl.pallas_call(
        _fc_fused_kernel,
        out_shape=jax.ShapeDtypeStruct((m_pad, NPAD), jnp.float32),
        grid=grid,
        in_specs=[
            pl.BlockSpec((tile_m, k), lambda i: (i, 0)),
            pl.BlockSpec((k, NPAD), lambda i: (0, 0)),
            pl.BlockSpec((1, NPAD), lambda i: (0, 0)),
            pl.BlockSpec((NPAD, NPAD), lambda i: (0, 0)),
            pl.BlockSpec((1, NPAD), lambda i: (0, 0)),
            pl.BlockSpec((NPAD, NPAD), lambda i: (0, 0)),
            pl.BlockSpec((1, NPAD), lambda i: (0, 0)),
        ],
        out_specs=pl.BlockSpec((tile_m, NPAD), lambda i: (i, 0)),
        compiler_params=pltpu.CompilerParams(
            dimension_semantics=("parallel",),
            vmem_limit_bytes=_VMEM_LIMIT),
        cost_estimate=cost,
    )(x, w1, b1, w2, b2, w3, b3)


# --------------------------------------------------------------------------
# Plain-JAX glue: im2col grouped by 2x2 pooling-window corner
# --------------------------------------------------------------------------
def _im2col_pool_corners(x_nhwc, kh, kw):
    """Stride-1 valid-conv patches, grouped by 2x2 pool-window corner.
    Returns ((4, B*PH*PW, kh*kw*C), PH, PW); columns ordered (i, j, cin)."""
    b, h, w, c = x_nhwc.shape
    oh, ow = h - kh + 1, w - kw + 1
    ph, pw = oh // 2, ow // 2
    patches = [x_nhwc[:, i:i + oh, j:j + ow, :]
               for i in range(kh) for j in range(kw)]
    cols = jnp.stack(patches, axis=3).reshape(b, oh, ow, kh * kw * c)
    corners = [
        cols[:, di:2 * ph:2, dj:2 * pw:2, :].reshape(b * ph * pw, kh * kw * c)
        for di in range(2) for dj in range(2)
    ]
    # TODO(synk): generate these shifted views as extra K-tiles inside the matmul
    # via per-(i,j) BlockSpec index_maps instead of materializing the bf16 im2col
    # matrix in HBM.
    return jnp.stack(corners, axis=0), ph, pw


# --------------------------------------------------------------------------
# Parameters: init (PyTorch-like) + one-time TPU layout prep
# --------------------------------------------------------------------------
def init_params(key):
    ks = jax.random.split(key, 10)

    def u(k, shape, fan_in):
        bound = 1.0 / jnp.sqrt(fan_in)
        return jax.random.uniform(k, shape, jnp.float32, -bound, bound)

    return {
        "conv1_w": u(ks[0], (6, 3, 5, 5), 3 * 5 * 5),
        "conv1_b": u(ks[1], (6,), 3 * 5 * 5),
        "conv2_w": u(ks[2], (16, 6, 5, 5), 6 * 5 * 5),
        "conv2_b": u(ks[3], (16,), 6 * 5 * 5),
        "fc1_w": u(ks[4], (400, 120), 400),
        "fc1_b": u(ks[5], (120,), 400),
        "fc2_w": u(ks[6], (120, 84), 120),
        "fc2_b": u(ks[7], (84,), 120),
        "fc3_w": u(ks[8], (84, 10), 84),
        "fc3_b": u(ks[9], (10,), 84),
    }


def prepare_params(params):
    """Pad every matmul's N to 128 lanes, fold the NCHW flatten into fc1's
    weight, cast MXU operands to bf16 (biases stay f32). Done once, outside jit."""
    def pad_b(bvec):
        return jnp.pad(bvec, (0, NPAD - bvec.shape[0])).reshape(1, NPAD).astype(jnp.float32)

    def pad_w(w2d, k_to):
        k, n = w2d.shape
        return jnp.pad(w2d, ((0, k_to - k), (0, NPAD - n))).astype(jnp.bfloat16)

    def conv_w(w):
        cout, cin, kh, kw = w.shape
        w2d = jnp.transpose(w, (2, 3, 1, 0)).reshape(kh * kw * cin, cout)
        return pad_w(w2d, kh * kw * cin)            # row order (i, j, cin)

    # fc1 rows are ordered (c, h, w) in PyTorch's .view(-1, 400); reorder to the
    # lane-dense activation order (h, w, c) and zero-pad c to 128 lanes so the
    # flatten before fc1 is a pure reshape of the lane-dense conv2 output.
    w1 = params["fc1_w"].reshape(C2_OUT, 5, 5, 120)
    w1 = jnp.transpose(w1, (1, 2, 0, 3))                                  # (5,5,16,120)
    w1 = jnp.pad(w1, ((0, 0), (0, 0), (0, NPAD - C2_OUT), (0, NPAD - 120)))
    w1 = w1.reshape(5 * 5 * NPAD, NPAD).astype(jnp.bfloat16)

    return {
        "conv1_w": conv_w(params["conv1_w"]), "conv1_b": pad_b(params["conv1_b"]),
        "conv2_w": conv_w(params["conv2_w"]), "conv2_b": pad_b(params["conv2_b"]),
        "fc1_w": w1,                           "fc1_b": pad_b(params["fc1_b"]),
        "fc2_w": pad_w(params["fc2_w"], NPAD), "fc2_b": pad_b(params["fc2_b"]),
        "fc3_w": pad_w(params["fc3_w"], NPAD), "fc3_b": pad_b(params["fc3_b"]),
    }


# --------------------------------------------------------------------------
# Forward pass
# --------------------------------------------------------------------------
@jax.jit
def net_forward(prep, x):
    # x: (B, 3, 32, 32) NCHW f32
    b = x.shape[0]
    x = jnp.transpose(x, (0, 2, 3, 1)).astype(jnp.bfloat16)           # NHWC bf16

    # conv1 + ReLU + 2x2 maxpool (fused): rows = (b, ph, pw), lanes = Cout (pad 128)
    cols1, ph1, pw1 = _im2col_pool_corners(x, 5, 5)                   # (4, B*196, 75)
    h1 = conv_relu_pool(cols1, prep["conv1_w"], prep["conv1_b"])      # (M1p, 128) bf16
    h1 = h1[: b * ph1 * pw1].reshape(b, ph1, pw1, NPAD)[..., :C1_OUT]  # (B,14,14,6)

    # conv2 + ReLU + 2x2 maxpool (fused)
    cols2, ph2, pw2 = _im2col_pool_corners(h1, 5, 5)                  # (4, B*25, 150)
    h2 = conv_relu_pool(cols2, prep["conv2_w"], prep["conv2_b"])      # (M2p, 128) bf16

    # Flatten: the NCHW `.view(-1, 400)` permutation lives in prep["fc1_w"], so
    # this is a pure reshape of the lane-dense activation (no transpose/slice).
    feat = h2[: b * ph2 * pw2].reshape(b, ph2 * pw2 * NPAD)           # (B, 3200) bf16

    # fc1 -> ReLU -> fc2 -> ReLU -> fc3, all in one kernel.
    out = fc_fused(feat, prep["fc1_w"], prep["fc1_b"], prep["fc2_w"],
                   prep["fc2_b"], prep["fc3_w"], prep["fc3_b"])       # (Bp, 128) f32
    return out[:b, :10]


def _reference_forward(params, x):
    """Pure-JAX f32 reference matching the PyTorch module."""
    dn = ("NCHW", "OIHW", "NCHW")
    y = jax.lax.conv_general_dilated(x, params["conv1_w"], (1, 1), "VALID",
                                     dimension_numbers=dn)
    y = jax.nn.relu(y + params["conv1_b"][None, :, None, None])
    y = jax.lax.reduce_window(y, -jnp.inf, jax.lax.max,
                              (1, 1, 2, 2), (1, 1, 2, 2), "VALID")
    y = jax.lax.conv_general_dilated(y, params["conv2_w"], (1, 1), "VALID",
                                     dimension_numbers=dn)
    y = jax.nn.relu(y + params["conv2_b"][None, :, None, None])
    y = jax.lax.reduce_window(y, -jnp.inf, jax.lax.max,
                              (1, 1, 2, 2), (1, 1, 2, 2), "VALID")
    y = y.reshape(y.shape[0], -1)
    y = jax.nn.relu(y @ params["fc1_w"] + params["fc1_b"])
    y = jax.nn.relu(y @ params["fc2_w"] + params["fc2_b"])
    return y @ params["fc3_w"] + params["fc3_b"]


if __name__ == "__main__":
    key = jax.random.PRNGKey(0)
    pkey, xkey = jax.random.split(key)
    params = init_params(pkey)
    prep = prepare_params(params)
    # Input must be 32x32 so that the 16*5*5 flatten in the reference holds.
    x = jax.random.normal(xkey, (2, 3, 32, 32), jnp.float32)

    out = jax.block_until_ready(net_forward(prep, x))
    assert out.shape == (2, 10), out.shape
    assert bool(jnp.all(jnp.isfinite(out)))

    ref = jax.block_until_ready(_reference_forward(params, x))
    max_err = float(jnp.max(jnp.abs(out - ref)))
    assert max_err < 1e-1, f"max |pallas - reference| = {max_err}"
    print("KERNEL_OK")
</pallas_src>

<mosaic_0001>
module attributes {stable_mosaic.version = 11 : i64} {
  func.func @_conv_relu_pool_kernel(%arg0: i32, %arg1: memref<4x400x75xbf16, #tpu.memory_space<vmem>>, %arg2: memref<75x128xbf16, #tpu.memory_space<vmem>>, %arg3: memref<1x128xf32, #tpu.memory_space<vmem>>, %arg4: memref<400x128xbf16, #tpu.memory_space<vmem>>) attributes {dimension_semantics = [#tpu.dimension_semantics<parallel>], iteration_bounds = array<i64: 1>, scalar_prefetch = 0 : i64, scratch_operands = 0 : i64, tpu.core_type = #tpu.core_type<tc>, window_params = [{transform_indices = @transform_0, window_bounds = array<i64: 4, 400, 75>}, {pipeline_mode = #tpu.pipeline_mode<synchronous>, transform_indices = @transform_1, window_bounds = array<i64: 75, 128>}, {pipeline_mode = #tpu.pipeline_mode<synchronous>, transform_indices = @transform_2, window_bounds = array<i64: 1, 128>}, {transform_indices = @transform_3, window_bounds = array<i64: 400, 128>}]} {
    %c0 = arith.constant 0 : index
    %c0_0 = arith.constant 0 : index
    %0 = vector.load %arg2[%c0, %c0_0] : memref<75x128xbf16, #tpu.memory_space<vmem>>, vector<75x128xbf16>
    %c0_1 = arith.constant 0 : index
    %c0_2 = arith.constant 0 : index
    %c0_3 = arith.constant 0 : index
    %1 = vector.load %arg1[%c0_1, %c0_2, %c0_3] : memref<4x400x75xbf16, #tpu.memory_space<vmem>>, vector<1x400x75xbf16>
    %2 = vector.shape_cast %1 : vector<1x400x75xbf16> to vector<400x75xbf16>
    %cst = arith.constant dense<0.000000e+00> : vector<400x128xf32>
    %3 = tpu.matmul %2, %0, %cst {dimension_numbers = #tpu.dot_dimension_numbers<[1], [0], [0], [1], [0, 0, 1, 1], [], []>} : vector<400x75xbf16>, vector<75x128xbf16>, vector<400x128xf32> -> vector<400x128xf32>
    %c1 = arith.constant 1 : index
    %c0_4 = arith.constant 0 : index
    %c0_5 = arith.constant 0 : index
    %4 = vector.load %arg1[%c1, %c0_4, %c0_5] : memref<4x400x75xbf16, #tpu.memory_space<vmem>>, vector<1x400x75xbf16>
    %5 = vector.shape_cast %4 : vector<1x400x75xbf16> to vector<400x75xbf16>
    %cst_6 = arith.constant dense<0.000000e+00> : vector<400x128xf32>
    %6 = tpu.matmul %5, %0, %cst_6 {dimension_numbers = #tpu.dot_dimension_numbers<[1], [0], [0], [1], [0, 0, 1, 1], [], []>} : vector<400x75xbf16>, vector<75x128xbf16>, vector<400x128xf32> -> vector<400x128xf32>
    %7 = arith.maximumf %3, %6 : vector<400x128xf32>
    %c2 = arith.constant 2 : index
    %c0_7 = arith.constant 0 : index
    %c0_8 = arith.constant 0 : index
    %8 = vector.load %arg1[%c2, %c0_7, %c0_8] : memref<4x400x75xbf16, #tpu.memory_space<vmem>>, vector<1x400x75xbf16>
    %9 = vector.shape_cast %8 : vector<1x400x75xbf16> to vector<400x75xbf16>
    %cst_9 = arith.constant dense<0.000000e+00> : vector<400x128xf32>
    %10 = tpu.matmul %9, %0, %cst_9 {dimension_numbers = #tpu.dot_dimension_numbers<[1], [0], [0], [1], [0, 0, 1, 1], [], []>} : vector<400x75xbf16>, vector<75x128xbf16>, vector<400x128xf32> -> vector<400x128xf32>
    %11 = arith.maximumf %7, %10 : vector<400x128xf32>
    %c3 = arith.constant 3 : index
    %c0_10 = arith.constant 0 : index
    %c0_11 = arith.constant 0 : index
    %12 = vector.load %arg1[%c3, %c0_10, %c0_11] : memref<4x400x75xbf16, #tpu.memory_space<vmem>>, vector<1x400x75xbf16>
    %13 = vector.shape_cast %12 : vector<1x400x75xbf16> to vector<400x75xbf16>
    %cst_12 = arith.constant dense<0.000000e+00> : vector<400x128xf32>
    %14 = tpu.matmul %13, %0, %cst_12 {dimension_numbers = #tpu.dot_dimension_numbers<[1], [0], [0], [1], [0, 0, 1, 1], [], []>} : vector<400x75xbf16>, vector<75x128xbf16>, vector<400x128xf32> -> vector<400x128xf32>
    %15 = arith.maximumf %11, %14 : vector<400x128xf32>
    %c0_13 = arith.constant 0 : index
    %c0_14 = arith.constant 0 : index
    %16 = vector.load %arg3[%c0_13, %c0_14] : memref<1x128xf32, #tpu.memory_space<vmem>>, vector<1x128xf32>
    %17 = vector.broadcast %16 : vector<1x128xf32> to vector<400x128xf32>
    %18 = arith.addf %15, %17 : vector<400x128xf32>
    %cst_15 = arith.constant 0.000000e+00 : f32
    %19 = vector.broadcast %cst_15 : f32 to vector<400x128xf32>
    %20 = arith.maximumf %18, %19 : vector<400x128xf32>
    %21 = arith.truncf %20 : vector<400x128xf32> to vector<400x128xbf16>
    %c0_16 = arith.constant 0 : index
    %c0_17 = arith.constant 0 : index
    %22 = vector.load %arg4[%c0_16, %c0_17] : memref<400x128xbf16, #tpu.memory_space<vmem>>, vector<400x128xbf16>
    tpu.vector_store %arg4[%c0_16, %c0_17], %21 {strides = array<i32>} : memref<400x128xbf16, #tpu.memory_space<vmem>>, vector<400x128xbf16>,
    return
  }
  func.func @transform_0(%arg0: i32) -> (i32, i32, i32) {
    %c0_i32 = arith.constant 0 : i32
    %c0_i32_0 = arith.constant 0 : i32
    %c0_i32_1 = arith.constant 0 : i32
    return %c0_i32, %arg0, %c0_i32_0 : i32, i32, i32
  }
  func.func @transform_1(%arg0: i32) -> (i32, i32) {
    %c0_i32 = arith.constant 0 : i32
    %c0_i32_0 = arith.constant 0 : i32
    %c0_i32_1 = arith.constant 0 : i32
    return %c0_i32, %c0_i32_0 : i32, i32
  }
  func.func @transform_2(%arg0: i32) -> (i32, i32) {
    %c0_i32 = arith.constant 0 : i32
    %c0_i32_0 = arith.constant 0 : i32
    %c0_i32_1 = arith.constant 0 : i32
    return %c0_i32, %c0_i32_0 : i32, i32
  }
  func.func @transform_3(%arg0: i32) -> (i32, i32) {
    %c0_i32 = arith.constant 0 : i32
    %c0_i32_0 = arith.constant 0 : i32
    return %arg0, %c0_i32 : i32, i32
  }
}

module attributes {stable_mosaic.version = 11 : i64} {
  func.func @_conv_relu_pool_kernel(%arg0: i32, %arg1: memref<4x64x150xbf16, #tpu.memory_space<vmem>>, %arg2: memref<150x128xbf16, #tpu.memory_space<vmem>>, %arg3: memref<1x128xf32, #tpu.memory_space<vmem>>, %arg4: memref<64x128xbf16, #tpu.memory_space<vmem>>) attributes {dimension_semantics = [#tpu.dimension_semantics<parallel>], iteration_bounds = array<i64: 1>, scalar_prefetch = 0 : i64, scratch_operands = 0 : i64, tpu.core_type = #tpu.core_type<tc>, window_params = [{transform_indices = @transform_0, window_bounds = array<i64: 4, 64, 150>}, {pipeline_mode = #tpu.pipeline_mode<synchronous>, transform_indices = @transform_1, window_bounds = array<i64: 150, 128>}, {pipeline_mode = #tpu.pipeline_mode<synchronous>, transform_indices = @transform_2, window_bounds = array<i64: 1, 128>}, {transform_indices = @transform_3, window_bounds = array<i64: 64, 128>}]} {
    %c0 = arith.constant 0 : index
    %c0_0 = arith.constant 0 : index
    %0 = vector.load %arg2[%c0, %c0_0] : memref<150x128xbf16, #tpu.memory_space<vmem>>, vector<150x128xbf16>
    %c0_1 = arith.constant 0 : index
    %c0_2 = arith.constant 0 : index
    %c0_3 = arith.constant 0 : index
    %1 = vector.load %arg1[%c0_1, %c0_2, %c0_3] : memref<4x64x150xbf16, #tpu.memory_space<vmem>>, vector<1x64x150xbf16>
    %2 = vector.shape_cast %1 : vector<1x64x150xbf16> to vector<64x150xbf16>
    %cst = arith.constant dense<0.000000e+00> : vector<64x128xf32>
    %3 = tpu.matmul %2, %0, %cst {dimension_numbers = #tpu.dot_dimension_numbers<[1], [0], [0], [1], [0, 0, 1, 1], [], []>} : vector<64x150xbf16>, vector<150x128xbf16>, vector<64x128xf32> -> vector<64x128xf32>
    %c1 = arith.constant 1 : index
    %c0_4 = arith.constant 0 : index
    %c0_5 = arith.constant 0 : index
    %4 = vector.load %arg1[%c1, %c0_4, %c0_5] : memref<4x64x150xbf16, #tpu.memory_space<vmem>>, vector<1x64x150xbf16>
    %5 = vector.shape_cast %4 : vector<1x64x150xbf16> to vector<64x150xbf16>
    %cst_6 = arith.constant dense<0.000000e+00> : vector<64x128xf32>
    %6 = tpu.matmul %5, %0, %cst_6 {dimension_numbers = #tpu.dot_dimension_numbers<[1], [0], [0], [1], [0, 0, 1, 1], [], []>} : vector<64x150xbf16>, vector<150x128xbf16>, vector<64x128xf32> -> vector<64x128xf32>
    %7 = arith.maximumf %3, %6 : vector<64x128xf32>
    %c2 = arith.constant 2 : index
    %c0_7 = arith.constant 0 : index
    %c0_8 = arith.constant 0 : index
    %8 = vector.load %arg1[%c2, %c0_7, %c0_8] : memref<4x64x150xbf16, #tpu.memory_space<vmem>>, vector<1x64x150xbf16>
    %9 = vector.shape_cast %8 : vector<1x64x150xbf16> to vector<64x150xbf16>
    %cst_9 = arith.constant dense<0.000000e+00> : vector<64x128xf32>
    %10 = tpu.matmul %9, %0, %cst_9 {dimension_numbers = #tpu.dot_dimension_numbers<[1], [0], [0], [1], [0, 0, 1, 1], [], []>} : vector<64x150xbf16>, vector<150x128xbf16>, vector<64x128xf32> -> vector<64x128xf32>
    %11 = arith.maximumf %7, %10 : vector<64x128xf32>
    %c3 = arith.constant 3 : index
    %c0_10 = arith.constant 0 : index
    %c0_11 = arith.constant 0 : index
    %12 = vector.load %arg1[%c3, %c0_10, %c0_11] : memref<4x64x150xbf16, #tpu.memory_space<vmem>>, vector<1x64x150xbf16>
    %13 = vector.shape_cast %12 : vector<1x64x150xbf16> to vector<64x150xbf16>
    %cst_12 = arith.constant dense<0.000000e+00> : vector<64x128xf32>
    %14 = tpu.matmul %13, %0, %cst_12 {dimension_numbers = #tpu.dot_dimension_numbers<[1], [0], [0], [1], [0, 0, 1, 1], [], []>} : vector<64x150xbf16>, vector<150x128xbf16>, vector<64x128xf32> -> vector<64x128xf32>
    %15 = arith.maximumf %11, %14 : vector<64x128xf32>
    %c0_13 = arith.constant 0 : index
    %c0_14 = arith.constant 0 : index
    %16 = vector.load %arg3[%c0_13, %c0_14] : memref<1x128xf32, #tpu.memory_space<vmem>>, vector<1x128xf32>
    %17 = vector.broadcast %16 : vector<1x128xf32> to vector<64x128xf32>
    %18 = arith.addf %15, %17 : vector<64x128xf32>
    %cst_15 = arith.constant 0.000000e+00 : f32
    %19 = vector.broadcast %cst_15 : f32 to vector<64x128xf32>
    %20 = arith.maximumf %18, %19 : vector<64x128xf32>
    %21 = arith.truncf %20 : vector<64x128xf32> to vector<64x128xbf16>
    %c0_16 = arith.constant 0 : index
    %c0_17 = arith.constant 0 : index
    %22 = vector.load %arg4[%c0_16, %c0_17] : memref<64x128xbf16, #tpu.memory_space<vmem>>, vector<64x128xbf16>
    tpu.vector_store %arg4[%c0_16, %c0_17], %21 {strides = array<i32>} : memref<64x128xbf16, #tpu.memory_space<vmem>>, vector<64x128xbf16>,
    return
  }
  func.func @transform_0(%arg0: i32) -> (i32, i32, i32) {
    %c0_i32 = arith.constant 0 : i32
    %c0_i32_0 = arith.constant 0 : i32
    %c0_i32_1 = arith.constant 0 : i32
    return %c0_i32, %arg0, %c0_i32_0 : i32, i32, i32
  }
  func.func @transform_1(%arg0: i32) -> (i32, i32) {
    %c0_i32 = arith.constant 0 : i32
    %c0_i32_0 = arith.constant 0 : i32
    %c0_i32_1 = arith.constant 0 : i32
    return %c0_i32, %c0_i32_0 : i32, i32
  }
  func.func @transform_2(%arg0: i32) -> (i32, i32) {
    %c0_i32 = arith.constant 0 : i32
    %c0_i32_0 = arith.constant 0 : i32
    %c0_i32_1 = arith.constant 0 : i32
    return %c0_i32, %c0_i32_0 : i32, i32
  }
  func.func @transform_3(%arg0: i32) -> (i32, i32) {
    %c0_i32 = arith.constant 0 : i32
    %c0_i32_0 = arith.constant 0 : i32
    return %arg0, %c0_i32 : i32, i32
  }
}

module attributes {stable_mosaic.version = 11 : i64} {
  func.func @_fc_fused_kernel(%arg0: i32, %arg1: memref<16x3200xbf16, #tpu.memory_space<vmem>>, %arg2: memref<3200x128xbf16, #tpu.memory_space<vmem>>, %arg3: memref<1x128xf32, #tpu.memory_space<vmem>>, %arg4: memref<128x128xbf16, #tpu.memory_space<vmem>>, %arg5: memref<1x128xf32, #tpu.memory_space<vmem>>, %arg6: memref<128x128xbf16, #tpu.memory_space<vmem>>, %arg7: memref<1x128xf32, #tpu.memory_space<vmem>>, %arg8: memref<16x128xf32, #tpu.memory_space<vmem>>) attributes {dimension_semantics = [#tpu.dimension_semantics<parallel>], iteration_bounds = array<i64: 1>, scalar_prefetch = 0 : i64, scratch_operands = 0 : i64, tpu.core_type = #tpu.core_type<tc>, window_params = [{transform_indices = @transform_0, window_bounds = array<i64: 16, 3200>}, {pipeline_mode = #tpu.pipeline_mode<synchronous>, transform_indices = @transform_1, window_bounds = array<i64: 3200, 128>}, {pipeline_mode = #tpu.pipeline_mode<synchronous>, transform_indices = @transform_2, window_bounds = array<i64: 1, 128>}, {pipeline_mode = #tpu.pipeline_mode<synchronous>, transform_indices = @transform_3, window_bounds = array<i64: 128, 128>}, {pipeline_mode = #tpu.pipeline_mode<synchronous>, transform_indices = @transform_4, window_bounds = array<i64: 1, 128>}, {pipeline_mode = #tpu.pipeline_mode<synchronous>, transform_indices = @transform_5, window_bounds = array<i64: 128, 128>}, {pipeline_mode = #tpu.pipeline_mode<synchronous>, transform_indices = @transform_6, window_bounds = array<i64: 1, 128>}, {transform_indices = @transform_7, window_bounds = array<i64: 16, 128>}]} {
    %c0 = arith.constant 0 : index
    %c0_0 = arith.constant 0 : index
    %0 = vector.load %arg1[%c0, %c0_0] : memref<16x3200xbf16, #tpu.memory_space<vmem>>, vector<16x3200xbf16>
    %c0_1 = arith.constant 0 : index
    %c0_2 = arith.constant 0 : index
    %1 = vector.load %arg2[%c0_1, %c0_2] : memref<3200x128xbf16, #tpu.memory_space<vmem>>, vector<3200x128xbf16>
    %cst = arith.constant dense<0.000000e+00> : vector<16x128xf32>
    %2 = tpu.matmul %0, %1, %cst {dimension_numbers = #tpu.dot_dimension_numbers<[1], [0], [0], [1], [0, 0, 1, 1], [], []>} : vector<16x3200xbf16>, vector<3200x128xbf16>, vector<16x128xf32> -> vector<16x128xf32>
    %c0_3 = arith.constant 0 : index
    %c0_4 = arith.constant 0 : index
    %3 = vector.load %arg3[%c0_3, %c0_4] : memref<1x128xf32, #tpu.memory_space<vmem>>, vector<1x128xf32>
    %4 = vector.broadcast %3 : vector<1x128xf32> to vector<16x128xf32>
    %5 = arith.addf %2, %4 : vector<16x128xf32>
    %cst_5 = arith.constant 0.000000e+00 : f32
    %6 = vector.broadcast %cst_5 : f32 to vector<16x128xf32>
    %7 = arith.maximumf %5, %6 : vector<16x128xf32>
    %8 = arith.truncf %7 : vector<16x128xf32> to vector<16x128xbf16>
    %c0_6 = arith.constant 0 : index
    %c0_7 = arith.constant 0 : index
    %9 = vector.load %arg4[%c0_6, %c0_7] : memref<128x128xbf16, #tpu.memory_space<vmem>>, vector<128x128xbf16>
    %cst_8 = arith.constant dense<0.000000e+00> : vector<16x128xf32>
    %10 = tpu.matmul %8, %9, %cst_8 {dimension_numbers = #tpu.dot_dimension_numbers<[1], [0], [0], [1], [0, 0, 1, 1], [], []>} : vector<16x128xbf16>, vector<128x128xbf16>, vector<16x128xf32> -> vector<16x128xf32>
    %c0_9 = arith.constant 0 : index
    %c0_10 = arith.constant 0 : index
    %11 = vector.load %arg5[%c0_9, %c0_10] : memref<1x128xf32, #tpu.memory_space<vmem>>, vector<1x128xf32>
    %12 = vector.broadcast %11 : vector<1x128xf32> to vector<16x128xf32>
    %13 = arith.addf %10, %12 : vector<16x128xf32>
    %cst_11 = arith.constant 0.000000e+00 : f32
    %14 = vector.broadcast %cst_11 : f32 to vector<16x128xf32>
    %15 = arith.maximumf %13, %14 : vector<16x128xf32>
    %16 = arith.truncf %15 : vector<16x128xf32> to vector<16x128xbf16>
    %c0_12 = arith.constant 0 : index
    %c0_13 = arith.constant 0 : index
    %17 = vector.load %arg6[%c0_12, %c0_13] : memref<128x128xbf16, #tpu.memory_space<vmem>>, vector<128x128xbf16>
    %cst_14 = arith.constant dense<0.000000e+00> : vector<16x128xf32>
    %18 = tpu.matmul %16, %17, %cst_14 {dimension_numbers = #tpu.dot_dimension_numbers<[1], [0], [0], [1], [0, 0, 1, 1], [], []>} : vector<16x128xbf16>, vector<128x128xbf16>, vector<16x128xf32> -> vector<16x128xf32>
    %c0_15 = arith.constant 0 : index
    %c0_16 = arith.constant 0 : index
    %19 = vector.load %arg7[%c0_15, %c0_16] : memref<1x128xf32, #tpu.memory_space<vmem>>, vector<1x128xf32>
    %20 = vector.broadcast %19 : vector<1x128xf32> to vector<16x128xf32>
    %21 = arith.addf %18, %20 : vector<16x128xf32>
    %c0_17 = arith.constant 0 : index
    %c0_18 = arith.constant 0 : index
    %22 = vector.load %arg8[%c0_17, %c0_18] : memref<16x128xf32, #tpu.memory_space<vmem>>, vector<16x128xf32>
    tpu.vector_store %arg8[%c0_17, %c0_18], %21 {strides = array<i32>} : memref<16x128xf32, #tpu.memory_space<vmem>>, vector<16x128xf32>,
    return
  }
  func.func @transform_0(%arg0: i32) -> (i32, i32) {
    %c0_i32 = arith.constant 0 : i32
    %c0_i32_0 = arith.constant 0 : i32
    return %arg0, %c0_i32 : i32, i32
  }
  func.func @transform_1(%arg0: i32) -> (i32, i32) {
    %c0_i32 = arith.constant 0 : i32
    %c0_i32_0 = arith.constant 0 : i32
    %c0_i32_1 = arith.constant 0 : i32
    return %c0_i32, %c0_i32_0 : i32, i32
  }
  func.func @transform_2(%arg0: i32) -> (i32, i32) {
    %c0_i32 = arith.constant 0 : i32
    %c0_i32_0 = arith.constant 0 : i32
    %c0_i32_1 = arith.constant 0 : i32
    return %c0_i32, %c0_i32_0 : i32, i32
  }
  func.func @transform_3(%arg0: i32) -> (i32, i32) {
    %c0_i32 = arith.constant 0 : i32
    %c0_i32_0 = arith.constant 0 : i32
    %c0_i32_1 = arith.constant 0 : i32
    return %c0_i32, %c0_i32_0 : i32, i32
  }
  func.func @transform_4(%arg0: i32) -> (i32, i32) {
    %c0_i32 = arith.constant 0 : i32
    %c0_i32_0 = arith.constant 0 : i32
    %c0_i32_1 = arith.constant 0 : i32
    return %c0_i32, %c0_i32_0 : i32, i32
  }
  func.func @transform_5(%arg0: i32) -> (i32, i32) {
    %c0_i32 = arith.constant 0 : i32
    %c0_i32_0 = arith.constant 0 : i32
    %c0_i32_1 = arith.constant 0 : i32
    return %c0_i32, %c0_i32_0 : i32, i32
  }
  func.func @transform_6(%arg0: i32) -> (i32, i32) {
    %c0_i32 = arith.constant 0 : i32
    %c0_i32_0 = arith.constant 0 : i32
    %c0_i32_1 = arith.constant 0 : i32
    return %c0_i32, %c0_i32_0 : i32, i32
  }
  func.func @transform_7(%arg0: i32) -> (i32, i32) {
    %c0_i32 = arith.constant 0 : i32
    %c0_i32_0 = arith.constant 0 : i32
    return %arg0, %c0_i32 : i32, i32
  }
}

</mosaic_0001>

<llo_original>
// kernel: net_forward.3
$region0: #{net_forward.3}
  #allocation0 [shape = 'u32[]', space=smem, size = 0x4, offset = 0x4, fixed_abs, tag = 'smem constant byte address 0x4 - core index']
  #allocation1 [shape = 'u32[144,128]{1,0:T(1,128)}', space=vmem, size = 0x12000, scoped, tag = 'internal scratch']
  %s0 = inlined_call_operand.vmem [shape: bf16[4,400,75], index: 0, kind: input, shape index: {}]
  %s1 = inlined_call_operand.vmem [shape: bf16[75,128], index: 1, kind: input, shape index: {}]
  %s2 = inlined_call_operand.vmem [shape: f32[1,128], index: 2, kind: input, shape index: {}]
  %s3 = inlined_call_operand.vmem [shape: bf16[400,128], index: 3, kind: output, shape index: {}]
  %s4 = sld [smem:[#allocation0]]
  $region22: #{net_forward.3} parent=0
    _
  %s6 = ssub.s32 1, %s4
  %s7 = scalar_select 0, %s6, %s4
  // Predicated region
  $region2: #{net_forward.3} parent=0 // pred_check
    _
  $region3: #{net_forward.3} parent=0 // pred_check_branch
    %9 = sbr.rel (0) target = $region5
  $region4: #{net_forward.3} parent=0 // pred_region
    _
  $region5: #{net_forward.3} parent=0 // pred_fallthru
    _
  // Predicated region
  $region6: #{net_forward.3} parent=0 // pred_check
    _
  $region7: #{net_forward.3} parent=0 // pred_check_branch
    %11 = sbr.rel (0) target = $region9
  $region8: #{net_forward.3} parent=0 // pred_region
    _
  $region9: #{net_forward.3} parent=0 // pred_fallthru
    _
  // Predicated region
  $region10: #{net_forward.3} parent=0 // pred_check
    _
  $region11: #{net_forward.3} parent=0 // pred_check_branch
    %13 = sbr.rel (0) target = $region13
  $region12: #{net_forward.3} parent=0 // pred_region
    _
  $region13: #{net_forward.3} parent=0 // pred_fallthru
    _
  %v15 = vld [vmem:[%s1] sm:$0xf]
  %v16 = vld [vmem:[%s1 + $0x4] sm:$0xf]
  %v17 = vld [vmem:[%s1 + $0x8] sm:$0xf]
  %v18 = vld [vmem:[%s1 + $0xc] sm:$0xf]
  %v19 = vld [vmem:[%s1 + $0x10] sm:$0xf]
  %v20 = vld [vmem:[%s1 + $0x14] sm:$0xf]
  %v21 = vld [vmem:[%s1 + $0x18] sm:$0xf]
  %v22 = vld [vmem:[%s1 + $0x1c] sm:$0xf]
  %v23 = vld [vmem:[%s1 + $0x20] sm:$0xf]
  %v24 = vld [vmem:[%s1 + $0x24] sm:$0x3]
  %v25 = vld [vmem:[%s0] sm:$0xf]
  %v26 = vld [vmem:[%s0 + $0x4] sm:$0xf]
  %v27 = vld [vmem:[%s0 + $0x8] sm:$0xf]
  %v28 = vld [vmem:[%s0 + $0xc] sm:$0xf]
  %v29 = vld [vmem:[%s0 + $0x10] sm:$0xf]
  %v30 = vld [vmem:[%s0 + $0x14] sm:$0xf]
  %v31 = vld [vmem:[%s0 + $0x18] sm:$0xf]
  %v32 = vld [vmem:[%s0 + $0x1c] sm:$0xf]
  %v33 = vld [vmem:[%s0 + $0x20] sm:$0xf]
  %v34 = vld [vmem:[%s0 + $0x24] sm:$0xf]
  %v35 = vld [vmem:[%s0 + $0x28] sm:$0xf]
  %v36 = vld [vmem:[%s0 + $0x2c] sm:$0xf]
  %v37 = vld [vmem:[%s0 + $0x30] sm:$0xf]
  %v38 = vld [vmem:[%s0 + $0x34] sm:$0xf]
  %v39 = vld [vmem:[%s0 + $0x38] sm:$0xf]
  %v40 = vld [vmem:[%s0 + $0x3c] sm:$0xf]
  %v41 = vld [vmem:[%s0 + $0x40] sm:$0xf]
  %v42 = vld [vmem:[%s0 + $0x44] sm:$0xf]
  %v43 = vld [vmem:[%s0 + $0x48] sm:$0xf]
  %v44 = vld [vmem:[%s0 + $0x4c] sm:$0xf]
  %v45 = vld [vmem:[%s0 + $0x50] sm:$0xf]
  %v46 = vld [vmem:[%s0 + $0x54] sm:$0xf]
  %v47 = vld [vmem:[%s0 + $0x58] sm:$0xf]
  %v48 = vld [vmem:[%s0 + $0x5c] sm:$0xf]
  %v49 = vld [vmem:[%s0 + $0x60] sm:$0xf]
  %v50 = vld [vmem:[%s0 + $0x64] sm:$0xf]
  %v51 = vld [vmem:[%s0 + $0x68] sm:$0xf]
  %v52 = vld [vmem:[%s0 + $0x6c] sm:$0xf]
  %v53 = vld [vmem:[%s0 + $0x70] sm:$0xf]
  %v54 = vld [vmem:[%s0 + $0x74] sm:$0xf]
  %v55 = vld [vmem:[%s0 + $0x78] sm:$0xf]
  %v56 = vld [vmem:[%s0 + $0x7c] sm:$0xf]
  %v57 = vld [vmem:[%s0 + $0x80] sm:$0xf]
  %v58 = vld [vmem:[%s0 + $0x84] sm:$0xf]
  %v59 = vld [vmem:[%s0 + $0x88] sm:$0xf]
  %v60 = vld [vmem:[%s0 + $0x8c] sm:$0xf]
  %v61 = vld [vmem:[%s0 + $0x90] sm:$0xf]
  %v62 = vld [vmem:[%s0 + $0x94] sm:$0xf]
  %v63 = vld [vmem:[%s0 + $0x98] sm:$0xf]
  %v64 = vld [vmem:[%s0 + $0x9c] sm:$0xf]
  %v65 = vld [vmem:[%s0 + $0xa0] sm:$0xf]
  %v66 = vld [vmem:[%s0 + $0xa4] sm:$0xf]
  %v67 = vld [vmem:[%s0 + $0xa8] sm:$0xf]
  %v68 = vld [vmem:[%s0 + $0xac] sm:$0xf]
  %v69 = vld [vmem:[%s0 + $0xb0] sm:$0xf]
  %v70 = vld [vmem:[%s0 + $0xb4] sm:$0xf]
  %v71 = vld [vmem:[%s0 + $0xb8] sm:$0xf]
  %v72 = vld [vmem:[%s0 + $0xbc] sm:$0xf]
  %v73 = vld [vmem:[%s0 + $0xc0] sm:$0xf]
  %v74 = vld [vmem:[%s0 + $0xc4] sm:$0xf]
  %v125 = vunpack.c.l.b16 %v25
  %v126 = vunpack.c.l.b16 %v26
  %v127 = vunpack.c.l.b16 %v27
  %v128 = vunpack.c.l.b16 %v28
  %v129 = vunpack.c.l.b16 %v29
  %v130 = vunpack.c.l.b16 %v30
  %v131 = vunpack.c.l.b16 %v31
  %v132 = vunpack.c.l.b16 %v32
  %v133 = vunpack.c.l.b16 %v33
  %v134 = vunpack.c.l.b16 %v34
  %v135 = vunpack.c.l.b16 %v35
  %v136 = vunpack.c.l.b16 %v36
  %v137 = vunpack.c.l.b16 %v37
  %v138 = vunpack.c.l.b16 %v38
  %v139 = vunpack.c.l.b16 %v39
  %v140 = vunpack.c.l.b16 %v40
  %v141 = vunpack.c.l.b16 %v41
  %v142 = vunpack.c.l.b16 %v42
  %v143 = vunpack.c.l.b16 %v43
  %v144 = vunpack.c.l.b16 %v44
  %v145 = vunpack.c.l.b16 %v45
  %v146 = vunpack.c.l.b16 %v46
  %v147 = vunpack.c.l.b16 %v47
  %v148 = vunpack.c.l.b16 %v48
  %v149 = vunpack.c.l.b16 %v49
  %v150 = vunpack.c.l.b16 %v50
  %v151 = vunpack.c.l.b16 %v51
  %v152 = vunpack.c.l.b16 %v52
  %v153 = vunpack.c.l.b16 %v53
  %v154 = vunpack.c.l.b16 %v54
  %v155 = vunpack.c.l.b16 %v55
  %v156 = vunpack.c.l.b16 %v56
  %v157 = vunpack.c.l.b16 %v57
  %v158 = vunpack.c.l.b16 %v58
  %v159 = vunpack.c.l.b16 %v59
  %v160 = vunpack.c.l.b16 %v60
  %v161 = vunpack.c.l.b16 %v61
  %v162 = vunpack.c.l.b16 %v62
  %v163 = vunpack.c.l.b16 %v63
  %v164 = vunpack.c.l.b16 %v64
  %v165 = vunpack.c.l.b16 %v65
  %v166 = vunpack.c.l.b16 %v66
  %v167 = vunpack.c.l.b16 %v67
  %v168 = vunpack.c.l.b16 %v68
  %v169 = vunpack.c.l.b16 %v69
  %v170 = vunpack.c.l.b16 %v70
  %v171 = vunpack.c.l.b16 %v71
  %v172 = vunpack.c.l.b16 %v72
  %v173 = vunpack.c.l.b16 %v73
  %v174 = vunpack.c.l.b16 %v74
  %v175 = vpack.c.b16 %v126, %v125
  %v176 = vpack.c.b16 %v128, %v127
  %v177 = vpack.c.b16 %v130, %v129
  %v178 = vpack.c.b16 %v132, %v131
  %v179 = vpack.c.b16 %v134, %v133
  %v180 = vpack.c.b16 %v136, %v135
  %v181 = vpack.c.b16 %v138, %v137
  %v182 = vpack.c.b16 %v140, %v139
  %v183 = vpack.c.b16 %v142, %v141
  %v184 = vpack.c.b16 %v144, %v143
  %v185 = vpack.c.b16 %v146, %v145
  %v186 = vpack.c.b16 %v148, %v147
  %v187 = vpack.c.b16 %v150, %v149
  %v188 = vpack.c.b16 %v152, %v151
  %v189 = vpack.c.b16 %v154, %v153
  %v190 = vpack.c.b16 %v156, %v155
  %v191 = vpack.c.b16 %v158, %v157
  %v192 = vpack.c.b16 %v160, %v159
  %v193 = vpack.c.b16 %v162, %v161
  %v194 = vpack.c.b16 %v164, %v163
  %v195 = vpack.c.b16 %v166, %v165
  %v196 = vpack.c.b16 %v168, %v167
  %v197 = vpack.c.b16 %v170, %v169
  %v198 = vpack.c.b16 %v172, %v171
  %v199 = vpack.c.b16 %v174, %v173
  %v210 = vunpack.c.l.b16 %v15
  %v211 = vunpack.c.l.b16 %v16
  %v212 = vunpack.c.l.b16 %v17
  %v213 = vunpack.c.l.b16 %v18
  %v214 = vunpack.c.l.b16 %v19
  %v215 = vunpack.c.l.b16 %v20
  %v216 = vunpack.c.l.b16 %v21
  %v217 = vunpack.c.l.b16 %v22
  %v218 = vunpack.c.l.b16 %v23
  %v219 = vunpack.c.l.b16 %v24
  %v220 = vpack.c.b16 %v211, %v210
  %v221 = vpack.c.b16 %v213, %v212
  %v222 = vpack.c.b16 %v215, %v214
  %v223 = vpack.c.b16 %v217, %v216
  %v224 = vpack.c.b16 %v219, %v218
  %vm229 = vcmask 613376
  %v231 = vsel %vm229, %v175, 0
  %v234 = vsel %vm229, %v176, 0
  %v237 = vsel %vm229, %v177, 0
  %v240 = vsel %vm229, %v178, 0
  %v243 = vsel %vm229, %v179, 0
  %v246 = vsel %vm229, %v180, 0
  %v249 = vsel %vm229, %v181, 0
  %v252 = vsel %vm229, %v182, 0
  %v255 = vsel %vm229, %v183, 0
  %v258 = vsel %vm229, %v184, 0
  %v261 = vsel %vm229, %v185, 0
  %v264 = vsel %vm229, %v186, 0
  %v267 = vsel %vm229, %v187, 0
  %v270 = vsel %vm229, %v188, 0
  %v273 = vsel %vm229, %v189, 0
  %v276 = vsel %vm229, %v190, 0
  %v279 = vsel %vm229, %v191, 0
  %v282 = vsel %vm229, %v192, 0
  %v285 = vsel %vm229, %v193, 0
  %v288 = vsel %vm229, %v194, 0
  %v291 = vsel %vm229, %v195, 0
  %v294 = vsel %vm229, %v196, 0
  %v297 = vsel %vm229, %v197, 0
  %v300 = vsel %vm229, %v198, 0
  %v303 = vsel %vm229, %v199, 0
  %vm305 = vcmask 1044480
  %vm306 = vcmask 1045504
  %v307 = vsel %vm305, 4294967295, 65535
  %v308 = vsel %vm306, %v307, 0
  %v310 = vand.u32 %v224, %v308
  %312 = vmatprep.subr.bf16.mxu0 0
  %313 = vmatpush1.bf16.msra.mxu0 %v220
  %314 = vmatprep.subr.bf16.mxu0 0
  %315 = vmatpush1.bf16.msra.mxu0 %v221
  %316 = vmatprep.subr.bf16.mxu0 0
  %317 = vmatpush1.bf16.msra.mxu0 %v222
  %318 = vmatprep.subr.bf16.mxu0 0
  %319 = vmatpush1.bf16.msra.mxu0 %v223
  %320 = vmatprep.subr.bf16.mxu0 0
  %321 = vmatpush1.bf16.msra.mxu0 %v310
  %322 = vmatprep.subr.bf16.mxu0 0
  %323 = vmatpush1.bf16.msra.mxu0 0
  %324 = vmatprep.subr.bf16.mxu0 0
  %325 = vmatpush1.bf16.msra.mxu0 0
  %326 = vmatprep.subr.bf16.mxu0 0
  %327 = vmatpush1.bf16.msra.mxu0 0
  %328 = vmatprep.subr.bf16.mxu0 0
  %329 = vmatpush1.bf16.msra.mxu0 0
  %330 = vmatprep.subr.bf16.mxu0 0
  %331 = vmatpush1.bf16.msra.mxu0 0
  %332 = vmatprep.subr.bf16.mxu0 0
  %333 = vmatpush1.bf16.msra.mxu0 0
  %334 = vmatprep.subr.bf16.mxu0 0
  %335 = vmatpush1.bf16.msra.mxu0 0
  %336 = vmatprep.subr.bf16.mxu0 0
  %337 = vmatpush1.bf16.msra.mxu0 0
  %338 = vmatprep.subr.bf16.mxu0 0
  %339 = vmatpush1.bf16.msra.mxu0 0
  %340 = vmatprep.subr.bf16.mxu0 0
  %341 = vmatpush1.bf16.msra.mxu0 0
  %342 = vmatprep.subr.bf16.mxu0 0
  %343 = vmatpush1.bf16.msra.mxu0 0
  %344 = vmatprep.mubr.bf16.mxu0 0
  %345 = vmatmul.mubr.bf16.gmra.mrb[0].mxu0 %v231
  %v346 = vpop.f32.mrb[0].mxu0
  %v347 = vadd.f32 0.0, %v346
  %v348 = vpop.f32.mrb[0].mxu0
  %v349 = vpop.f32.mrb[0].mxu0
  %v350 = vadd.f32 0.0, %v349
  %v351 = vpop.f32.mrb[0].mxu0
  %352 = vmatprep.mubr.bf16.mxu0 0
  %353 = vmatmul.mubr.bf16.gmra.mrb[0].mxu0 %v234
  %v354 = vpop.f32.mrb[0].mxu0
  %v355 = vadd.f32 0.0, %v354
  %v356 = vpop.f32.mrb[0].mxu0
  %v357 = vpop.f32.mrb[0].mxu0
  %v358 = vadd.f32 0.0, %v357
  %v359 = vpop.f32.mrb[0].mxu0
  %360 = vmatprep.mubr.bf16.mxu0 0
  %361 = vmatmul.mubr.bf16.gmra.mrb[0].mxu0 %v237
  %v362 = vpop.f32.mrb[0].mxu0
  %v363 = vadd.f32 0.0, %v362
  %v364 = vpop.f32.mrb[0].mxu0
  %v365 = vpop.f32.mrb[0].mxu0
  %v366 = vadd.f32 0.0, %v365
  %v367 = vpop.f32.mrb[0].mxu0
  %368 = vmatprep.mubr.bf16.mxu0 0
  %369 = vmatmul.mubr.bf16.gmra.mrb[0].mxu0 %v240
  %v370 = vpop.f32.mrb[0].mxu0
  %v371 = vadd.f32 0.0, %v370
  %v372 = vpop.f32.mrb[0].mxu0
  %v373 = vpop.f32.mrb[0].mxu0
  %v374 = vadd.f32 0.0, %v373
  %v375 = vpop.f32.mrb[0].mxu0
  %376 = vmatprep.mubr.bf16.mxu0 0
  %377 = vmatmul.mubr.bf16.gmra.mrb[0].mxu0 %v243
  %v378 = vpop.f32.mrb[0].mxu0
  %v379 = vadd.f32 0.0, %v378
  %v380 = vpop.f32.mrb[0].mxu0
  %v381 = vpop.f32.mrb[0].mxu0
  %v382 = vadd.f32 0.0, %v381
  %v383 = vpop.f32.mrb[0].mxu0
  %384 = vmatprep.mubr.bf16.mxu0 0
  %385 = vmatmul.mubr.bf16.gmra.mrb[0].mxu0 %v246
  %v386 = vpop.f32.mrb[0].mxu0
  %v387 = vadd.f32 0.0, %v386
  %v388 = vpop.f32.mrb[0].mxu0
  %v389 = vpop.f32.mrb[0].mxu0
  %v390 = vadd.f32 0.0, %v389
  %v391 = vpop.f32.mrb[0].mxu0
  %392 = vmatprep.mubr.bf16.mxu0 0
  %393 = vmatmul.mubr.bf16.gmra.mrb[0].mxu0 %v249
  %v394 = vpop.f32.mrb[0].mxu0
  %v395 = vadd.f32 0.0, %v394
  %v396 = vpop.f32.mrb[0].mxu0
  %v397 = vpop.f32.mrb[0].mxu0
  %v398 = vadd.f32 0.0, %v397
  %v399 = vpop.f32.mrb[0].mxu0
  %400 = vmatprep.mubr.bf16.mxu0 0
  %401 = vmatmul.mubr.bf16.gmra.mrb[0].mxu0 %v252
  %v402 = vpop.f32.mrb[0].mxu0
  %v403 = vadd.f32 0.0, %v402
  %v404 = vpop.f32.mrb[0].mxu0
  %v405 = vpop.f32.mrb[0].mxu0
  %v406 = vadd.f32 0.0, %v405
  %v407 = vpop.f32.mrb[0].mxu0
  %408 = vmatprep.mubr.bf16.mxu0 0
  %409 = vmatmul.mubr.bf16.gmra.mrb[0].mxu0 %v255
  %v410 = vpop.f32.mrb[0].mxu0
  %v411 = vadd.f32 0.0, %v410
  %v412 = vpop.f32.mrb[0].mxu0
  %v413 = vpop.f32.mrb[0].mxu0
  %v414 = vadd.f32 0.0, %v413
  %v415 = vpop.f32.mrb[0].mxu0
  %416 = vmatprep.mubr.bf16.mxu0 0
  %417 = vmatmul.mubr.bf16.gmra.mrb[0].mxu0 %v258
  %v418 = vpop.f32.mrb[0].mxu0
  %v419 = vadd.f32 0.0, %v418
  %v420 = vpop.f32.mrb[0].mxu0
  %v421 = vpop.f32.mrb[0].mxu0
  %v422 = vadd.f32 0.0, %v421
  %v423 = vpop.f32.mrb[0].mxu0
  %424 = vmatprep.mubr.bf16.mxu0 0
  %425 = vmatmul.mubr.bf16.gmra.mrb[0].mxu0 %v261
  %v426 = vpop.f32.mrb[0].mxu0
  %v427 = vadd.f32 0.0, %v426
  %v428 = vpop.f32.mrb[0].mxu0
  %v429 = vpop.f32.mrb[0].mxu0
  %v430 = vadd.f32 0.0, %v429
  %v431 = vpop.f32.mrb[0].mxu0
  %432 = vmatprep.mubr.bf16.mxu0 0
  %433 = vmatmul.mubr.bf16.gmra.mrb[0].mxu0 %v264
  %v434 = vpop.f32.mrb[0].mxu0
  %v435 = vadd.f32 0.0, %v434
  %v436 = vpop.f32.mrb[0].mxu0
  %v437 = vpop.f32.mrb[0].mxu0
  %v438 = vadd.f32 0.0, %v437
  %v439 = vpop.f32.mrb[0].mxu0
  %440 = vmatprep.mubr.bf16.mxu0 0
  %441 = vmatmul.mubr.bf16.gmra.mrb[0].mxu0 %v267
  %v442 = vpop.f32.mrb[0].mxu0
  %v443 = vadd.f32 0.0, %v442
  %v444 = vpop.f32.mrb[0].mxu0
  %v445 = vpop.f32.mrb[0].mxu0
  %v446 = vadd.f32 0.0, %v445
  %v447 = vpop.f32.mrb[0].mxu0
  %448 = vmatprep.mubr.bf16.mxu0 0
  %449 = vmatmul.mubr.bf16.gmra.mrb[0].mxu0 %v270
  %v450 = vpop.f32.mrb[0].mxu0
  %v451 = vadd.f32 0.0, %v450
  %v452 = vpop.f32.mrb[0].mxu0
  %v453 = vpop.f32.mrb[0].mxu0
  %v454 = vadd.f32 0.0, %v453
  %v455 = vpop.f32.mrb[0].mxu0
  %456 = vmatprep.mubr.bf16.mxu0 0
  %457 = vmatmul.mubr.bf16.gmra.mrb[0].mxu0 %v273
  %v458 = vpop.f32.mrb[0].mxu0
  %v459 = vadd.f32 0.0, %v458
  %v460 = vpop.f32.mrb[0].mxu0
  %v461 = vpop.f32.mrb[0].mxu0
  %v462 = vadd.f32 0.0, %v461
  %v463 = vpop.f32.mrb[0].mxu0
  %464 = vmatprep.mubr.bf16.mxu0 0
  %465 = vmatmul.mubr.bf16.gmra.mrb[0].mxu0 %v276
  %v466 = vpop.f32.mrb[0].mxu0
  %v467 = vadd.f32 0.0, %v466
  %v468 = vpop.f32.mrb[0].mxu0
  %v469 = vpop.f32.mrb[0].mxu0
  %v470 = vadd.f32 0.0, %v469
  %v471 = vpop.f32.mrb[0].mxu0
  %472 = vmatprep.mubr.bf16.mxu0 0
  %473 = vmatmul.mubr.bf16.gmra.mrb[0].mxu0 %v279
  %v474 = vpop.f32.mrb[0].mxu0
  %v475 = vadd.f32 0.0, %v474
  %v476 = vpop.f32.mrb[0].mxu0
  %v477 = vpop.f32.mrb[0].mxu0
  %v478 = vadd.f32 0.0, %v477
  %v479 = vpop.f32.mrb[0].mxu0
  %480 = vmatprep.mubr.bf16.mxu0 0
  %481 = vmatmul.mubr.bf16.gmra.mrb[0].mxu0 %v282
  %v482 = vpop.f32.mrb[0].mxu0
  %v483 = vadd.f32 0.0, %v482
  %v484 = vpop.f32.mrb[0].mxu0
  %v485 = vpop.f32.mrb[0].mxu0
  %v486 = vadd.f32 0.0, %v485
  %v487 = vpop.f32.mrb[0].mxu0
  %488 = vmatprep.mubr.bf16.mxu0 0
  %489 = vmatmul.mubr.bf16.gmra.mrb[0].mxu0 %v285
  %v490 = vpop.f32.mrb[0].mxu0
  %v491 = vadd.f32 0.0, %v490
  %v492 = vpop.f32.mrb[0].mxu0
  %v493 = vpop.f32.mrb[0].mxu0
  %v494 = vadd.f32 0.0, %v493
  %v495 = vpop.f32.mrb[0].mxu0
  %496 = vmatprep.mubr.bf16.mxu0 0
  %497 = vmatmul.mubr.bf16.gmra.mrb[0].mxu0 %v288
  %v498 = vpop.f32.mrb[0].mxu0
  %v499 = vadd.f32 0.0, %v498
  %v500 = vpop.f32.mrb[0].mxu0
  %v501 = vpop.f32.mrb[0].mxu0
  %v502 = vadd.f32 0.0, %v501
  %v503 = vpop.f32.mrb[0].mxu0
  %504 = vmatprep.mubr.bf16.mxu0 0
  %505 = vmatmul.mubr.bf16.gmra.mrb[0].mxu0 %v291
  %v506 = vpop.f32.mrb[0].mxu0
  %v507 = vadd.f32 0.0, %v506
  %v508 = vpop.f32.mrb[0].mxu0
  %v509 = vpop.f32.mrb[0].mxu0
  %v510 = vadd.f32 0.0, %v509
  %v511 = vpop.f32.mrb[0].mxu0
  %512 = vmatprep.mubr.bf16.mxu0 0
  %513 = vmatmul.mubr.bf16.gmra.mrb[0].mxu0 %v294
  %v514 = vpop.f32.mrb[0].mxu0
  %v515 = vadd.f32 0.0, %v514
  %v516 = vpop.f32.mrb[0].mxu0
  %v517 = vpop.f32.mrb[0].mxu0
  %v518 = vadd.f32 0.0, %v517
  %v519 = vpop.f32.mrb[0].mxu0
  %520 = vmatprep.mubr.bf16.mxu0 0
  %521 = vmatmul.mubr.bf16.gmra.mrb[0].mxu0 %v297
  %v522 = vpop.f32.mrb[0].mxu0
  %v523 = vadd.f32 0.0, %v522
  %v524 = vpop.f32.mrb[0].mxu0
  %v525 = vpop.f32.mrb[0].mxu0
  %v526 = vadd.f32 0.0, %v525
  %v527 = vpop.f32.mrb[0].mxu0
  %528 = vmatprep.mubr.bf16.mxu0 0
  %529 = vmatmul.mubr.bf16.gmra.mrb[0].mxu0 %v300
  %v530 = vpop.f32.mrb[0].mxu0
  %v531 = vadd.f32 0.0, %v530
  %v532 = vpop.f32.mrb[0].mxu0
  %v533 = vpop.f32.mrb[0].mxu0
  %v534 = vadd.f32 0.0, %v533
  %v535 = vpop.f32.mrb[0].mxu0
  %536 = vmatprep.mubr.bf16.mxu0 0
  %537 = vmatmul.mubr.bf16.gmra.mrb[0].mxu0 %v303
  %v538 = vpop.f32.mrb[0].mxu0
  %v539 = vadd.f32 0.0, %v538
  %v540 = vpop.f32.mrb[0].mxu0
  %v541 = vpop.f32.mrb[0].mxu0
  %v542 = vadd.f32 0.0, %v541
  %v543 = vpop.f32.mrb[0].mxu0
  %544 = vdwg.mxu0
  %s545 = scalar_lea.vmem %s0, 200
  %v546 = vld [vmem:[%s545] sm:$0xf]
  %v547 = vld [vmem:[%s545 + $0x4] sm:$0xf]
  %v548 = vld [vmem:[%s545 + $0x8] sm:$0xf]
  %v549 = vld [vmem:[%s545 + $0xc] sm:$0xf]
  %v550 = vld [vmem:[%s545 + $0x10] sm:$0xf]
  %v551 = vld [vmem:[%s545 + $0x14] sm:$0xf]
  %v552 = vld [vmem:[%s545 + $0x18] sm:$0xf]
  %v553 = vld [vmem:[%s545 + $0x1c] sm:$0xf]
  %v554 = vld [vmem:[%s545 + $0x20] sm:$0xf]
  %v555 = vld [vmem:[%s545 + $0x24] sm:$0xf]
  %v556 = vld [vmem:[%s545 + $0x28] sm:$0xf]
  %v557 = vld [vmem:[%s545 + $0x2c] sm:$0xf]
  %v558 = vld [vmem:[%s545 + $0x30] sm:$0xf]
  %v559 = vld [vmem:[%s545 + $0x34] sm:$0xf]
  %v560 = vld [vmem:[%s545 + $0x38] sm:$0xf]
  %v561 = vld [vmem:[%s545 + $0x3c] sm:$0xf]
  %v562 = vld [vmem:[%s545 + $0x40] sm:$0xf]
  %v563 = vld [vmem:[%s545 + $0x44] sm:$0xf]
  %v564 = vld [vmem:[%s545 + $0x48] sm:$0xf]
  %v565 = vld [vmem:[%s545 + $0x4c] sm:$0xf]
  %v566 = vld [vmem:[%s545 + $0x50] sm:$0xf]
  %v567 = vld [vmem:[%s545 + $0x54] sm:$0xf]
  %v568 = vld [vmem:[%s545 + $0x58] sm:$0xf]
  %v569 = vld [vmem:[%s545 + $0x5c] sm:$0xf]
  %v570 = vld [vmem:[%s545 + $0x60] sm:$0xf]
  %v571 = vld [vmem:[%s545 + $0x64] sm:$0xf]
  %v572 = vld [vmem:[%s545 + $0x68] sm:$0xf]
  %v573 = vld [vmem:[%s545 + $0x6c] sm:$0xf]
  %v574 = vld [vmem:[%s545 + $0x70] sm:$0xf]
  %v575 = vld [vmem:[%s545 + $0x74] sm:$0xf]
  %v576 = vld [vmem:[%s545 + $0x78] sm:$0xf]
  %v577 = vld [vmem:[%s545 + $0x7c] sm:$0xf]
  %v578 = vld [vmem:[%s545 + $0x80] sm:$0xf]
  %v579 = vld [vmem:[%s545 + $0x84] sm:$0xf]
  %v580 = vld [vmem:[%s545 + $0x88] sm:$0xf]
  %v581 = vld [vmem:[%s545 + $0x8c] sm:$0xf]
  %v582 = vld [vmem:[%s545 + $0x90] sm:$0xf]
  %v583 = vld [vmem:[%s545 + $0x94] sm:$0xf]
  %v584 = vld [vmem:[%s545 + $0x98] sm:$0xf]
  %v585 = vld [vmem:[%s545 + $0x9c] sm:$0xf]
  %v586 = vld [vmem:[%s545 + $0xa0] sm:$0xf]
  %v587 = vld [vmem:[%s545 + $0xa4] sm:$0xf]
  %v588 = vld [vmem:[%s545 + $0xa8] sm:$0xf]
  %v589 = vld [vmem:[%s545 + $0xac] sm:$0xf]
  %v590 = vld [vmem:[%s545 + $0xb0] sm:$0xf]
  %v591 = vld [vmem:[%s545 + $0xb4] sm:$0xf]
  %v592 = vld [vmem:[%s545 + $0xb8] sm:$0xf]
  %v593 = vld [vmem:[%s545 + $0xbc] sm:$0xf]
  %v594 = vld [vmem:[%s545 + $0xc0] sm:$0xf]
  %v595 = vld [vmem:[%s545 + $0xc4] sm:$0xf]
  %v646 = vunpack.c.l.b16 %v546
  %v647 = vunpack.c.l.b16 %v547
  %v648 = vunpack.c.l.b16 %v548
  %v649 = vunpack.c.l.b16 %v549
  %v650 = vunpack.c.l.b16 %v550
  %v651 = vunpack.c.l.b16 %v551
  %v652 = vunpack.c.l.b16 %v552
  %v653 = vunpack.c.l.b16 %v553
  %v654 = vunpack.c.l.b16 %v554
  %v655 = vunpack.c.l.b16 %v555
  %v656 = vunpack.c.l.b16 %v556
  %v657 = vunpack.c.l.b16 %v557
  %v658 = vunpack.c.l.b16 %v558
  %v659 = vunpack.c.l.b16 %v559
  %v660 = vunpack.c.l.b16 %v560
  %v661 = vunpack.c.l.b16 %v561
  %v662 = vunpack.c.l.b16 %v562
  %v663 = vunpack.c.l.b16 %v563
  %v664 = vunpack.c.l.b16 %v564
  %v665 = vunpack.c.l.b16 %v565
  %v666 = vunpack.c.l.b16 %v566
  %v667 = vunpack.c.l.b16 %v567
  %v668 = vunpack.c.l.b16 %v568
  %v669 = vunpack.c.l.b16 %v569
  %v670 = vunpack.c.l.b16 %v570
  %v671 = vunpack.c.l.b16 %v571
  %v672 = vunpack.c.l.b16 %v572
  %v673 = vunpack.c.l.b16 %v573
  %v674 = vunpack.c.l.b16 %v574
  %v675 = vunpack.c.l.b16 %v575
  %v676 = vunpack.c.l.b16 %v576
  %v677 = vunpack.c.l.b16 %v577
  %v678 = vunpack.c.l.b16 %v578
  %v679 = vunpack.c.l.b16 %v579
  %v680 = vunpack.c.l.b16 %v580
  %v681 = vunpack.c.l.b16 %v581
  %v682 = vunpack.c.l.b16 %v582
  %v683 = vunpack.c.l.b16 %v583
  %v684 = vunpack.c.l.b16 %v584
  %v685 = vunpack.c.l.b16 %v585
  %v686 = vunpack.c.l.b16 %v586
  %v687 = vunpack.c.l.b16 %v587
  %v688 = vunpack.c.l.b16 %v588
  %v689 = vunpack.c.l.b16 %v589
  %v690 = vunpack.c.l.b16 %v590
  %v691 = vunpack.c.l.b16 %v591
  %v692 = vunpack.c.l.b16 %v592
  %v693 = vunpack.c.l.b16 %v593
  %v694 = vunpack.c.l.b16 %v594
  %v695 = vunpack.c.l.b16 %v595
  %v696 = vpack.c.b16 %v647, %v646
  %v697 = vpack.c.b16 %v649, %v648
  %v698 = vpack.c.b16 %v651, %v650
  %v699 = vpack.c.b16 %v653, %v652
  %v700 = vpack.c.b16 %v655, %v654
  %v701 = vpack.c.b16 %v657, %v656
  %v702 = vpack.c.b16 %v659, %v658
  %v703 = vpack.c.b16 %v661, %v660
  %v704 = vpack.c.b16 %v663, %v662
  %v705 = vpack.c.b16 %v665, %v664
  %v706 = vpack.c.b16 %v667, %v666
  %v707 = vpack.c.b16 %v669, %v668
  %v708 = vpack.c.b16 %v671, %v670
  %v709 = vpack.c.b16 %v673, %v672
  %v710 = vpack.c.b16 %v675, %v674
  %v711 = vpack.c.b16 %v677, %v676
  %v712 = vpack.c.b16 %v679, %v678
  %v713 = vpack.c.b16 %v681, %v680
  %v714 = vpack.c.b16 %v683, %v682
  %v715 = vpack.c.b16 %v685, %v684
  %v716 = vpack.c.b16 %v687, %v686
  %v717 = vpack.c.b16 %v689, %v688
  %v718 = vpack.c.b16 %v691, %v690
  %v719 = vpack.c.b16 %v693, %v692
  %v720 = vpack.c.b16 %v695, %v694
  %v722 = vsel %vm229, %v696, 0
  %v725 = vsel %vm229, %v697, 0
  %v728 = vsel %vm229, %v698, 0
  %v731 = vsel %vm229, %v699, 0
  %v734 = vsel %vm229, %v700, 0
  %v737 = vsel %vm229, %v701, 0
  %v740 = vsel %vm229, %v702, 0
  %v743 = vsel %vm229, %v703, 0
  %v746 = vsel %vm229, %v704, 0
  %v749 = vsel %vm229, %v705, 0
  %v752 = vsel %vm229, %v706, 0
  %v755 = vsel %vm229, %v707, 0
  %v758 = vsel %vm229, %v708, 0
  %v761 = vsel %vm229, %v709, 0
  %v764 = vsel %vm229, %v710, 0
  %v767 = vsel %vm229, %v711, 0
  %v770 = vsel %vm229, %v712, 0
  %v773 = vsel %vm229, %v713, 0
  %v776 = vsel %vm229, %v714, 0
  %v779 = vsel %vm229, %v715, 0
  %v782 = vsel %vm229, %v716, 0
  %v785 = vsel %vm229, %v717, 0
  %v788 = vsel %vm229, %v718, 0
  %v791 = vsel %vm229, %v719, 0
  %v794 = vsel %vm229, %v720, 0
  %796 = vmatprep.subr.bf16.mxu0 0
  %797 = vmatpush1.bf16.msra.mxu0 %v220
  %798 = vmatprep.subr.bf16.mxu0 0
  %799 = vmatpush1.bf16.msra.mxu0 %v221
  %800 = vmatprep.subr.bf16.mxu0 0
  %801 = vmatpush1.bf16.msra.mxu0 %v222
  %802 = vmatprep.subr.bf16.mxu0 0
  %803 = vmatpush1.bf16.msra.mxu0 %v223
  %804 = vmatprep.subr.bf16.mxu0 0
  %805 = vmatpush1.bf16.msra.mxu0 %v310
  %806 = vmatprep.subr.bf16.mxu0 0
  %807 = vmatpush1.bf16.msra.mxu0 0
  %808 = vmatprep.subr.bf16.mxu0 0
  %809 = vmatpush1.bf16.msra.mxu0 0
  %810 = vmatprep.subr.bf16.mxu0 0
  %811 = vmatpush1.bf16.msra.mxu0 0
  %812 = vmatprep.subr.bf16.mxu0 0
  %813 = vmatpush1.bf16.msra.mxu0 0
  %814 = vmatprep.subr.bf16.mxu0 0
  %815 = vmatpush1.bf16.msra.mxu0 0
  %816 = vmatprep.subr.bf16.mxu0 0
  %817 = vmatpush1.bf16.msra.mxu0 0
  %818 = vmatprep.subr.bf16.mxu0 0
  %819 = vmatpush1.bf16.msra.mxu0 0
  %820 = vmatprep.subr.bf16.mxu0 0
  %821 = vmatpush1.bf16.msra.mxu0 0
  %822 = vmatprep.subr.bf16.mxu0 0
  %823 = vmatpush1.bf16.msra.mxu0 0
  %824 = vmatprep.subr.bf16.mxu0 0
  %825 = vmatpush1.bf16.msra.mxu0 0
  %826 = vmatprep.subr.bf16.mxu0 0
  %827 = vmatpush1.bf16.msra.mxu0 0
  %828 = vmatprep.mubr.bf16.mxu0 0
  %829 = vmatmul.mubr.bf16.gmra.mrb[0].mxu0 %v722
  %v830 = vpop.f32.mrb[0].mxu0
  %v831 = vadd.f32 0.0, %v830
  %v832 = vpop.f32.mrb[0].mxu0
  %v833 = vpop.f32.mrb[0].mxu0
  %v834 = vadd.f32 0.0, %v833
  %v835 = vpop.f32.mrb[0].mxu0
  %836 = vmatprep.mubr.bf16.mxu0 0
  %837 = vmatmul.mubr.bf16.gmra.mrb[0].mxu0 %v725
  %v838 = vpop.f32.mrb[0].mxu0
  %v839 = vadd.f32 0.0, %v838
  %v840 = vpop.f32.mrb[0].mxu0
  %v841 = vpop.f32.mrb[0].mxu0
  %v842 = vadd.f32 0.0, %v841
  %v843 = vpop.f32.mrb[0].mxu0
  %844 = vmatprep.mubr.bf16.mxu0 0
  %845 = vmatmul.mubr.bf16.gmra.mrb[0].mxu0 %v728
  %v846 = vpop.f32.mrb[0].mxu0
  %v847 = vadd.f32 0.0, %v846
  %v848 = vpop.f32.mrb[0].mxu0
  %v849 = vpop.f32.mrb[0].mxu0
  %v850 = vadd.f32 0.0, %v849
  %v851 = vpop.f32.mrb[0].mxu0
  %852 = vmatprep.mubr.bf16.mxu0 0
  %853 = vmatmul.mubr.bf16.gmra.mrb[0].mxu0 %v731
  %v854 = vpop.f32.mrb[0].mxu0
  %v855 = vadd.f32 0.0, %v854
  %v856 = vpop.f32.mrb[0].mxu0
  %v857 = vpop.f32.mrb[0].mxu0
  %v858 = vadd.f32 0.0, %v857
  %v859 = vpop.f32.mrb[0].mxu0
  %860 = vmatprep.mubr.bf16.mxu0 0
  %861 = vmatmul.mubr.bf16.gmra.mrb[0].mxu0 %v734
  %v862 = vpop.f32.mrb[0].mxu0
  %v863 = vadd.f32 0.0, %v862
  %v864 = vpop.f32.mrb[0].mxu0
  %v865 = vpop.f32.mrb[0].mxu0
  %v866 = vadd.f32 0.0, %v865
  %v867 = vpop.f32.mrb[0].mxu0
  %868 = vmatprep.mubr.bf16.mxu0 0
  %869 = vmatmul.mubr.bf16.gmra.mrb[0].mxu0 %v737
  %v870 = vpop.f32.mrb[0].mxu0
  %v871 = vadd.f32 0.0, %v870
  %v872 = vpop.f32.mrb[0].mxu0
  %v873 = vpop.f32.mrb[0].mxu0
  %v874 = vadd.f32 0.0, %v873
  %v875 = vpop.f32.mrb[0].mxu0
  %876 = vmatprep.mubr.bf16.mxu0 0
  %877 = vmatmul.mubr.bf16.gmra.mrb[0].mxu0 %v740
  %v878 = vpop.f32.mrb[0].mxu0
  %v879 = vadd.f32 0.0, %v878
  %v880 = vpop.f32.mrb[0].mxu0
  %v881 = vpop.f32.mrb[0].mxu0
  %v882 = vadd.f32 0.0, %v881
  %v883 = vpop.f32.mrb[0].mxu0
  %884 = vmatprep.mubr.bf16.mxu0 0
  %885 = vmatmul.mubr.bf16.gmra.mrb[0].mxu0 %v743
  %v886 = vpop.f32.mrb[0].mxu0
  %v887 = vadd.f32 0.0, %v886
  %v888 = vpop.f32.mrb[0].mxu0
  %v889 = vpop.f32.mrb[0].mxu0
  %v890 = vadd.f32 0.0, %v889
  %v891 = vpop.f32.mrb[0].mxu0
  %892 = vmatprep.mubr.bf16.mxu0 0
  %893 = vmatmul.mubr.bf16.gmra.mrb[0].mxu0 %v746
  %v894 = vpop.f32.mrb[0].mxu0
  %v895 = vadd.f32 0.0, %v894
  %v896 = vpop.f32.mrb[0].mxu0
  %v897 = vpop.f32.mrb[0].mxu0
  %v898 = vadd.f32 0.0, %v897
  %v899 = vpop.f32.mrb[0].mxu0
  %900 = vmatprep.mubr.bf16.mxu0 0
  %901 = vmatmul.mubr.bf16.gmra.mrb[0].mxu0 %v749
  %v902 = vpop.f32.mrb[0].mxu0
  %v903 = vadd.f32 0.0, %v902
  %v904 = vpop.f32.mrb[0].mxu0
  %v905 = vpop.f32.mrb[0].mxu0
  %v906 = vadd.f32 0.0, %v905
  %v907 = vpop.f32.mrb[0].mxu0
  %908 = vmatprep.mubr.bf16.mxu0 0
  %909 = vmatmul.mubr.bf16.gmra.mrb[0].mxu0 %v752
  %v910 = vpop.f32.mrb[0].mxu0
  %v911 = vadd.f32 0.0, %v910
  %v912 = vpop.f32.mrb[0].mxu0
  %v913 = vpop.f32.mrb[0].mxu0
  %v914 = vadd.f32 0.0, %v913
  %v915 = vpop.f32.mrb[0].mxu0
  %916 = vmatprep.mubr.bf16.mxu0 0
  %917 = vmatmul.mubr.bf16.gmra.mrb[0].mxu0 %v755
  %v918 = vpop.f32.mrb[0].mxu0
  %v919 = vadd.f32 0.0, %v918
  %v920 = vpop.f32.mrb[0].mxu0
  %v921 = vpop.f32.mrb[0].mxu0
  %v922 = vadd.f32 0.0, %v921
  %v923 = vpop.f32.mrb[0].mxu0
  %924 = vmatprep.mubr.bf16.mxu0 0
  %925 = vmatmul.mubr.bf16.gmra.mrb[0].mxu0 %v758
  %v926 = vpop.f32.mrb[0].mxu0
  %v927 = vadd.f32 0.0, %v926
  %v928 = vpop.f32.mrb[0].mxu0
  %v929 = vpop.f32.mrb[0].mxu0
  %v930 = vadd.f32 0.0, %v929
  %v931 = vpop.f32.mrb[0].mxu0
  %932 = vmatprep.mubr.bf16.mxu0 0
  %933 = vmatmul.mubr.bf16.gmra.mrb[0].mxu0 %v761
  %v934 = vpop.f32.mrb[0].mxu0
  %v935 = vadd.f32 0.0, %v934
  %v936 = vpop.f32.mrb[0].mxu0
  %v937 = vpop.f32.mrb[0].mxu0
  %v938 = vadd.f32 0.0, %v937
  %v939 = vpop.f32.mrb[0].mxu0
  %940 = vmatprep.mubr.bf16.mxu0 0
  %941 = vmatmul.mubr.bf16.gmra.mrb[0].mxu0 %v764
  %v942 = vpop.f32.mrb[0].mxu0
  %v943 = vadd.f32 0.0, %v942
  %v944 = vpop.f32.mrb[0].mxu0
  %v945 = vpop.f32.mrb[0].mxu0
  %v946 = vadd.f32 0.0, %v945
  %v947 = vpop.f32.mrb[0].mxu0
  %948 = vmatprep.mubr.bf16.mxu0 0
  %949 = vmatmul.mubr.bf16.gmra.mrb[0].mxu0 %v767
  %v950 = vpop.f32.mrb[0].mxu0
  %v951 = vadd.f32 0.0, %v950
  %v952 = vpop.f32.mrb[0].mxu0
  %v953 = vpop.f32.mrb[0].mxu0
  %v954 = vadd.f32 0.0, %v953
  %v955 = vpop.f32.mrb[0].mxu0
  %956 = vmatprep.mubr.bf16.mxu0 0
  %957 = vmatmul.mubr.bf16.gmra.mrb[0].mxu0 %v770
  %v958 = vpop.f32.mrb[0].mxu0
  %v959 = vadd.f32 0.0, %v958
  %v960 = vpop.f32.mrb[0].mxu0
  %v961 = vpop.f32.mrb[0].mxu0
  %v962 = vadd.f32 0.0, %v961
  %v963 = vpop.f32.mrb[0].mxu0
  %964 = vmatprep.mubr.bf16.mxu0 0
  %965 = vmatmul.mubr.bf16.gmra.mrb[0].mxu0 %v773
  %v966 = vpop.f32.mrb[0].mxu0
  %v967 = vadd.f32 0.0, %v966
  %v968 = vpop.f32.mrb[0].mxu0
  %v969 = vpop.f32.mrb[0].mxu0
  %v970 = vadd.f32 0.0, %v969
  %v971 = vpop.f32.mrb[0].mxu0
  %972 = vmatprep.mubr.bf16.mxu0 0
  %973 = vmatmul.mubr.bf16.gmra.mrb[0].mxu0 %v776
  %v974 = vpop.f32.mrb[0].mxu0
  %v975 = vadd.f32 0.0, %v974
  %v976 = vpop.f32.mrb[0].mxu0
  %v977 = vpop.f32.mrb[0].mxu0
  %v978 = vadd.f32 0.0, %v977
  %v979 = vpop.f32.mrb[0].mxu0
  %980 = vmatprep.mubr.bf16.mxu0 0
  %981 = vmatmul.mubr.bf16.gmra.mrb[0].mxu0 %v779
  %v982 = vpop.f32.mrb[0].mxu0
  %v983 = vadd.f32 0.0, %v982
  %v984 = vpop.f32.mrb[0].mxu0
  %v985 = vpop.f32.mrb[0].mxu0
  %v986 = vadd.f32 0.0, %v985
  %v987 = vpop.f32.mrb[0].mxu0
  %988 = vmatprep.mubr.bf16.mxu0 0
  %989 = vmatmul.mubr.bf16.gmra.mrb[0].mxu0 %v782
  %v990 = vpop.f32.mrb[0].mxu0
  %v991 = vadd.f32 0.0, %v990
  %v992 = vpop.f32.mrb[0].mxu0
  %v993 = vpop.f32.mrb[0].mxu0
  %v994 = vadd.f32 0.0, %v993
  %v995 = vpop.f32.mrb[0].mxu0
  %996 = vmatprep.mubr.bf16.mxu0 0
  %997 = vmatmul.mubr.bf16.gmra.mrb[0].mxu0 %v785
  %v998 = vpop.f32.mrb[0].mxu0
  %v999 = vadd.f32 0.0, %v998
  %v1000 = vpop.f32.mrb[0].mxu0
  %v1001 = vpop.f32.mrb[0].mxu0
  %v1002 = vadd.f32 0.0, %v1001
  %v1003 = vpop.f32.mrb[0].mxu0
  %1004 = vmatprep.mubr.bf16.mxu0 0
  %1005 = vmatmul.mubr.bf16.gmra.mrb[0].mxu0 %v788
  %v1006 = vpop.f32.mrb[0].mxu0
  %v1007 = vadd.f32 0.0, %v1006
  %v1008 = vpop.f32.mrb[0].mxu0
  %v1009 = vpop.f32.mrb[0].mxu0
  %v1010 = vadd.f32 0.0, %v1009
  %v1011 = vpop.f32.mrb[0].mxu0
  %1012 = vmatprep.mubr.bf16.mxu0 0
  %1013 = vmatmul.mubr.bf16.gmra.mrb[0].mxu0 %v791
  %v1014 = vpop.f32.mrb[0].mxu0
  %v1015 = vadd.f32 0.0, %v1014
  %v1016 = vpop.f32.mrb[0].mxu0
  %v1017 = vpop.f32.mrb[0].mxu0
  %v1018 = vadd.f32 0.0, %v1017
  %v1019 = vpop.f32.mrb[0].mxu0
  %1020 = vmatprep.mubr.bf16.mxu0 0
  %1021 = vmatmul.mubr.bf16.gmra.mrb[0].mxu0 %v794
  %v1022 = vpop.f32.mrb[0].mxu0
  %v1023 = vadd.f32 0.0, %v1022
  %v1024 = vpop.f32.mrb[0].mxu0
  %v1025 = vpop.f32.mrb[0].mxu0
  %v1026 = vadd.f32 0.0, %v1025
  %v1027 = vpop.f32.mrb[0].mxu0
  %1028 = vdwg.mxu0
  %v1029 = vmax.f32 %v347, %v831
  %v1030 = vmax.f32 %v350, %v834
  %v1031 = vmax.f32 %v355, %v839
  %v1032 = vmax.f32 %v358, %v842
  %v1033 = vmax.f32 %v363, %v847
  %v1034 = vmax.f32 %v366, %v850
  %v1035 = vmax.f32 %v371, %v855
  %v1036 = vmax.f32 %v374, %v858
  %v1037 = vmax.f32 %v379, %v863
  %v1038 = vmax.f32 %v382, %v866
  %v1039 = vmax.f32 %v387, %v871
  %v1040 = vmax.f32 %v390, %v874
  %v1041 = vmax.f32 %v395, %v879
  %v1042 = vmax.f32 %v398, %v882
  %v1043 = vmax.f32 %v403, %v887
  %v1044 = vmax.f32 %v406, %v890
  %v1045 = vmax.f32 %v411, %v895
  %v1046 = vmax.f32 %v414, %v898
  %v1047 = vmax.f32 %v419, %v903
  %v1048 = vmax.f32 %v422, %v906
  %v1049 = vmax.f32 %v427, %v911
  %v1050 = vmax.f32 %v430, %v914
  %v1051 = vmax.f32 %v435, %v919
  %v1052 = vmax.f32 %v438, %v922
  %v1053 = vmax.f32 %v443, %v927
  %v1054 = vmax.f32 %v446, %v930
  %v1055 = vmax.f32 %v451, %v935
  %v1056 = vmax.f32 %v454, %v938
  %v1057 = vmax.f32 %v459, %v943
  %v1058 = vmax.f32 %v462, %v946
  %v1059 = vmax.f32 %v467, %v951
  %v1060 = vmax.f32 %v470, %v954
  %v1061 = vmax.f32 %v475, %v959
  %v1062 = vmax.f32 %v478, %v962
  %v1063 = vmax.f32 %v483, %v967
  %v1064 = vmax.f32 %v486, %v970
  %v1065 = vmax.f32 %v491, %v975
  %v1066 = vmax.f32 %v494, %v978
  %v1067 = vmax.f32 %v499, %v983
  %v1068 = vmax.f32 %v502, %v986
  %v1069 = vmax.f32 %v507, %v991
  %v1070 = vmax.f32 %v510, %v994
  %v1071 = vmax.f32 %v515, %v999
  %v1072 = vmax.f32 %v518, %v1002
  %v1073 = vmax.f32 %v523, %v1007
  %v1074 = vmax.f32 %v526, %v1010
  %v1075 = vmax.f32 %v531, %v1015
  %v1076 = vmax.f32 %v534, %v1018
  %v1077 = vmax.f32 %v539, %v1023
  %v1078 = vmax.f32 %v542, %v1026
  %s1079 = scalar_lea.vmem %s0, 400
  %v1080 = vld [vmem:[%s1079] sm:$0xf]
  %v1081 = vld [vmem:[%s1079 + $0x4] sm:$0xf]
  %v1082 = vld [vmem:[%s1079 + $0x8] sm:$0xf]
  %v1083 = vld [vmem:[%s1079 + $0xc] sm:$0xf]
  %v1084 = vld [vmem:[%s1079 + $0x10] sm:$0xf]
  %v1085 = vld [vmem:[%s1079 + $0x14] sm:$0xf]
  %v1086 = vld [vmem:[%s1079 + $0x18] sm:$0xf]
  %v1087 = vld [vmem:[%s1079 + $0x1c] sm:$0xf]
  %v1088 = vld [vmem:[%s1079 + $0x20] sm:$0xf]
  %v1089 = vld [vmem:[%s1079 + $0x24] sm:$0xf]
  %v1090 = vld [vmem:[%s1079 + $0x28] sm:$0xf]
  %v1091 = vld [vmem:[%s1079 + $0x2c] sm:$0xf]
  %v1092 = vld [vmem:[%s1079 + $0x30] sm:$0xf]
  %v1093 = vld [vmem:[%s1079 + $0x34] sm:$0xf]
  %v1094 = vld [vmem:[%s1079 + $0x38] sm:$0xf]
  %v1095 = vld [vmem:[%s1079 + $0x3c] sm:$0xf]
  %v1096 = vld [vmem:[%s1079 + $0x40] sm:$0xf]
  %v1097 = vld [vmem:[%s1079 + $0x44] sm:$0xf]
  %v1098 = vld [vmem:[%s1079 + $0x48] sm:$0xf]
  %v1099 = vld [vmem:[%s1079 + $0x4c] sm:$0xf]
  %v1100 = vld [vmem:[%s1079 + $0x50] sm:$0xf]
  %v1101 = vld [vmem:[%s1079 + $0x54] sm:$0xf]
  %v1102 = vld [vmem:[%s1079 + $0x58] sm:$0xf]
  %v1103 = vld [vmem:[%s1079 + $0x5c] sm:$0xf]
  %v1104 = vld [vmem:[%s1079 + $0x60] sm:$0xf]
  %v1105 = vld [vmem:[%s1079 + $0x64] sm:$0xf]
  %v1106 = vld [vmem:[%s1079 + $0x68] sm:$0xf]
  %v1107 = vld [vmem:[%s1079 + $0x6c] sm:$0xf]
  %v1108 = vld [vmem:[%s1079 + $0x70] sm:$0xf]
  %v1109 = vld [vmem:[%s1079 + $0x74] sm:$0xf]
  %v1110 = vld [vmem:[%s1079 + $0x78] sm:$0xf]
  %v1111 = vld [vmem:[%s1079 + $0x7c] sm:$0xf]
  %v1112 = vld [vmem:[%s1079 + $0x80] sm:$0xf]
  %v1113 = vld [vmem:[%s1079 + $0x84] sm:$0xf]
  %v1114 = vld [vmem:[%s1079 + $0x88] sm:$0xf]
  %v1115 = vld [vmem:[%s1079 + $0x8c] sm:$0xf]
  %v1116 = vld [vmem:[%s1079 + $0x90] sm:$0xf]
  %v1117 = vld [vmem:[%s1079 + $0x94] sm:$0xf]
  %v1118 = vld [vmem:[%s1079 + $0x98] sm:$0xf]
  %v1119 = vld [vmem:[%s1079 + $0x9c] sm:$0xf]
  %v1120 = vld [vmem:[%s1079 + $0xa0] sm:$0xf]
  %v1121 = vld [vmem:[%s1079 + $0xa4] sm:$0xf]
  %v1122 = vld [vmem:[%s1079 + $0xa8] sm:$0xf]
  %v1123 = vld [vmem:[%s1079 + $0xac] sm:$0xf]
  %v1124 = vld [vmem:[%s1079 + $0xb0] sm:$0xf]
  %v1125 = vld [vmem:[%s1079 + $0xb4] sm:$0xf]
  %v1126 = vld [vmem:[%s1079 + $0xb8] sm:$0xf]
  %v1127 = vld [vmem:[%s1079 + $0xbc] sm:$0xf]
  %v1128 = vld [vmem:[%s1079 + $0xc0] sm:$0xf]
  %v1129 = vld [vmem:[%s1079 + $0xc4] sm:$0xf]
  %v1180 = vunpack.c.l.b16 %v1080
  %v1181 = vunpack.c.l.b16 %v1081
  %v1182 = vunpack.c.l.b16 %v1082
  %v1183 = vunpack.c.l.b16 %v1083
  %v1184 = vunpack.c.l.b16 %v1084
  %v1185 = vunpack.c.l.b16 %v1085
  %v1186 = vunpack.c.l.b16 %v1086
  %v1187 = vunpack.c.l.b16 %v1087
  %v1188 = vunpack.c.l.b16 %v1088
  %v1189 = vunpack.c.l.b16 %v1089
  %v1190 = vunpack.c.l.b16 %v1090
  %v1191 = vunpack.c.l.b16 %v1091
  %v1192 = vunpack.c.l.b16 %v1092
  %v1193 = vunpack.c.l.b16 %v1093
  %v1194 = vunpack.c.l.b16 %v1094
  %v1195 = vunpack.c.l.b16 %v1095
  %v1196 = vunpack.c.l.b16 %v1096
  %v1197 = vunpack.c.l.b16 %v1097
  %v1198 = vunpack.c.l.b16 %v1098
  %v1199 = vunpack.c.l.b16 %v1099
  %v1200 = vunpack.c.l.b16 %v1100
  %v1201 = vunpack.c.l.b16 %v1101
  %v1202 = vunpack.c.l.b16 %v1102
  %v1203 = vunpack.c.l.b16 %v1103
  %v1204 = vunpack.c.l.b16 %v1104
  %v1205 = vunpack.c.l.b16 %v1105
  %v1206 = vunpack.c.l.b16 %v1106
  %v1207 = vunpack.c.l.b16 %v1107
  %v1208 = vunpack.c.l.b16 %v1108
  %v1209 = vunpack.c.l.b16 %v1109
  %v1210 = vunpack.c.l.b16 %v1110
  %v1211 = vunpack.c.l.b16 %v1111
  %v1212 = vunpack.c.l.b16 %v1112
  %v1213 = vunpack.c.l.b16 %v1113
  %v1214 = vunpack.c.l.b16 %v1114
  %v1215 = vunpack.c.l.b16 %v1115
  %v1216 = vunpack.c.l.b16 %v1116
  %v1217 = vunpack.c.l.b16 %v1117
  %v1218 = vunpack.c.l.b16 %v1118
  %v1219 = vunpack.c.l.b16 %v1119
  %v1220 = vunpack.c.l.b16 %v1120
  %v1221 = vunpack.c.l.b16 %v1121
  %v1222 = vunpack.c.l.b16 %v1122
  %v1223 = vunpack.c.l.b16 %v1123
  %v1224 = vunpack.c.l.b16 %v1124
  %v1225 = vunpack.c.l.b16 %v1125
  %v1226 = vunpack.c.l.b16 %v1126
  %v1227 = vunpack.c.l.b16 %v1127
  %v1228 = vunpack.c.l.b16 %v1128
  %v1229 = vunpack.c.l.b16 %v1129
  %v1230 = vpack.c.b16 %v1181, %v1180
  %v1231 = vpack.c.b16 %v1183, %v1182
  %v1232 = vpack.c.b16 %v1185, %v1184
  %v1233 = vpack.c.b16 %v1187, %v1186
  %v1234 = vpack.c.b16 %v1189, %v1188
  %v1235 = vpack.c.b16 %v1191, %v1190
  %v1236 = vpack.c.b16 %v1193, %v1192
  %v1237 = vpack.c.b16 %v1195, %v1194
  %v1238 = vpack.c.b16 %v1197, %v1196
  %v1239 = vpack.c.b16 %v1199, %v1198
  %v1240 = vpack.c.b16 %v1201, %v1200
  %v1241 = vpack.c.b16 %v1203, %v1202
  %v1242 = vpack.c.b16 %v1205, %v1204
  %v1243 = vpack.c.b16 %v1207, %v1206
  %v1244 = vpack.c.b16 %v1209, %v1208
  %v1245 = vpack.c.b16 %v1211, %v1210
  %v1246 = vpack.c.b16 %v1213, %v1212
  %v1247 = vpack.c.b16 %v1215, %v1214
  %v1248 = vpack.c.b16 %v1217, %v1216
  %v1249 = vpack.c.b16 %v1219, %v1218
  %v1250 = vpack.c.b16 %v1221, %v1220
  %v1251 = vpack.c.b16 %v1223, %v1222
  %v1252 = vpack.c.b16 %v1225, %v1224
  %v1253 = vpack.c.b16 %v1227, %v1226
  %v1254 = vpack.c.b16 %v1229, %v1228
  %v1256 = vsel %vm229, %v1230, 0
  %v1259 = vsel %vm229, %v1231, 0
  %v1262 = vsel %vm229, %v1232, 0
  %v1265 = vsel %vm229, %v1233, 0
  %v1268 = vsel %vm229, %v1234, 0
  %v1271 = vsel %vm229, %v1235, 0
  %v1274 = vsel %vm229, %v1236, 0
  %v1277 = vsel %vm229, %v1237, 0
  %v1280 = vsel %vm229, %v1238, 0
  %v1283 = vsel %vm229, %v1239, 0
  %v1286 = vsel %vm229, %v1240, 0
  %v1289 = vsel %vm229, %v1241, 0
  %v1292 = vsel %vm229, %v1242, 0
  %v1295 = vsel %vm229, %v1243, 0
  %v1298 = vsel %vm229, %v1244, 0
  %v1301 = vsel %vm229, %v1245, 0
  %v1304 = vsel %vm229, %v1246, 0
  %v1307 = vsel %vm229, %v1247, 0
  %v1310 = vsel %vm229, %v1248, 0
  %v1313 = vsel %vm229, %v1249, 0
  %v1316 = vsel %vm229, %v1250, 0
  %v1319 = vsel %vm229, %v1251, 0
  %v1322 = vsel %vm229, %v1252, 0
  %v1325 = vsel %vm229, %v1253, 0
  %v1328 = vsel %vm229, %v1254, 0
  %1330 = vmatprep.subr.bf16.mxu0 0
  %1331 = vmatpush1.bf16.msra.mxu0 %v220
  %1332 = vmatprep.subr.bf16.mxu0 0
  %1333 = vmatpush1.bf16.msra.mxu0 %v221
  %1334 = vmatprep.subr.bf16.mxu0 0
  %1335 = vmatpush1.bf16.msra.mxu0 %v222
  %1336 = vmatprep.subr.bf16.mxu0 0
  %1337 = vmatpush1.bf16.msra.mxu0 %v223
  %1338 = vmatprep.subr.bf16.mxu0 0
  %1339 = vmatpush1.bf16.msra.mxu0 %v310
  %1340 = vmatprep.subr.bf16.mxu0 0
  %1341 = vmatpush1.bf16.msra.mxu0 0
  %1342 = vmatprep.subr.bf16.mxu0 0
  %1343 = vmatpush1.bf16.msra.mxu0 0
  %1344 = vmatprep.subr.bf16.mxu0 0
  %1345 = vmatpush1.bf16.msra.mxu0 0
  %1346 = vmatprep.subr.bf16.mxu0 0
  %1347 = vmatpush1.bf16.msra.mxu0 0
  %1348 = vmatprep.subr.bf16.mxu0 0
  %1349 = vmatpush1.bf16.msra.mxu0 0
  %1350 = vmatprep.subr.bf16.mxu0 0
  %1351 = vmatpush1.bf16.msra.mxu0 0
  %1352 = vmatprep.subr.bf16.mxu0 0
  %1353 = vmatpush1.bf16.msra.mxu0 0
  %1354 = vmatprep.subr.bf16.mxu0 0
  %1355 = vmatpush1.bf16.msra.mxu0 0
  %1356 = vmatprep.subr.bf16.mxu0 0
  %1357 = vmatpush1.bf16.msra.mxu0 0
  %1358 = vmatprep.subr.bf16.mxu0 0
  %1359 = vmatpush1.bf16.msra.mxu0 0
  %1360 = vmatprep.subr.bf16.mxu0 0
  %1361 = vmatpush1.bf16.msra.mxu0 0
  %1362 = vmatprep.mubr.bf16.mxu0 0
  %1363 = vmatmul.mubr.bf16.gmra.mrb[0].mxu0 %v1256
  %v1364 = vpop.f32.mrb[0].mxu0
  %v1365 = vadd.f32 0.0, %v1364
  %v1366 = vpop.f32.mrb[0].mxu0
  %v1367 = vpop.f32.mrb[0].mxu0
  %v1368 = vadd.f32 0.0, %v1367
  %v1369 = vpop.f32.mrb[0].mxu0
  %1370 = vmatprep.mubr.bf16.mxu0 0
  %1371 = vmatmul.mubr.bf16.gmra.mrb[0].mxu0 %v1259
  %v1372 = vpop.f32.mrb[0].mxu0
  %v1373 = vadd.f32 0.0, %v1372
  %v1374 = vpop.f32.mrb[0].mxu0
  %v1375 = vpop.f32.mrb[0].mxu0
  %v1376 = vadd.f32 0.0, %v1375
  %v1377 = vpop.f32.mrb[0].mxu0
  %1378 = vmatprep.mubr.bf16.mxu0 0
  %1379 = vmatmul.mubr.bf16.gmra.mrb[0].mxu0 %v1262
  %v1380 = vpop.f32.mrb[0].mxu0
  %v1381 = vadd.f32 0.0, %v1380
  %v1382 = vpop.f32.mrb[0].mxu0
  %v1383 = vpop.f32.mrb[0].mxu0
  %v1384 = vadd.f32 0.0, %v1383
  %v1385 = vpop.f32.mrb[0].mxu0
  %1386 = vmatprep.mubr.bf16.mxu0 0
  %1387 = vmatmul.mubr.bf16.gmra.mrb[0].mxu0 %v1265
  %v1388 = vpop.f32.mrb[0].mxu0
  %v1389 = vadd.f32 0.0, %v1388
  %v1390 = vpop.f32.mrb[0].mxu0
  %v1391 = vpop.f32.mrb[0].mxu0
  %v1392 = vadd.f32 0.0, %v1391
  %v1393 = vpop.f32.mrb[0].mxu0
  %1394 = vmatprep.mubr.bf16.mxu0 0
  %1395 = vmatmul.mubr.bf16.gmra.mrb[0].mxu0 %v1268
  %v1396 = vpop.f32.mrb[0].mxu0
  %v1397 = vadd.f32 0.0, %v1396
  %v1398 = vpop.f32.mrb[0].mxu0
  %v1399 = vpop.f32.mrb[0].mxu0
  %v1400 = vadd.f32 0.0, %v1399
  %v1401 = vpop.f32.mrb[0].mxu0
  %1402 = vmatprep.mubr.bf16.mxu0 0
  %1403 = vmatmul.mubr.bf16.gmra.mrb[0].mxu0 %v1271
  %v1404 = vpop.f32.mrb[0].mxu0
  %v1405 = vadd.f32 0.0, %v1404
  %v1406 = vpop.f32.mrb[0].mxu0
  %v1407 = vpop.f32.mrb[0].mxu0
  %v1408 = vadd.f32 0.0, %v1407
  %v1409 = vpop.f32.mrb[0].mxu0
  %1410 = vmatprep.mubr.bf16.mxu0 0
  %1411 = vmatmul.mubr.bf16.gmra.mrb[0].mxu0 %v1274
  %v1412 = vpop.f32.mrb[0].mxu0
  %v1413 = vadd.f32 0.0, %v1412
  %v1414 = vpop.f32.mrb[0].mxu0
  %v1415 = vpop.f32.mrb[0].mxu0
  %v1416 = vadd.f32 0.0, %v1415
  %v1417 = vpop.f32.mrb[0].mxu0
  %1418 = vmatprep.mubr.bf16.mxu0 0
  %1419 = vmatmul.mubr.bf16.gmra.mrb[0].mxu0 %v1277
  %v1420 = vpop.f32.mrb[0].mxu0
  %v1421 = vadd.f32 0.0, %v1420
  %v1422 = vpop.f32.mrb[0].mxu0
  %v1423 = vpop.f32.mrb[0].mxu0
  %v1424 = vadd.f32 0.0, %v1423
  %v1425 = vpop.f32.mrb[0].mxu0
  %1426 = vmatprep.mubr.bf16.mxu0 0
  %1427 = vmatmul.mubr.bf16.gmra.mrb[0].mxu0 %v1280
  %v1428 = vpop.f32.mrb[0].mxu0
  %v1429 = vadd.f32 0.0, %v1428
  %v1430 = vpop.f32.mrb[0].mxu0
  %v1431 = vpop.f32.mrb[0].mxu0
  %v1432 = vadd.f32 0.0, %v1431
  %v1433 = vpop.f32.mrb[0].mxu0
  %1434 = vmatprep.mubr.bf16.mxu0 0
  %1435 = vmatmul.mubr.bf16.gmra.mrb[0].mxu0 %v1283
  %v1436 = vpop.f32.mrb[0].mxu0
  %v1437 = vadd.f32 0.0, %v1436
  %v1438 = vpop.f32.mrb[0].mxu0
  %v1439 = vpop.f32.mrb[0].mxu0
  %v1440 = vadd.f32 0.0, %v1439
  %v1441 = vpop.f32.mrb[0].mxu0
  %1442 = vmatprep.mubr.bf16.mxu0 0
  %1443 = vmatmul.mubr.bf16.gmra.mrb[0].mxu0 %v1286
  %v1444 = vpop.f32.mrb[0].mxu0
  %v1445 = vadd.f32 0.0, %v1444
  %v1446 = vpop.f32.mrb[0].mxu0
  %v1447 = vpop.f32.mrb[0].mxu0
  %v1448 = vadd.f32 0.0, %v1447
  %v1449 = vpop.f32.mrb[0].mxu0
  %1450 = vmatprep.mubr.bf16.mxu0 0
  %1451 = vmatmul.mubr.bf16.gmra.mrb[0].mxu0 %v1289
  %v1452 = vpop.f32.mrb[0].mxu0
  %v1453 = vadd.f32 0.0, %v1452
  %v1454 = vpop.f32.mrb[0].mxu0
  %v1455 = vpop.f32.mrb[0].mxu0
  %v1456 = vadd.f32 0.0, %v1455
  %v1457 = vpop.f32.mrb[0].mxu0
  %1458 = vmatprep.mubr.bf16.mxu0 0
  %1459 = vmatmul.mubr.bf16.gmra.mrb[0].mxu0 %v1292
  %v1460 = vpop.f32.mrb[0].mxu0
  %v1461 = vadd.f32 0.0, %v1460
  %v1462 = vpop.f32.mrb[0].mxu0
  %v1463 = vpop.f32.mrb[0].mxu0
  %v1464 = vadd.f32 0.0, %v1463
  %v1465 = vpop.f32.mrb[0].mxu0
  %1466 = vmatprep.mubr.bf16.mxu0 0
  %1467 = vmatmul.mubr.bf16.gmra.mrb[0].mxu0 %v1295
  %v1468 = vpop.f32.mrb[0].mxu0
  %v1469 = vadd.f32 0.0, %v1468
  %v1470 = vpop.f32.mrb[0].mxu0
  %v1471 = vpop.f32.mrb[0].mxu0
  %v1472 = vadd.f32 0.0, %v1471
  %v1473 = vpop.f32.mrb[0].mxu0
  %1474 = vmatprep.mubr.bf16.mxu0 0
  %1475 = vmatmul.mubr.bf16.gmra.mrb[0].mxu0 %v1298
  %v1476 = vpop.f32.mrb[0].mxu0
  %v1477 = vadd.f32 0.0, %v1476
  %v1478 = vpop.f32.mrb[0].mxu0
  %v1479 = vpop.f32.mrb[0].mxu0
  %v1480 = vadd.f32 0.0, %v1479
  %v1481 = vpop.f32.mrb[0].mxu0
  %1482 = vmatprep.mubr.bf16.mxu0 0
  %1483 = vmatmul.mubr.bf16.gmra.mrb[0].mxu0 %v1301
  %v1484 = vpop.f32.mrb[0].mxu0
  %v1485 = vadd.f32 0.0, %v1484
  %v1486 = vpop.f32.mrb[0].mxu0
  %v1487 = vpop.f32.mrb[0].mxu0
  %v1488 = vadd.f32 0.0, %v1487
  %v1489 = vpop.f32.mrb[0].mxu0
  %1490 = vmatprep.mubr.bf16.mxu0 0
  %1491 = vmatmul.mubr.bf16.gmra.mrb[0].mxu0 %v1304
  %v1492 = vpop.f32.mrb[0].mxu0
  %v1493 = vadd.f32 0.0, %v1492
  %v1494 = vpop.f32.mrb[0].mxu0
  %v1495 = vpop.f32.mrb[0].mxu0
  %v1496 = vadd.f32 0.0, %v1495
  %v1497 = vpop.f32.mrb[0].mxu0
  %1498 = vmatprep.mubr.bf16.mxu0 0
  %1499 = vmatmul.mubr.bf16.gmra.mrb[0].mxu0 %v1307
  %v1500 = vpop.f32.mrb[0].mxu0
  %v1501 = vadd.f32 0.0, %v1500
  %v1502 = vpop.f32.mrb[0].mxu0
  %v1503 = vpop.f32.mrb[0].mxu0
  %v1504 = vadd.f32 0.0, %v1503
  %v1505 = vpop.f32.mrb[0].mxu0
  %1506 = vmatprep.mubr.bf16.mxu0 0
  %1507 = vmatmul.mubr.bf16.gmra.mrb[0].mxu0 %v1310
  %v1508 = vpop.f32.mrb[0].mxu0
  %v1509 = vadd.f32 0.0, %v1508
  %v1510 = vpop.f32.mrb[0].mxu0
  %v1511 = vpop.f32.mrb[0].mxu0
  %v1512 = vadd.f32 0.0, %v1511
  %v1513 = vpop.f32.mrb[0].mxu0
  %1514 = vmatprep.mubr.bf16.mxu0 0
  %1515 = vmatmul.mubr.bf16.gmra.mrb[0].mxu0 %v1313
  %v1516 = vpop.f32.mrb[0].mxu0
  %v1517 = vadd.f32 0.0, %v1516
  %v1518 = vpop.f32.mrb[0].mxu0
  %v1519 = vpop.f32.mrb[0].mxu0
  %v1520 = vadd.f32 0.0, %v1519
  %v1521 = vpop.f32.mrb[0].mxu0
  %1522 = vmatprep.mubr.bf16.mxu0 0
  %1523 = vmatmul.mubr.bf16.gmra.mrb[0].mxu0 %v1316
  %v1524 = vpop.f32.mrb[0].mxu0
  %v1525 = vadd.f32 0.0, %v1524
  %v1526 = vpop.f32.mrb[0].mxu0
  %v1527 = vpop.f32.mrb[0].mxu0
  %v1528 = vadd.f32 0.0, %v1527
  %v1529 = vpop.f32.mrb[0].mxu0
  %1530 = vmatprep.mubr.bf16.mxu0 0
  %1531 = vmatmul.mubr.bf16.gmra.mrb[0].mxu0 %v1319
  %v1532 = vpop.f32.mrb[0].mxu0
  %v1533 = vadd.f32 0.0, %v1532
  %v1534 = vpop.f32.mrb[0].mxu0
  %v1535 = vpop.f32.mrb[0].mxu0
  %v1536 = vadd.f32 0.0, %v1535
  %v1537 = vpop.f32.mrb[0].mxu0
  %1538 = vmatprep.mubr.bf16.mxu0 0
  %1539 = vmatmul.mubr.bf16.gmra.mrb[0].mxu0 %v1322
  %v1540 = vpop.f32.mrb[0].mxu0
  %v1541 = vadd.f32 0.0, %v1540
  %v1542 = vpop.f32.mrb[0].mxu0
  %v1543 = vpop.f32.mrb[0].mxu0
  %v1544 = vadd.f32 0.0, %v1543
  %v1545 = vpop.f32.mrb[0].mxu0
  %1546 = vmatprep.mubr.bf16.mxu0 0
  %1547 = vmatmul.mubr.bf16.gmra.mrb[0].mxu0 %v1325
  %v1548 = vpop.f32.mrb[0].mxu0
  %v1549 = vadd.f32 0.0, %v1548
  %v1550 = vpop.f32.mrb[0].mxu0
  %v1551 = vpop.f32.mrb[0].mxu0
  %v1552 = vadd.f32 0.0, %v1551
  %v1553 = vpop.f32.mrb[0].mxu0
  %1554 = vmatprep.mubr.bf16.mxu0 0
  %1555 = vmatmul.mubr.bf16.gmra.mrb[0].mxu0 %v1328
  %v1556 = vpop.f32.mrb[0].mxu0
  %v1557 = vadd.f32 0.0, %v1556
  %v1558 = vpop.f32.mrb[0].mxu0
  %v1559 = vpop.f32.mrb[0].mxu0
  %v1560 = vadd.f32 0.0, %v1559
  %v1561 = vpop.f32.mrb[0].mxu0
  %1562 = vdwg.mxu0
  %v1563 = vmax.f32 %v1029, %v1365
  %v1564 = vmax.f32 %v1030, %v1368
  %v1565 = vmax.f32 %v1031, %v1373
  %v1566 = vmax.f32 %v1032, %v1376
  %v1567 = vmax.f32 %v1033, %v1381
  %v1568 = vmax.f32 %v1034, %v1384
  %v1569 = vmax.f32 %v1035, %v1389
  %v1570 = vmax.f32 %v1036, %v1392
  %v1571 = vmax.f32 %v1037, %v1397
  %v1572 = vmax.f32 %v1038, %v1400
  %v1573 = vmax.f32 %v1039, %v1405
  %v1574 = vmax.f32 %v1040, %v1408
  %v1575 = vmax.f32 %v1041, %v1413
  %v1576 = vmax.f32 %v1042, %v1416
  %v1577 = vmax.f32 %v1043, %v1421
  %v1578 = vmax.f32 %v1044, %v1424
  %v1579 = vmax.f32 %v1045, %v1429
  %v1580 = vmax.f32 %v1046, %v1432
  %v1581 = vmax.f32 %v1047, %v1437
  %v1582 = vmax.f32 %v1048, %v1440
  %v1583 = vmax.f32 %v1049, %v1445
  %v1584 = vmax.f32 %v1050, %v1448
  %v1585 = vmax.f32 %v1051, %v1453
  %v1586 = vmax.f32 %v1052, %v1456
  %v1587 = vmax.f32 %v1053, %v1461
  %v1588 = vmax.f32 %v1054, %v1464
  %v1589 = vmax.f32 %v1055, %v1469
  %v1590 = vmax.f32 %v1056, %v1472
  %v1591 = vmax.f32 %v1057, %v1477
  %v1592 = vmax.f32 %v1058, %v1480
  %v1593 = vmax.f32 %v1059, %v1485
  %v1594 = vmax.f32 %v1060, %v1488
  %v1595 = vmax.f32 %v1061, %v1493
  %v1596 = vmax.f32 %v1062, %v1496
  %v1597 = vmax.f32 %v1063, %v1501
  %v1598 = vmax.f32 %v1064, %v1504
  %v1599 = vmax.f32 %v1065, %v1509
  %v1600 = vmax.f32 %v1066, %v1512
  %v1601 = vmax.f32 %v1067, %v1517
  %v1602 = vmax.f32 %v1068, %v1520
  %v1603 = vmax.f32 %v1069, %v1525
  %v1604 = vmax.f32 %v1070, %v1528
  %v1605 = vmax.f32 %v1071, %v1533
  %v1606 = vmax.f32 %v1072, %v1536
  %v1607 = vmax.f32 %v1073, %v1541
  %v1608 = vmax.f32 %v1074, %v1544
  %v1609 = vmax.f32 %v1075, %v1549
  %v1610 = vmax.f32 %v1076, %v1552
  %v1611 = vmax.f32 %v1077, %v1557
  %v1612 = vmax.f32 %v1078, %v1560
  %s1613 = scalar_lea.vmem %s0, 600
  %v1614 = vld [vmem:[%s1613] sm:$0xf]
  %v1615 = vld [vmem:[%s1613 + $0x4] sm:$0xf]
  %v1616 = vld [vmem:[%s1613 + $0x8] sm:$0xf]
  %v1617 = vld [vmem:[%s1613 + $0xc] sm:$0xf]
  %v1618 = vld [vmem:[%s1613 + $0x10] sm:$0xf]
  %v1619 = vld [vmem:[%s1613 + $0x14] sm:$0xf]
  %v1620 = vld [vmem:[%s1613 + $0x18] sm:$0xf]
  %v1621 = vld [vmem:[%s1613 + $0x1c] sm:$0xf]
  %v1622 = vld [vmem:[%s1613 + $0x20] sm:$0xf]
  %v1623 = vld [vmem:[%s1613 + $0x24] sm:$0xf]
  %v1624 = vld [vmem:[%s1613 + $0x28] sm:$0xf]
  %v1625 = vld [vmem:[%s1613 + $0x2c] sm:$0xf]
  %v1626 = vld [vmem:[%s1613 + $0x30] sm:$0xf]
  %v1627 = vld [vmem:[%s1613 + $0x34] sm:$0xf]
  %v1628 = vld [vmem:[%s1613 + $0x38] sm:$0xf]
  %v1629 = vld [vmem:[%s1613 + $0x3c] sm:$0xf]
  %v1630 = vld [vmem:[%s1613 + $0x40] sm:$0xf]
  %v1631 = vld [vmem:[%s1613 + $0x44] sm:$0xf]
  %v1632 = vld [vmem:[%s1613 + $0x48] sm:$0xf]
  %v1633 = vld [vmem:[%s1613 + $0x4c] sm:$0xf]
  %v1634 = vld [vmem:[%s1613 + $0x50] sm:$0xf]
  %v1635 = vld [vmem:[%s1613 + $0x54] sm:$0xf]
  %v1636 = vld [vmem:[%s1613 + $0x58] sm:$0xf]
  %v1637 = vld [vmem:[%s1613 + $0x5c] sm:$0xf]
  %v1638 = vld [vmem:[%s1613 + $0x60] sm:$0xf]
  %v1639 = vld [vmem:[%s1613 + $0x64] sm:$0xf]
  %v1640 = vld [vmem:[%s1613 + $0x68] sm:$0xf]
  %v1641 = vld [vmem:[%s1613 + $0x6c] sm:$0xf]
  %v1642 = vld [vmem:[%s1613 + $0x70] sm:$0xf]
  %v1643 = vld [vmem:[%s1613 + $0x74] sm:$0xf]
  %v1644 = vld [vmem:[%s1613 + $0x78] sm:$0xf]
  %v1645 = vld [vmem:[%s1613 + $0x7c] sm:$0xf]
  %v1646 = vld [vmem:[%s1613 + $0x80] sm:$0xf]
  %v1647 = vld [vmem:[%s1613 + $0x84] sm:$0xf]
  %v1648 = vld [vmem:[%s1613 + $0x88] sm:$0xf]
  %v1649 = vld [vmem:[%s1613 + $0x8c] sm:$0xf]
  %v1650 = vld [vmem:[%s1613 + $0x90] sm:$0xf]
  %v1651 = vld [vmem:[%s1613 + $0x94] sm:$0xf]
  %v1652 = vld [vmem:[%s1613 + $0x98] sm:$0xf]
  %v1653 = vld [vmem:[%s1613 + $0x9c] sm:$0xf]
  %v1654 = vld [vmem:[%s1613 + $0xa0] sm:$0xf]
  %v1655 = vld [vmem:[%s1613 + $0xa4] sm:$0xf]
  %v1656 = vld [vmem:[%s1613 + $0xa8] sm:$0xf]
  %v1657 = vld [vmem:[%s1613 + $0xac] sm:$0xf]
  %v1658 = vld [vmem:[%s1613 + $0xb0] sm:$0xf]
  %v1659 = vld [vmem:[%s1613 + $0xb4] sm:$0xf]
  %v1660 = vld [vmem:[%s1613 + $0xb8] sm:$0xf]
  %v1661 = vld [vmem:[%s1613 + $0xbc] sm:$0xf]
  %v1662 = vld [vmem:[%s1613 + $0xc0] sm:$0xf]
  %v1663 = vld [vmem:[%s1613 + $0xc4] sm:$0xf]
  %v1714 = vunpack.c.l.b16 %v1614
  %v1715 = vunpack.c.l.b16 %v1615
  %v1716 = vunpack.c.l.b16 %v1616
  %v1717 = vunpack.c.l.b16 %v1617
  %v1718 = vunpack.c.l.b16 %v1618
  %v1719 = vunpack.c.l.b16 %v1619
  %v1720 = vunpack.c.l.b16 %v1620
  %v1721 = vunpack.c.l.b16 %v1621
  %v1722 = vunpack.c.l.b16 %v1622
  %v1723 = vunpack.c.l.b16 %v1623
  %v1724 = vunpack.c.l.b16 %v1624
  %v1725 = vunpack.c.l.b16 %v1625
  %v1726 = vunpack.c.l.b16 %v1626
  %v1727 = vunpack.c.l.b16 %v1627
  %v1728 = vunpack.c.l.b16 %v1628
  %v1729 = vunpack.c.l.b16 %v1629
  %v1730 = vunpack.c.l.b16 %v1630
  %v1731 = vunpack.c.l.b16 %v1631
  %v1732 = vunpack.c.l.b16 %v1632
  %v1733 = vunpack.c.l.b16 %v1633
  %v1734 = vunpack.c.l.b16 %v1634
  %v1735 = vunpack.c.l.b16 %v1635
  %v1736 = vunpack.c.l.b16 %v1636
  %v1737 = vunpack.c.l.b16 %v1637
  %v1738 = vunpack.c.l.b16 %v1638
  %v1739 = vunpack.c.l.b16 %v1639
  %v1740 = vunpack.c.l.b16 %v1640
  %v1741 = vunpack.c.l.b16 %v1641
  %v1742 = vunpack.c.l.b16 %v1642
  %v1743 = vunpack.c.l.b16 %v1643
  %v1744 = vunpack.c.l.b16 %v1644
  %v1745 = vunpack.c.l.b16 %v1645
  %v1746 = vunpack.c.l.b16 %v1646
  %v1747 = vunpack.c.l.b16 %v1647
  %v1748 = vunpack.c.l.b16 %v1648
  %v1749 = vunpack.c.l.b16 %v1649
  %v1750 = vunpack.c.l.b16 %v1650
  %v1751 = vunpack.c.l.b16 %v1651
  %v1752 = vunpack.c.l.b16 %v1652
  %v1753 = vunpack.c.l.b16 %v1653
  %v1754 = vunpack.c.l.b16 %v1654
  %v1755 = vunpack.c.l.b16 %v1655
  %v1756 = vunpack.c.l.b16 %v1656
  %v1757 = vunpack.c.l.b16 %v1657
  %v1758 = vunpack.c.l.b16 %v1658
  %v1759 = vunpack.c.l.b16 %v1659
  %v1760 = vunpack.c.l.b16 %v1660
  %v1761 = vunpack.c.l.b16 %v1661
  %v1762 = vunpack.c.l.b16 %v1662
  %v1763 = vunpack.c.l.b16 %v1663
  %v1764 = vpack.c.b16 %v1715, %v1714
  %v1765 = vpack.c.b16 %v1717, %v1716
  %v1766 = vpack.c.b16 %v1719, %v1718
  %v1767 = vpack.c.b16 %v1721, %v1720
  %v1768 = vpack.c.b16 %v1723, %v1722
  %v1769 = vpack.c.b16 %v1725, %v1724
  %v1770 = vpack.c.b16 %v1727, %v1726
  %v1771 = vpack.c.b16 %v1729, %v1728
  %v1772 = vpack.c.b16 %v1731, %v1730
  %v1773 = vpack.c.b16 %v1733, %v1732
  %v1774 = vpack.c.b16 %v1735, %v1734
  %v1775 = vpack.c.b16 %v1737, %v1736
  %v1776 = vpack.c.b16 %v1739, %v1738
  %v1777 = vpack.c.b16 %v1741, %v1740
  %v1778 = vpack.c.b16 %v1743, %v1742
  %v1779 = vpack.c.b16 %v1745, %v1744
  %v1780 = vpack.c.b16 %v1747, %v1746
  %v1781 = vpack.c.b16 %v1749, %v1748
  %v1782 = vpack.c.b16 %v1751, %v1750
  %v1783 = vpack.c.b16 %v1753, %v1752
  %v1784 = vpack.c.b16 %v1755, %v1754
  %v1785 = vpack.c.b16 %v1757, %v1756
  %v1786 = vpack.c.b16 %v1759, %v1758
  %v1787 = vpack.c.b16 %v1761, %v1760
  %v1788 = vpack.c.b16 %v1763, %v1762
  %v1790 = vsel %vm229, %v1764, 0
  %v1793 = vsel %vm229, %v1765, 0
  %v1796 = vsel %vm229, %v1766, 0
  %v1799 = vsel %vm229, %v1767, 0
  %v1802 = vsel %vm229, %v1768, 0
  %v1805 = vsel %vm229, %v1769, 0
  %v1808 = vsel %vm229, %v1770, 0
  %v1811 = vsel %vm229, %v1771, 0
  %v1814 = vsel %vm229, %v1772, 0
  %v1817 = vsel %vm229, %v1773, 0
  %v1820 = vsel %vm229, %v1774, 0
  %v1823 = vsel %vm229, %v1775, 0
  %v1826 = vsel %vm229, %v1776, 0
  %v1829 = vsel %vm229, %v1777, 0
  %v1832 = vsel %vm229, %v1778, 0
  %v1835 = vsel %vm229, %v1779, 0
  %v1838 = vsel %vm229, %v1780, 0
  %v1841 = vsel %vm229, %v1781, 0
  %v1844 = vsel %vm229, %v1782, 0
  %v1847 = vsel %vm229, %v1783, 0
  %v1850 = vsel %vm229, %v1784, 0
  %v1853 = vsel %vm229, %v1785, 0
  %v1856 = vsel %vm229, %v1786, 0
  %v1859 = vsel %vm229, %v1787, 0
  %v1862 = vsel %vm229, %v1788, 0
  %1864 = vmatprep.subr.bf16.mxu0 0
  %1865 = vmatpush1.bf16.msra.mxu0 %v220
  %1866 = vmatprep.subr.bf16.mxu0 0
  %1867 = vmatpush1.bf16.msra.mxu0 %v221
  %1868 = vmatprep.subr.bf16.mxu0 0
  %1869 = vmatpush1.bf16.msra.mxu0 %v222
  %1870 = vmatprep.subr.bf16.mxu0 0
  %1871 = vmatpush1.bf16.msra.mxu0 %v223
  %1872 = vmatprep.subr.bf16.mxu0 0
  %1873 = vmatpush1.bf16.msra.mxu0 %v310
  %1874 = vmatprep.subr.bf16.mxu0 0
  %1875 = vmatpush1.bf16.msra.mxu0 0
  %1876 = vmatprep.subr.bf16.mxu0 0
  %1877 = vmatpush1.bf16.msra.mxu0 0
  %1878 = vmatprep.subr.bf16.mxu0 0
  %1879 = vmatpush1.bf16.msra.mxu0 0
  %1880 = vmatprep.subr.bf16.mxu0 0
  %1881 = vmatpush1.bf16.msra.mxu0 0
  %1882 = vmatprep.subr.bf16.mxu0 0
  %1883 = vmatpush1.bf16.msra.mxu0 0
  %1884 = vmatprep.subr.bf16.mxu0 0
  %1885 = vmatpush1.bf16.msra.mxu0 0
  %1886 = vmatprep.subr.bf16.mxu0 0
  %1887 = vmatpush1.bf16.msra.mxu0 0
  %1888 = vmatprep.subr.bf16.mxu0 0
  %1889 = vmatpush1.bf16.msra.mxu0 0
  %1890 = vmatprep.subr.bf16.mxu0 0
  %1891 = vmatpush1.bf16.msra.mxu0 0
  %1892 = vmatprep.subr.bf16.mxu0 0
  %1893 = vmatpush1.bf16.msra.mxu0 0
  %1894 = vmatprep.subr.bf16.mxu0 0
  %1895 = vmatpush1.bf16.msra.mxu0 0
  %1896 = vmatprep.mubr.bf16.mxu0 0
  %1897 = vmatmul.mubr.bf16.gmra.mrb[0].mxu0 %v1790
  %v1898 = vpop.f32.mrb[0].mxu0
  %v1899 = vadd.f32 0.0, %v1898
  %v1900 = vpop.f32.mrb[0].mxu0
  %v1901 = vpop.f32.mrb[0].mxu0
  %v1902 = vadd.f32 0.0, %v1901
  %v1903 = vpop.f32.mrb[0].mxu0
  %1904 = vmatprep.mubr.bf16.mxu0 0
  %1905 = vmatmul.mubr.bf16.gmra.mrb[0].mxu0 %v1793
  %v1906 = vpop.f32.mrb[0].mxu0
  %v1907 = vadd.f32 0.0, %v1906
  %v1908 = vpop.f32.mrb[0].mxu0
  %v1909 = vpop.f32.mrb[0].mxu0
  %v1910 = vadd.f32 0.0, %v1909
  %v1911 = vpop.f32.mrb[0].mxu0
  %1912 = vmatprep.mubr.bf16.mxu0 0
  %1913 = vmatmul.mubr.bf16.gmra.mrb[0].mxu0 %v1796
  %v1914 = vpop.f32.mrb[0].mxu0
  %v1915 = vadd.f32 0.0, %v1914
  %v1916 = vpop.f32.mrb[0].mxu0
  %v1917 = vpop.f32.mrb[0].mxu0
  %v1918 = vadd.f32 0.0, %v1917
  %v1919 = vpop.f32.mrb[0].mxu0
  %1920 = vmatprep.mubr.bf16.mxu0 0
  %1921 = vmatmul.mubr.bf16.gmra.mrb[0].mxu0 %v1799
  %v1922 = vpop.f32.mrb[0].mxu0
  %v1923 = vadd.f32 0.0, %v1922
  %v1924 = vpop.f32.mrb[0].mxu0
  %v1925 = vpop.f32.mrb[0].mxu0
  %v1926 = vadd.f32 0.0, %v1925
  %v1927 = vpop.f32.mrb[0].mxu0
  %1928 = vmatprep.mubr.bf16.mxu0 0
  %1929 = vmatmul.mubr.bf16.gmra.mrb[0].mxu0 %v1802
  %v1930 = vpop.f32.mrb[0].mxu0
  %v1931 = vadd.f32 0.0, %v1930
  %v1932 = vpop.f32.mrb[0].mxu0
  %v1933 = vpop.f32.mrb[0].mxu0
  %v1934 = vadd.f32 0.0, %v1933
  %v1935 = vpop.f32.mrb[0].mxu0
  %1936 = vmatprep.mubr.bf16.mxu0 0
  %1937 = vmatmul.mubr.bf16.gmra.mrb[0].mxu0 %v1805
  %v1938 = vpop.f32.mrb[0].mxu0
  %v1939 = vadd.f32 0.0, %v1938
  %v1940 = vpop.f32.mrb[0].mxu0
  %v1941 = vpop.f32.mrb[0].mxu0
  %v1942 = vadd.f32 0.0, %v1941
  %v1943 = vpop.f32.mrb[0].mxu0
  %1944 = vmatprep.mubr.bf16.mxu0 0
  %1945 = vmatmul.mubr.bf16.gmra.mrb[0].mxu0 %v1808
  %v1946 = vpop.f32.mrb[0].mxu0
  %v1947 = vadd.f32 0.0, %v1946
  %v1948 = vpop.f32.mrb[0].mxu0
  %v1949 = vpop.f32.mrb[0].mxu0
  %v1950 = vadd.f32 0.0, %v1949
  %v1951 = vpop.f32.mrb[0].mxu0
  %1952 = vmatprep.mubr.bf16.mxu0 0
  %1953 = vmatmul.mubr.bf16.gmra.mrb[0].mxu0 %v1811
  %v1954 = vpop.f32.mrb[0].mxu0
  %v1955 = vadd.f32 0.0, %v1954
  %v1956 = vpop.f32.mrb[0].mxu0
  %v1957 = vpop.f32.mrb[0].mxu0
  %v1958 = vadd.f32 0.0, %v1957
  %v1959 = vpop.f32.mrb[0].mxu0
  %1960 = vmatprep.mubr.bf16.mxu0 0
  %1961 = vmatmul.mubr.bf16.gmra.mrb[0].mxu0 %v1814
  %v1962 = vpop.f32.mrb[0].mxu0
  %v1963 = vadd.f32 0.0, %v1962
  %v1964 = vpop.f32.mrb[0].mxu0
  %v1965 = vpop.f32.mrb[0].mxu0
  %v1966 = vadd.f32 0.0, %v1965
  %v1967 = vpop.f32.mrb[0].mxu0
  %1968 = vmatprep.mubr.bf16.mxu0 0
  %1969 = vmatmul.mubr.bf16.gmra.mrb[0].mxu0 %v1817
  %v1970 = vpop.f32.mrb[0].mxu0
  %v1971 = vadd.f32 0.0, %v1970
  %v1972 = vpop.f32.mrb[0].mxu0
  %v1973 = vpop.f32.mrb[0].mxu0
  %v1974 = vadd.f32 0.0, %v1973
  %v1975 = vpop.f32.mrb[0].mxu0
  %1976 = vmatprep.mubr.bf16.mxu0 0
  %1977 = vmatmul.mubr.bf16.gmra.mrb[0].mxu0 %v1820
  %v1978 = vpop.f32.mrb[0].mxu0
  %v1979 = vadd.f32 0.0, %v1978
  %v1980 = vpop.f32.mrb[0].mxu0
  %v1981 = vpop.f32.mrb[0].mxu0
  %v1982 = vadd.f32 0.0, %v1981
  %v1983 = vpop.f32.mrb[0].mxu0
  %1984 = vmatprep.mubr.bf16.mxu0 0
  %1985 = vmatmul.mubr.bf16.gmra.mrb[0].mxu0 %v1823
  %v1986 = vpop.f32.mrb[0].mxu0
  %v1987 = vadd.f32 0.0, %v1986
  %v1988 = vpop.f32.mrb[0].mxu0
  %v1989 = vpop.f32.mrb[0].mxu0
  %v1990 = vadd.f32 0.0, %v1989
  %v1991 = vpop.f32.mrb[0].mxu0
  %1992 = vmatprep.mubr.bf16.mxu0 0
  %1993 = vmatmul.mubr.bf16.gmra.mrb[0].mxu0 %v1826
  %v1994 = vpop.f32.mrb[0].mxu0
  %v1995 = vadd.f32 0.0, %v1994
  %v1996 = vpop.f32.mrb[0].mxu0
  %v1997 = vpop.f32.mrb[0].mxu0
  %v1998 = vadd.f32 0.0, %v1997
  %v1999 = vpop.f32.mrb[0].mxu0
  %2000 = vmatprep.mubr.bf16.mxu0 0
  %2001 = vmatmul.mubr.bf16.gmra.mrb[0].mxu0 %v1829
  %v2002 = vpop.f32.mrb[0].mxu0
  %v2003 = vadd.f32 0.0, %v2002
  %v2004 = vpop.f32.mrb[0].mxu0
  %v2005 = vpop.f32.mrb[0].mxu0
  %v2006 = vadd.f32 0.0, %v2005
  %v2007 = vpop.f32.mrb[0].mxu0
  %2008 = vmatprep.mubr.bf16.mxu0 0
  %2009 = vmatmul.mubr.bf16.gmra.mrb[0].mxu0 %v1832
  %v2010 = vpop.f32.mrb[0].mxu0
  %v2011 = vadd.f32 0.0, %v2010
  %v2012 = vpop.f32.mrb[0].mxu0
  %v2013 = vpop.f32.mrb[0].mxu0
  %v2014 = vadd.f32 0.0, %v2013
  %v2015 = vpop.f32.mrb[0].mxu0
  %2016 = vmatprep.mubr.bf16.mxu0 0
  %2017 = vmatmul.mubr.bf16.gmra.mrb[0].mxu0 %v1835
  %v2018 = vpop.f32.mrb[0].mxu0
  %v2019 = vadd.f32 0.0, %v2018
  %v2020 = vpop.f32.mrb[0].mxu0
  %v2021 = vpop.f32.mrb[0].mxu0
  %v2022 = vadd.f32 0.0, %v2021
  %v2023 = vpop.f32.mrb[0].mxu0
  %2024 = vmatprep.mubr.bf16.mxu0 0
  %2025 = vmatmul.mubr.bf16.gmra.mrb[0].mxu0 %v1838
  %v2026 = vpop.f32.mrb[0].mxu0
  %v2027 = vadd.f32 0.0, %v2026
  %v2028 = vpop.f32.mrb[0].mxu0
  %v2029 = vpop.f32.mrb[0].mxu0
  %v2030 = vadd.f32 0.0, %v2029
  %v2031 = vpop.f32.mrb[0].mxu0
  %2032 = vmatprep.mubr.bf16.mxu0 0
  %2033 = vmatmul.mubr.bf16.gmra.mrb[0].mxu0 %v1841
  %v2034 = vpop.f32.mrb[0].mxu0
  %v2035 = vadd.f32 0.0, %v2034
  %v2036 = vpop.f32.mrb[0].mxu0
  %v2037 = vpop.f32.mrb[0].mxu0
  %v2038 = vadd.f32 0.0, %v2037
  %v2039 = vpop.f32.mrb[0].mxu0
  %2040 = vmatprep.mubr.bf16.mxu0 0
  %2041 = vmatmul.mubr.bf16.gmra.mrb[0].mxu0 %v1844
  %v2042 = vpop.f32.mrb[0].mxu0
  %v2043 = vadd.f32 0.0, %v2042
  %v2044 = vpop.f32.mrb[0].mxu0
  %v2045 = vpop.f32.mrb[0].mxu0
  %v2046 = vadd.f32 0.0, %v2045
  %v2047 = vpop.f32.mrb[0].mxu0
  %2048 = vmatprep.mubr.bf16.mxu0 0
  %2049 = vmatmul.mubr.bf16.gmra.mrb[0].mxu0 %v1847
  %v2050 = vpop.f32.mrb[0].mxu0
  %v2051 = vadd.f32 0.0, %v2050
  %v2052 = vpop.f32.mrb[0].mxu0
  %v2053 = vpop.f32.mrb[0].mxu0
  %v2054 = vadd.f32 0.0, %v2053
  %v2055 = vpop.f32.mrb[0].mxu0
  %2056 = vmatprep.mubr.bf16.mxu0 0
  %2057 = vmatmul.mubr.bf16.gmra.mrb[0].mxu0 %v1850
  %v2058 = vpop.f32.mrb[0].mxu0
  %v2059 = vadd.f32 0.0, %v2058
  %v2060 = vpop.f32.mrb[0].mxu0
  %v2061 = vpop.f32.mrb[0].mxu0
  %v2062 = vadd.f32 0.0, %v2061
  %v2063 = vpop.f32.mrb[0].mxu0
  %2064 = vmatprep.mubr.bf16.mxu0 0
  %2065 = vmatmul.mubr.bf16.gmra.mrb[0].mxu0 %v1853
  %v2066 = vpop.f32.mrb[0].mxu0
  %v2067 = vadd.f32 0.0, %v2066
  %v2068 = vpop.f32.mrb[0].mxu0
  %v2069 = vpop.f32.mrb[0].mxu0
  %v2070 = vadd.f32 0.0, %v2069
  %v2071 = vpop.f32.mrb[0].mxu0
  %2072 = vmatprep.mubr.bf16.mxu0 0
  %2073 = vmatmul.mubr.bf16.gmra.mrb[0].mxu0 %v1856
  %v2074 = vpop.f32.mrb[0].mxu0
  %v2075 = vadd.f32 0.0, %v2074
  %v2076 = vpop.f32.mrb[0].mxu0
  %v2077 = vpop.f32.mrb[0].mxu0
  %v2078 = vadd.f32 0.0, %v2077
  %v2079 = vpop.f32.mrb[0].mxu0
  %2080 = vmatprep.mubr.bf16.mxu0 0
  %2081 = vmatmul.mubr.bf16.gmra.mrb[0].mxu0 %v1859
  %v2082 = vpop.f32.mrb[0].mxu0
  %v2083 = vadd.f32 0.0, %v2082
  %v2084 = vpop.f32.mrb[0].mxu0
  %v2085 = vpop.f32.mrb[0].mxu0
  %v2086 = vadd.f32 0.0, %v2085
  %v2087 = vpop.f32.mrb[0].mxu0
  %2088 = vmatprep.mubr.bf16.mxu0 0
  %2089 = vmatmul.mubr.bf16.gmra.mrb[0].mxu0 %v1862
  %v2090 = vpop.f32.mrb[0].mxu0
  %v2091 = vadd.f32 0.0, %v2090
  %v2092 = vpop.f32.mrb[0].mxu0
  %v2093 = vpop.f32.mrb[0].mxu0
  %v2094 = vadd.f32 0.0, %v2093
  %v2095 = vpop.f32.mrb[0].mxu0
  %2096 = vdwg.mxu0
  %v2097 = vmax.f32 %v1563, %v1899
  %v2098 = vmax.f32 %v1564, %v1902
  %v2099 = vmax.f32 %v1565, %v1907
  %v2100 = vmax.f32 %v1566, %v1910
  %v2101 = vmax.f32 %v1567, %v1915
  %v2102 = vmax.f32 %v1568, %v1918
  %v2103 = vmax.f32 %v1569, %v1923
  %v2104 = vmax.f32 %v1570, %v1926
  %v2105 = vmax.f32 %v1571, %v1931
  %v2106 = vmax.f32 %v1572, %v1934
  %v2107 = vmax.f32 %v1573, %v1939
  %v2108 = vmax.f32 %v1574, %v1942
  %v2109 = vmax.f32 %v1575, %v1947
  %v2110 = vmax.f32 %v1576, %v1950
  %v2111 = vmax.f32 %v1577, %v1955
  %v2112 = vmax.f32 %v1578, %v1958
  %v2113 = vmax.f32 %v1579, %v1963
  %v2114 = vmax.f32 %v1580, %v1966
  %v2115 = vmax.f32 %v1581, %v1971
  %v2116 = vmax.f32 %v1582, %v1974
  %v2117 = vmax.f32 %v1583, %v1979
  %v2118 = vmax.f32 %v1584, %v1982
  %v2119 = vmax.f32 %v1585, %v1987
  %v2120 = vmax.f32 %v1586, %v1990
  %v2121 = vmax.f32 %v1587, %v1995
  %v2122 = vmax.f32 %v1588, %v1998
  %v2123 = vmax.f32 %v1589, %v2003
  %v2124 = vmax.f32 %v1590, %v2006
  %v2125 = vmax.f32 %v1591, %v2011
  %v2126 = vmax.f32 %v1592, %v2014
  %v2127 = vmax.f32 %v1593, %v2019
  %v2128 = vmax.f32 %v1594, %v2022
  %v2129 = vmax.f32 %v1595, %v2027
  %v2130 = vmax.f32 %v1596, %v2030
  %v2131 = vmax.f32 %v1597, %v2035
  %v2132 = vmax.f32 %v1598, %v2038
  %v2133 = vmax.f32 %v1599, %v2043
  %v2134 = vmax.f32 %v1600, %v2046
  %v2135 = vmax.f32 %v1601, %v2051
  %v2136 = vmax.f32 %v1602, %v2054
  %v2137 = vmax.f32 %v1603, %v2059
  %v2138 = vmax.f32 %v1604, %v2062
  %v2139 = vmax.f32 %v1605, %v2067
  %v2140 = vmax.f32 %v1606, %v2070
  %v2141 = vmax.f32 %v1607, %v2075
  %v2142 = vmax.f32 %v1608, %v2078
  %v2143 = vmax.f32 %v1609, %v2083
  %v2144 = vmax.f32 %v1610, %v2086
  %v2145 = vmax.f32 %v1611, %v2091
  %v2146 = vmax.f32 %v1612, %v2094
  %v2147 = vld [vmem:[%s2] sm:$0x1]
  %v2149 = vlaneseq
  %v2150 = vshrl.u32 %v2149, 7
  %v2151 = vsub.s32 0, %v2150
  %v2152 = vrot.slane %v2147, %v2151
  %v2154 = vadd.f32 %v2097, %v2152
  %v2155 = vadd.f32 %v2098, %v2152
  %v2156 = vadd.f32 %v2099, %v2152
  %v2157 = vadd.f32 %v2100, %v2152
  %v2158 = vadd.f32 %v2101, %v2152
  %v2159 = vadd.f32 %v2102, %v2152
  %v2160 = vadd.f32 %v2103, %v2152
  %v2161 = vadd.f32 %v2104, %v2152
  %v2162 = vadd.f32 %v2105, %v2152
  %v2163 = vadd.f32 %v2106, %v2152
  %v2164 = vadd.f32 %v2107, %v2152
  %v2165 = vadd.f32 %v2108, %v2152
  %v2166 = vadd.f32 %v2109, %v2152
  %v2167 = vadd.f32 %v2110, %v2152
  %v2168 = vadd.f32 %v2111, %v2152
  %v2169 = vadd.f32 %v2112, %v2152
  %v2170 = vadd.f32 %v2113, %v2152
  %v2171 = vadd.f32 %v2114, %v2152
  %v2172 = vadd.f32 %v2115, %v2152
  %v2173 = vadd.f32 %v2116, %v2152
  %v2174 = vadd.f32 %v2117, %v2152
  %v2175 = vadd.f32 %v2118, %v2152
  %v2176 = vadd.f32 %v2119, %v2152
  %v2177 = vadd.f32 %v2120, %v2152
  %v2178 = vadd.f32 %v2121, %v2152
  %v2179 = vadd.f32 %v2122, %v2152
  %v2180 = vadd.f32 %v2123, %v2152
  %v2181 = vadd.f32 %v2124, %v2152
  %v2182 = vadd.f32 %v2125, %v2152
  %v2183 = vadd.f32 %v2126, %v2152
  %v2184 = vadd.f32 %v2127, %v2152
  %v2185 = vadd.f32 %v2128, %v2152
  %v2186 = vadd.f32 %v2129, %v2152
  %v2187 = vadd.f32 %v2130, %v2152
  %v2188 = vadd.f32 %v2131, %v2152
  %v2189 = vadd.f32 %v2132, %v2152
  %v2190 = vadd.f32 %v2133, %v2152
  %v2191 = vadd.f32 %v2134, %v2152
  %v2192 = vadd.f32 %v2135, %v2152
  %v2193 = vadd.f32 %v2136, %v2152
  %v2194 = vadd.f32 %v2137, %v2152
  %v2195 = vadd.f32 %v2138, %v2152
  %v2196 = vadd.f32 %v2139, %v2152
  %v2197 = vadd.f32 %v2140, %v2152
  %v2198 = vadd.f32 %v2141, %v2152
  %v2199 = vadd.f32 %v2142, %v2152
  %v2200 = vadd.f32 %v2143, %v2152
  %v2201 = vadd.f32 %v2144, %v2152
  %v2202 = vadd.f32 %v2145, %v2152
  %v2203 = vadd.f32 %v2146, %v2152
  %v2204 = vmax.f32 %v2154, 0.0
  %v2205 = vmax.f32 %v2155, 0.0
  %v2206 = vmax.f32 %v2156, 0.0
  %v2207 = vmax.f32 %v2157, 0.0
  %v2208 = vmax.f32 %v2158, 0.0
  %v2209 = vmax.f32 %v2159, 0.0
  %v2210 = vmax.f32 %v2160, 0.0
  %v2211 = vmax.f32 %v2161, 0.0
  %v2212 = vmax.f32 %v2162, 0.0
  %v2213 = vmax.f32 %v2163, 0.0
  %v2214 = vmax.f32 %v2164, 0.0
  %v2215 = vmax.f32 %v2165, 0.0
  %v2216 = vmax.f32 %v2166, 0.0
  %v2217 = vmax.f32 %v2167, 0.0
  %v2218 = vmax.f32 %v2168, 0.0
  %v2219 = vmax.f32 %v2169, 0.0
  %v2220 = vmax.f32 %v2170, 0.0
  %v2221 = vmax.f32 %v2171, 0.0
  %v2222 = vmax.f32 %v2172, 0.0
  %v2223 = vmax.f32 %v2173, 0.0
  %v2224 = vmax.f32 %v2174, 0.0
  %v2225 = vmax.f32 %v2175, 0.0
  %v2226 = vmax.f32 %v2176, 0.0
  %v2227 = vmax.f32 %v2177, 0.0
  %v2228 = vmax.f32 %v2178, 0.0
  %v2229 = vmax.f32 %v2179, 0.0
  %v2230 = vmax.f32 %v2180, 0.0
  %v2231 = vmax.f32 %v2181, 0.0
  %v2232 = vmax.f32 %v2182, 0.0
  %v2233 = vmax.f32 %v2183, 0.0
  %v2234 = vmax.f32 %v2184, 0.0
  %v2235 = vmax.f32 %v2185, 0.0
  %v2236 = vmax.f32 %v2186, 0.0
  %v2237 = vmax.f32 %v2187, 0.0
  %v2238 = vmax.f32 %v2188, 0.0
  %v2239 = vmax.f32 %v2189, 0.0
  %v2240 = vmax.f32 %v2190, 0.0
  %v2241 = vmax.f32 %v2191, 0.0
  %v2242 = vmax.f32 %v2192, 0.0
  %v2243 = vmax.f32 %v2193, 0.0
  %v2244 = vmax.f32 %v2194, 0.0
  %v2245 = vmax.f32 %v2195, 0.0
  %v2246 = vmax.f32 %v2196, 0.0
  %v2247 = vmax.f32 %v2197, 0.0
  %v2248 = vmax.f32 %v2198, 0.0
  %v2249 = vmax.f32 %v2199, 0.0
  %v2250 = vmax.f32 %v2200, 0.0
  %v2251 = vmax.f32 %v2201, 0.0
  %v2252 = vmax.f32 %v2202, 0.0
  %v2253 = vmax.f32 %v2203, 0.0
  %v2254 = vpack.c.bf16 %v2205, %v2204
  %v2255 = vpack.c.bf16 %v2207, %v2206
  %v2256 = vpack.c.bf16 %v2209, %v2208
  %v2257 = vpack.c.bf16 %v2211, %v2210
  %v2258 = vpack.c.bf16 %v2213, %v2212
  %v2259 = vpack.c.bf16 %v2215, %v2214
  %v2260 = vpack.c.bf16 %v2217, %v2216
  %v2261 = vpack.c.bf16 %v2219, %v2218
  %v2262 = vpack.c.bf16 %v2221, %v2220
  %v2263 = vpack.c.bf16 %v2223, %v2222
  %v2264 = vpack.c.bf16 %v2225, %v2224
  %v2265 = vpack.c.bf16 %v2227, %v2226
  %v2266 = vpack.c.bf16 %v2229, %v2228
  %v2267 = vpack.c.bf16 %v2231, %v2230
  %v2268 = vpack.c.bf16 %v2233, %v2232
  %v2269 = vpack.c.bf16 %v2235, %v2234
  %v2270 = vpack.c.bf16 %v2237, %v2236
  %v2271 = vpack.c.bf16 %v2239, %v2238
  %v2272 = vpack.c.bf16 %v2241, %v2240
  %v2273 = vpack.c.bf16 %v2243, %v2242
  %v2274 = vpack.c.bf16 %v2245, %v2244
  %v2275 = vpack.c.bf16 %v2247, %v2246
  %v2276 = vpack.c.bf16 %v2249, %v2248
  %v2277 = vpack.c.bf16 %v2251, %v2250
  %v2278 = vpack.c.bf16 %v2253, %v2252
  %v2304 = vunpack.c.l.b16 %v2254
  %v2305 = vunpack.c.h.b16 %v2254
  %v2306 = vunpack.c.l.b16 %v2255
  %v2307 = vunpack.c.h.b16 %v2255
  %v2308 = vunpack.c.l.b16 %v2256
  %v2309 = vunpack.c.h.b16 %v2256
  %v2310 = vunpack.c.l.b16 %v2257
  %v2311 = vunpack.c.h.b16 %v2257
  %v2312 = vunpack.c.l.b16 %v2258
  %v2313 = vunpack.c.h.b16 %v2258
  %v2314 = vunpack.c.l.b16 %v2259
  %v2315 = vunpack.c.h.b16 %v2259
  %v2316 = vunpack.c.l.b16 %v2260
  %v2317 = vunpack.c.h.b16 %v2260
  %v2318 = vunpack.c.l.b16 %v2261
  %v2319 = vunpack.c.h.b16 %v2261
  %v2320 = vunpack.c.l.b16 %v2262
  %v2321 = vunpack.c.h.b16 %v2262
  %v2322 = vunpack.c.l.b16 %v2263
  %v2323 = vunpack.c.h.b16 %v2263
  %v2324 = vunpack.c.l.b16 %v2264
  %v2325 = vunpack.c.h.b16 %v2264
  %v2326 = vunpack.c.l.b16 %v2265
  %v2327 = vunpack.c.h.b16 %v2265
  %v2328 = vunpack.c.l.b16 %v2266
  %v2329 = vunpack.c.h.b16 %v2266
  %v2330 = vunpack.c.l.b16 %v2267
  %v2331 = vunpack.c.h.b16 %v2267
  %v2332 = vunpack.c.l.b16 %v2268
  %v2333 = vunpack.c.h.b16 %v2268
  %v2334 = vunpack.c.l.b16 %v2269
  %v2335 = vunpack.c.h.b16 %v2269
  %v2336 = vunpack.c.l.b16 %v2270
  %v2337 = vunpack.c.h.b16 %v2270
  %v2338 = vunpack.c.l.b16 %v2271
  %v2339 = vunpack.c.h.b16 %v2271
  %v2340 = vunpack.c.l.b16 %v2272
  %v2341 = vunpack.c.h.b16 %v2272
  %v2342 = vunpack.c.l.b16 %v2273
  %v2343 = vunpack.c.h.b16 %v2273
  %v2344 = vunpack.c.l.b16 %v2274
  %v2345 = vunpack.c.h.b16 %v2274
  %v2346 = vunpack.c.l.b16 %v2275
  %v2347 = vunpack.c.h.b16 %v2275
  %v2348 = vunpack.c.l.b16 %v2276
  %v2349 = vunpack.c.h.b16 %v2276
  %v2350 = vunpack.c.l.b16 %v2277
  %v2351 = vunpack.c.h.b16 %v2277
  %v2352 = vunpack.c.l.b16 %v2278
  %v2353 = vunpack.c.h.b16 %v2278
  %v2354 = vpack.c.b16 %v2304, %v2304
  %v2355 = vpack.c.b16 %v2305, %v2305
  %v2356 = vpack.c.b16 %v2306, %v2306
  %v2357 = vpack.c.b16 %v2307, %v2307
  %v2358 = vpack.c.b16 %v2308, %v2308
  %v2359 = vpack.c.b16 %v2309, %v2309
  %v2360 = vpack.c.b16 %v2310, %v2310
  %v2361 = vpack.c.b16 %v2311, %v2311
  %v2362 = vpack.c.b16 %v2312, %v2312
  %v2363 = vpack.c.b16 %v2313, %v2313
  %v2364 = vpack.c.b16 %v2314, %v2314
  %v2365 = vpack.c.b16 %v2315, %v2315
  %v2366 = vpack.c.b16 %v2316, %v2316
  %v2367 = vpack.c.b16 %v2317, %v2317
  %v2368 = vpack.c.b16 %v2318, %v2318
  %v2369 = vpack.c.b16 %v2319, %v2319
  %v2370 = vpack.c.b16 %v2320, %v2320
  %v2371 = vpack.c.b16 %v2321, %v2321
  %v2372 = vpack.c.b16 %v2322, %v2322
  %v2373 = vpack.c.b16 %v2323, %v2323
  %v2374 = vpack.c.b16 %v2324, %v2324
  %v2375 = vpack.c.b16 %v2325, %v2325
  %v2376 = vpack.c.b16 %v2326, %v2326
  %v2377 = vpack.c.b16 %v2327, %v2327
  %v2378 = vpack.c.b16 %v2328, %v2328
  %v2379 = vpack.c.b16 %v2329, %v2329
  %v2380 = vpack.c.b16 %v2330, %v2330
  %v2381 = vpack.c.b16 %v2331, %v2331
  %v2382 = vpack.c.b16 %v2332, %v2332
  %v2383 = vpack.c.b16 %v2333, %v2333
  %v2384 = vpack.c.b16 %v2334, %v2334
  %v2385 = vpack.c.b16 %v2335, %v2335
  %v2386 = vpack.c.b16 %v2336, %v2336
  %v2387 = vpack.c.b16 %v2337, %v2337
  %v2388 = vpack.c.b16 %v2338, %v2338
  %v2389 = vpack.c.b16 %v2339, %v2339
  %v2390 = vpack.c.b16 %v2340, %v2340
  %v2391 = vpack.c.b16 %v2341, %v2341
  %v2392 = vpack.c.b16 %v2342, %v2342
  %v2393 = vpack.c.b16 %v2343, %v2343
  %v2394 = vpack.c.b16 %v2344, %v2344
  %v2395 = vpack.c.b16 %v2345, %v2345
  %v2396 = vpack.c.b16 %v2346, %v2346
  %v2397 = vpack.c.b16 %v2347, %v2347
  %v2398 = vpack.c.b16 %v2348, %v2348
  %v2399 = vpack.c.b16 %v2349, %v2349
  %v2400 = vpack.c.b16 %v2350, %v2350
  %v2401 = vpack.c.b16 %v2351, %v2351
  %v2402 = vpack.c.b16 %v2352, %v2352
  %v2403 = vpack.c.b16 %v2353, %v2353
  %2454 = vst [vmem:[%s3] sm:$0xf] %v2354
  %2455 = vst [vmem:[%s3 + $0x4] sm:$0xf] %v2355
  %2456 = vst [vmem:[%s3 + $0x8] sm:$0xf] %v2356
  %2457 = vst [vmem:[%s3 + $0xc] sm:$0xf] %v2357
  %2458 = vst [vmem:[%s3 + $0x10] sm:$0xf] %v2358
  %2459 = vst [vmem:[%s3 + $0x14] sm:$0xf] %v2359
  %2460 = vst [vmem:[%s3 + $0x18] sm:$0xf] %v2360
  %2461 = vst [vmem:[%s3 + $0x1c] sm:$0xf] %v2361
  %2462 = vst [vmem:[%s3 + $0x20] sm:$0xf] %v2362
  %2463 = vst [vmem:[%s3 + $0x24] sm:$0xf] %v2363
  %2464 = vst [vmem:[%s3 + $0x28] sm:$0xf] %v2364
  %2465 = vst [vmem:[%s3 + $0x2c] sm:$0xf] %v2365
  %2466 = vst [vmem:[%s3 + $0x30] sm:$0xf] %v2366
  %2467 = vst [vmem:[%s3 + $0x34] sm:$0xf] %v2367
  %2468 = vst [vmem:[%s3 + $0x38] sm:$0xf] %v2368
  %2469 = vst [vmem:[%s3 + $0x3c] sm:$0xf] %v2369
  %2470 = vst [vmem:[%s3 + $0x40] sm:$0xf] %v2370
  %2471 = vst [vmem:[%s3 + $0x44] sm:$0xf] %v2371
  %2472 = vst [vmem:[%s3 + $0x48] sm:$0xf] %v2372
  %2473 = vst [vmem:[%s3 + $0x4c] sm:$0xf] %v2373
  %2474 = vst [vmem:[%s3 + $0x50] sm:$0xf] %v2374
  %2475 = vst [vmem:[%s3 + $0x54] sm:$0xf] %v2375
  %2476 = vst [vmem:[%s3 + $0x58] sm:$0xf] %v2376
  %2477 = vst [vmem:[%s3 + $0x5c] sm:$0xf] %v2377
  %2478 = vst [vmem:[%s3 + $0x60] sm:$0xf] %v2378
  %2479 = vst [vmem:[%s3 + $0x64] sm:$0xf] %v2379
  %2480 = vst [vmem:[%s3 + $0x68] sm:$0xf] %v2380
  %2481 = vst [vmem:[%s3 + $0x6c] sm:$0xf] %v2381
  %2482 = vst [vmem:[%s3 + $0x70] sm:$0xf] %v2382
  %2483 = vst [vmem:[%s3 + $0x74] sm:$0xf] %v2383
  %2484 = vst [vmem:[%s3 + $0x78] sm:$0xf] %v2384
  %2485 = vst [vmem:[%s3 + $0x7c] sm:$0xf] %v2385
  %2486 = vst [vmem:[%s3 + $0x80] sm:$0xf] %v2386
  %2487 = vst [vmem:[%s3 + $0x84] sm:$0xf] %v2387
  %2488 = vst [vmem:[%s3 + $0x88] sm:$0xf] %v2388
  %2489 = vst [vmem:[%s3 + $0x8c] sm:$0xf] %v2389
  %2490 = vst [vmem:[%s3 + $0x90] sm:$0xf] %v2390
  %2491 = vst [vmem:[%s3 + $0x94] sm:$0xf] %v2391
  %2492 = vst [vmem:[%s3 + $0x98] sm:$0xf] %v2392
  %2493 = vst [vmem:[%s3 + $0x9c] sm:$0xf] %v2393
  %2494 = vst [vmem:[%s3 + $0xa0] sm:$0xf] %v2394
  %2495 = vst [vmem:[%s3 + $0xa4] sm:$0xf] %v2395
  %2496 = vst [vmem:[%s3 + $0xa8] sm:$0xf] %v2396
  %2497 = vst [vmem:[%s3 + $0xac] sm:$0xf] %v2397
  %2498 = vst [vmem:[%s3 + $0xb0] sm:$0xf] %v2398
  %2499 = vst [vmem:[%s3 + $0xb4] sm:$0xf] %v2399
  %2500 = vst [vmem:[%s3 + $0xb8] sm:$0xf] %v2400
  %2501 = vst [vmem:[%s3 + $0xbc] sm:$0xf] %v2401
  %2502 = vst [vmem:[%s3 + $0xc0] sm:$0xf] %v2402
  %2503 = vst [vmem:[%s3 + $0xc4] sm:$0xf] %v2403
  // Predicated region
  $region14: #{net_forward.3} parent=0 // pred_check
    _
  $region15: #{net_forward.3} parent=0 // pred_check_branch
    %2505 = sbr.rel (0) target = $region17
  $region16: #{net_forward.3} parent=0 // pred_region
    _
  $region17: #{net_forward.3} parent=0 // pred_fallthru
    _
  // Predicated region
  $region18: #{net_forward.3} parent=0 // pred_check
    _
  $region19: #{net_forward.3} parent=0 // pred_check_branch
    %2507 = sbr.rel (0) target = $region21
  $region20: #{net_forward.3} parent=0 // pred_region
    _
  $region21: #{net_forward.3} parent=0 // pred_fallthru
    _

// kernel: net_forward.4
$region0: #{net_forward.4}
  #allocation0 [shape = 'u32[]', space=smem, size = 0x4, offset = 0x4, fixed_abs, tag = 'smem constant byte address 0x4 - core index']
  #allocation1 [shape = 'u32[144,128]{1,0:T(1,128)}', space=vmem, size = 0x12000, scoped, tag = 'internal scratch']
  %s0 = inlined_call_operand.vmem [shape: bf16[4,64,150], index: 0, kind: input, shape index: {}]
  %s1 = inlined_call_operand.vmem [shape: bf16[150,128], index: 1, kind: input, shape index: {}]
  %s2 = inlined_call_operand.vmem [shape: f32[1,128], index: 2, kind: input, shape index: {}]
  %s3 = inlined_call_operand.vmem [shape: bf16[64,128], index: 3, kind: output, shape index: {}]
  %s4 = sld [smem:[#allocation0]]
  $region22: #{net_forward.4} parent=0
    _
  %s6 = ssub.s32 1, %s4
  %s7 = scalar_select 0, %s6, %s4
  // Predicated region
  $region2: #{net_forward.4} parent=0 // pred_check
    _
  $region3: #{net_forward.4} parent=0 // pred_check_branch
    %9 = sbr.rel (0) target = $region5
  $region4: #{net_forward.4} parent=0 // pred_region
    _
  $region5: #{net_forward.4} parent=0 // pred_fallthru
    _
  // Predicated region
  $region6: #{net_forward.4} parent=0 // pred_check
    _
  $region7: #{net_forward.4} parent=0 // pred_check_branch
    %11 = sbr.rel (0) target = $region9
  $region8: #{net_forward.4} parent=0 // pred_region
    _
  $region9: #{net_forward.4} parent=0 // pred_fallthru
    _
  // Predicated region
  $region10: #{net_forward.4} parent=0 // pred_check
    _
  $region11: #{net_forward.4} parent=0 // pred_check_branch
    %13 = sbr.rel (0) target = $region13
  $region12: #{net_forward.4} parent=0 // pred_region
    _
  $region13: #{net_forward.4} parent=0 // pred_fallthru
    _
  %v15 = vld [vmem:[%s1] sm:$0xf]
  %v16 = vld [vmem:[%s1 + $0x4] sm:$0xf]
  %v17 = vld [vmem:[%s1 + $0x8] sm:$0xf]
  %v18 = vld [vmem:[%s1 + $0xc] sm:$0xf]
  %v19 = vld [vmem:[%s1 + $0x10] sm:$0xf]
  %v20 = vld [vmem:[%s1 + $0x14] sm:$0xf]
  %v21 = vld [vmem:[%s1 + $0x18] sm:$0xf]
  %v22 = vld [vmem:[%s1 + $0x1c] sm:$0xf]
  %v23 = vld [vmem:[%s1 + $0x20] sm:$0xf]
  %v24 = vld [vmem:[%s1 + $0x24] sm:$0xf]
  %v25 = vld [vmem:[%s1 + $0x28] sm:$0xf]
  %v26 = vld [vmem:[%s1 + $0x2c] sm:$0xf]
  %v27 = vld [vmem:[%s1 + $0x30] sm:$0xf]
  %v28 = vld [vmem:[%s1 + $0x34] sm:$0xf]
  %v29 = vld [vmem:[%s1 + $0x38] sm:$0xf]
  %v30 = vld [vmem:[%s1 + $0x3c] sm:$0xf]
  %v31 = vld [vmem:[%s1 + $0x40] sm:$0xf]
  %v32 = vld [vmem:[%s1 + $0x44] sm:$0xf]
  %v33 = vld [vmem:[%s1 + $0x48] sm:$0x7]
  %v34 = vld [vmem:[%s0] sm:$0xff]
  %v35 = vld [vmem:[%s0 + $0x8] sm:$0xff]
  %v36 = vld [vmem:[%s0 + $0x10] sm:$0xff]
  %v37 = vld [vmem:[%s0 + $0x18] sm:$0xff]
  %v38 = vld [vmem:[%s0 + $0x20] sm:$0xff]
  %v39 = vld [vmem:[%s0 + $0x28] sm:$0xff]
  %v40 = vld [vmem:[%s0 + $0x30] sm:$0xff]
  %v41 = vld [vmem:[%s0 + $0x38] sm:$0xff]
  %v50 = vunpack.c.l.b16 %v34
  %v51 = vunpack.c.h.b16 %v34
  %v52 = vunpack.c.l.b16 %v35
  %v53 = vunpack.c.h.b16 %v35
  %v54 = vunpack.c.l.b16 %v36
  %v55 = vunpack.c.h.b16 %v36
  %v56 = vunpack.c.l.b16 %v37
  %v57 = vunpack.c.h.b16 %v37
  %v58 = vunpack.c.l.b16 %v38
  %v59 = vunpack.c.h.b16 %v38
  %v60 = vunpack.c.l.b16 %v39
  %v61 = vunpack.c.h.b16 %v39
  %v62 = vunpack.c.l.b16 %v40
  %v63 = vunpack.c.h.b16 %v40
  %v64 = vunpack.c.l.b16 %v41
  %v65 = vunpack.c.h.b16 %v41
  %v66 = vpack.c.b16 %v52, %v50
  %v67 = vpack.c.b16 %v53, %v51
  %v68 = vpack.c.b16 %v56, %v54
  %v69 = vpack.c.b16 %v57, %v55
  %v70 = vpack.c.b16 %v60, %v58
  %v71 = vpack.c.b16 %v61, %v59
  %v72 = vpack.c.b16 %v64, %v62
  %v73 = vpack.c.b16 %v65, %v63
  %v97 = vunpack.c.l.b16 %v15
  %v98 = vunpack.c.l.b16 %v16
  %v99 = vunpack.c.l.b16 %v17
  %v100 = vunpack.c.l.b16 %v18
  %v101 = vunpack.c.l.b16 %v19
  %v102 = vunpack.c.l.b16 %v20
  %v103 = vunpack.c.l.b16 %v21
  %v104 = vunpack.c.l.b16 %v22
  %v105 = vunpack.c.l.b16 %v23
  %v106 = vunpack.c.l.b16 %v24
  %v107 = vunpack.c.l.b16 %v25
  %v108 = vunpack.c.l.b16 %v26
  %v109 = vunpack.c.l.b16 %v27
  %v110 = vunpack.c.l.b16 %v28
  %v111 = vunpack.c.l.b16 %v29
  %v112 = vunpack.c.l.b16 %v30
  %v113 = vunpack.c.l.b16 %v31
  %v114 = vunpack.c.l.b16 %v32
  %v115 = vunpack.c.l.b16 %v33
  %v116 = vpack.c.b16 %v98, %v97
  %v117 = vpack.c.b16 %v100, %v99
  %v118 = vpack.c.b16 %v102, %v101
  %v119 = vpack.c.b16 %v104, %v103
  %v120 = vpack.c.b16 %v106, %v105
  %v121 = vpack.c.b16 %v108, %v107
  %v122 = vpack.c.b16 %v110, %v109
  %v123 = vpack.c.b16 %v112, %v111
  %v124 = vpack.c.b16 %v114, %v113
  %v125 = vpack.c.b16 %v115, %v115
  %vm135 = vcmask 179200
  %v137 = vsel %vm135, %v67, 0
  %v140 = vsel %vm135, %v69, 0
  %v143 = vsel %vm135, %v71, 0
  %v146 = vsel %vm135, %v73, 0
  %vm148 = vcmask 1042432
  %v150 = vsel %vm148, %v125, 0
  %152 = vmatprep.subr.bf16.mxu0 0
  %153 = vmatpush1.bf16.msra.mxu0 %v116
  %154 = vmatprep.subr.bf16.mxu0 0
  %155 = vmatpush1.bf16.msra.mxu0 %v117
  %156 = vmatprep.subr.bf16.mxu0 0
  %157 = vmatpush1.bf16.msra.mxu0 %v118
  %158 = vmatprep.subr.bf16.mxu0 0
  %159 = vmatpush1.bf16.msra.mxu0 %v119
  %160 = vmatprep.subr.bf16.mxu0 0
  %161 = vmatpush1.bf16.msra.mxu0 %v120
  %162 = vmatprep.subr.bf16.mxu0 0
  %163 = vmatpush1.bf16.msra.mxu0 %v121
  %164 = vmatprep.subr.bf16.mxu0 0
  %165 = vmatpush1.bf16.msra.mxu0 %v122
  %166 = vmatprep.subr.bf16.mxu0 0
  %167 = vmatpush1.bf16.msra.mxu0 %v123
  %168 = vmatprep.subr.bf16.mxu0 0
  %169 = vmatpush1.bf16.msra.mxu0 %v124
  %170 = vmatprep.subr.bf16.mxu0 0
  %171 = vmatpush1.bf16.msra.mxu0 %v150
  %172 = vmatprep.subr.bf16.mxu0 0
  %173 = vmatpush1.bf16.msra.mxu0 0
  %174 = vmatprep.subr.bf16.mxu0 0
  %175 = vmatpush1.bf16.msra.mxu0 0
  %176 = vmatprep.subr.bf16.mxu0 0
  %177 = vmatpush1.bf16.msra.mxu0 0
  %178 = vmatprep.subr.bf16.mxu0 0
  %179 = vmatpush1.bf16.msra.mxu0 0
  %180 = vmatprep.subr.bf16.mxu0 0
  %181 = vmatpush1.bf16.msra.mxu0 0
  %182 = vmatprep.subr.bf16.mxu0 0
  %183 = vmatpush1.bf16.msra.mxu0 0
  %184 = vmatprep.mubr.bf16.mxu0 %v137
  %185 = vmatmul.mubr.bf16.gmra.mrb[0].mxu0 %v66
  %v186 = vpop.f32.mrb[0].mxu0
  %v187 = vadd.f32 0.0, %v186
  %v188 = vpop.f32.mrb[0].mxu0
  %v189 = vpop.f32.mrb[0].mxu0
  %v190 = vadd.f32 0.0, %v189
  %v191 = vpop.f32.mrb[0].mxu0
  %192 = vmatprep.mubr.bf16.mxu0 %v140
  %193 = vmatmul.mubr.bf16.gmra.mrb[0].mxu0 %v68
  %v194 = vpop.f32.mrb[0].mxu0
  %v195 = vadd.f32 0.0, %v194
  %v196 = vpop.f32.mrb[0].mxu0
  %v197 = vpop.f32.mrb[0].mxu0
  %v198 = vadd.f32 0.0, %v197
  %v199 = vpop.f32.mrb[0].mxu0
  %200 = vmatprep.mubr.bf16.mxu0 %v143
  %201 = vmatmul.mubr.bf16.gmra.mrb[0].mxu0 %v70
  %v202 = vpop.f32.mrb[0].mxu0
  %v203 = vadd.f32 0.0, %v202
  %v204 = vpop.f32.mrb[0].mxu0
  %v205 = vpop.f32.mrb[0].mxu0
  %v206 = vadd.f32 0.0, %v205
  %v207 = vpop.f32.mrb[0].mxu0
  %208 = vmatprep.mubr.bf16.mxu0 %v146
  %209 = vmatmul.mubr.bf16.gmra.mrb[0].mxu0 %v72
  %v210 = vpop.f32.mrb[0].mxu0
  %v211 = vadd.f32 0.0, %v210
  %v212 = vpop.f32.mrb[0].mxu0
  %v213 = vpop.f32.mrb[0].mxu0
  %v214 = vadd.f32 0.0, %v213
  %v215 = vpop.f32.mrb[0].mxu0
  %216 = vdwg.mxu0
  %s217 = scalar_lea.vmem %s0, 64
  %v218 = vld [vmem:[%s217] sm:$0xff]
  %v219 = vld [vmem:[%s217 + $0x8] sm:$0xff]
  %v220 = vld [vmem:[%s217 + $0x10] sm:$0xff]
  %v221 = vld [vmem:[%s217 + $0x18] sm:$0xff]
  %v222 = vld [vmem:[%s217 + $0x20] sm:$0xff]
  %v223 = vld [vmem:[%s217 + $0x28] sm:$0xff]
  %v224 = vld [vmem:[%s217 + $0x30] sm:$0xff]
  %v225 = vld [vmem:[%s217 + $0x38] sm:$0xff]
  %v234 = vunpack.c.l.b16 %v218
  %v235 = vunpack.c.h.b16 %v218
  %v236 = vunpack.c.l.b16 %v219
  %v237 = vunpack.c.h.b16 %v219
  %v238 = vunpack.c.l.b16 %v220
  %v239 = vunpack.c.h.b16 %v220
  %v240 = vunpack.c.l.b16 %v221
  %v241 = vunpack.c.h.b16 %v221
  %v242 = vunpack.c.l.b16 %v222
  %v243 = vunpack.c.h.b16 %v222
  %v244 = vunpack.c.l.b16 %v223
  %v245 = vunpack.c.h.b16 %v223
  %v246 = vunpack.c.l.b16 %v224
  %v247 = vunpack.c.h.b16 %v224
  %v248 = vunpack.c.l.b16 %v225
  %v249 = vunpack.c.h.b16 %v225
  %v250 = vpack.c.b16 %v236, %v234
  %v251 = vpack.c.b16 %v237, %v235
  %v252 = vpack.c.b16 %v240, %v238
  %v253 = vpack.c.b16 %v241, %v239
  %v254 = vpack.c.b16 %v244, %v242
  %v255 = vpack.c.b16 %v245, %v243
  %v256 = vpack.c.b16 %v248, %v246
  %v257 = vpack.c.b16 %v249, %v247
  %v263 = vsel %vm135, %v251, 0
  %v266 = vsel %vm135, %v253, 0
  %v269 = vsel %vm135, %v255, 0
  %v272 = vsel %vm135, %v257, 0
  %274 = vmatprep.subr.bf16.mxu0 0
  %275 = vmatpush1.bf16.msra.mxu0 %v116
  %276 = vmatprep.subr.bf16.mxu0 0
  %277 = vmatpush1.bf16.msra.mxu0 %v117
  %278 = vmatprep.subr.bf16.mxu0 0
  %279 = vmatpush1.bf16.msra.mxu0 %v118
  %280 = vmatprep.subr.bf16.mxu0 0
  %281 = vmatpush1.bf16.msra.mxu0 %v119
  %282 = vmatprep.subr.bf16.mxu0 0
  %283 = vmatpush1.bf16.msra.mxu0 %v120
  %284 = vmatprep.subr.bf16.mxu0 0
  %285 = vmatpush1.bf16.msra.mxu0 %v121
  %286 = vmatprep.subr.bf16.mxu0 0
  %287 = vmatpush1.bf16.msra.mxu0 %v122
  %288 = vmatprep.subr.bf16.mxu0 0
  %289 = vmatpush1.bf16.msra.mxu0 %v123
  %290 = vmatprep.subr.bf16.mxu0 0
  %291 = vmatpush1.bf16.msra.mxu0 %v124
  %292 = vmatprep.subr.bf16.mxu0 0
  %293 = vmatpush1.bf16.msra.mxu0 %v150
  %294 = vmatprep.subr.bf16.mxu0 0
  %295 = vmatpush1.bf16.msra.mxu0 0
  %296 = vmatprep.subr.bf16.mxu0 0
  %297 = vmatpush1.bf16.msra.mxu0 0
  %298 = vmatprep.subr.bf16.mxu0 0
  %299 = vmatpush1.bf16.msra.mxu0 0
  %300 = vmatprep.subr.bf16.mxu0 0
  %301 = vmatpush1.bf16.msra.mxu0 0
  %302 = vmatprep.subr.bf16.mxu0 0
  %303 = vmatpush1.bf16.msra.mxu0 0
  %304 = vmatprep.subr.bf16.mxu0 0
  %305 = vmatpush1.bf16.msra.mxu0 0
  %306 = vmatprep.mubr.bf16.mxu0 %v263
  %307 = vmatmul.mubr.bf16.gmra.mrb[0].mxu0 %v250
  %v308 = vpop.f32.mrb[0].mxu0
  %v309 = vadd.f32 0.0, %v308
  %v310 = vpop.f32.mrb[0].mxu0
  %v311 = vpop.f32.mrb[0].mxu0
  %v312 = vadd.f32 0.0, %v311
  %v313 = vpop.f32.mrb[0].mxu0
  %314 = vmatprep.mubr.bf16.mxu0 %v266
  %315 = vmatmul.mubr.bf16.gmra.mrb[0].mxu0 %v252
  %v316 = vpop.f32.mrb[0].mxu0
  %v317 = vadd.f32 0.0, %v316
  %v318 = vpop.f32.mrb[0].mxu0
  %v319 = vpop.f32.mrb[0].mxu0
  %v320 = vadd.f32 0.0, %v319
  %v321 = vpop.f32.mrb[0].mxu0
  %322 = vmatprep.mubr.bf16.mxu0 %v269
  %323 = vmatmul.mubr.bf16.gmra.mrb[0].mxu0 %v254
  %v324 = vpop.f32.mrb[0].mxu0
  %v325 = vadd.f32 0.0, %v324
  %v326 = vpop.f32.mrb[0].mxu0
  %v327 = vpop.f32.mrb[0].mxu0
  %v328 = vadd.f32 0.0, %v327
  %v329 = vpop.f32.mrb[0].mxu0
  %330 = vmatprep.mubr.bf16.mxu0 %v272
  %331 = vmatmul.mubr.bf16.gmra.mrb[0].mxu0 %v256
  %v332 = vpop.f32.mrb[0].mxu0
  %v333 = vadd.f32 0.0, %v332
  %v334 = vpop.f32.mrb[0].mxu0
  %v335 = vpop.f32.mrb[0].mxu0
  %v336 = vadd.f32 0.0, %v335
  %v337 = vpop.f32.mrb[0].mxu0
  %338 = vdwg.mxu0
  %v339 = vmax.f32 %v187, %v309
  %v340 = vmax.f32 %v190, %v312
  %v341 = vmax.f32 %v195, %v317
  %v342 = vmax.f32 %v198, %v320
  %v343 = vmax.f32 %v203, %v325
  %v344 = vmax.f32 %v206, %v328
  %v345 = vmax.f32 %v211, %v333
  %v346 = vmax.f32 %v214, %v336
  %s347 = scalar_lea.vmem %s0, 128
  %v348 = vld [vmem:[%s347] sm:$0xff]
  %v349 = vld [vmem:[%s347 + $0x8] sm:$0xff]
  %v350 = vld [vmem:[%s347 + $0x10] sm:$0xff]
  %v351 = vld [vmem:[%s347 + $0x18] sm:$0xff]
  %v352 = vld [vmem:[%s347 + $0x20] sm:$0xff]
  %v353 = vld [vmem:[%s347 + $0x28] sm:$0xff]
  %v354 = vld [vmem:[%s347 + $0x30] sm:$0xff]
  %v355 = vld [vmem:[%s347 + $0x38] sm:$0xff]
  %v364 = vunpack.c.l.b16 %v348
  %v365 = vunpack.c.h.b16 %v348
  %v366 = vunpack.c.l.b16 %v349
  %v367 = vunpack.c.h.b16 %v349
  %v368 = vunpack.c.l.b16 %v350
  %v369 = vunpack.c.h.b16 %v350
  %v370 = vunpack.c.l.b16 %v351
  %v371 = vunpack.c.h.b16 %v351
  %v372 = vunpack.c.l.b16 %v352
  %v373 = vunpack.c.h.b16 %v352
  %v374 = vunpack.c.l.b16 %v353
  %v375 = vunpack.c.h.b16 %v353
  %v376 = vunpack.c.l.b16 %v354
  %v377 = vunpack.c.h.b16 %v354
  %v378 = vunpack.c.l.b16 %v355
  %v379 = vunpack.c.h.b16 %v355
  %v380 = vpack.c.b16 %v366, %v364
  %v381 = vpack.c.b16 %v367, %v365
  %v382 = vpack.c.b16 %v370, %v368
  %v383 = vpack.c.b16 %v371, %v369
  %v384 = vpack.c.b16 %v374, %v372
  %v385 = vpack.c.b16 %v375, %v373
  %v386 = vpack.c.b16 %v378, %v376
  %v387 = vpack.c.b16 %v379, %v377
  %v393 = vsel %vm135, %v381, 0
  %v396 = vsel %vm135, %v383, 0
  %v399 = vsel %vm135, %v385, 0
  %v402 = vsel %vm135, %v387, 0
  %404 = vmatprep.subr.bf16.mxu0 0
  %405 = vmatpush1.bf16.msra.mxu0 %v116
  %406 = vmatprep.subr.bf16.mxu0 0
  %407 = vmatpush1.bf16.msra.mxu0 %v117
  %408 = vmatprep.subr.bf16.mxu0 0
  %409 = vmatpush1.bf16.msra.mxu0 %v118
  %410 = vmatprep.subr.bf16.mxu0 0
  %411 = vmatpush1.bf16.msra.mxu0 %v119
  %412 = vmatprep.subr.bf16.mxu0 0
  %413 = vmatpush1.bf16.msra.mxu0 %v120
  %414 = vmatprep.subr.bf16.mxu0 0
  %415 = vmatpush1.bf16.msra.mxu0 %v121
  %416 = vmatprep.subr.bf16.mxu0 0
  %417 = vmatpush1.bf16.msra.mxu0 %v122
  %418 = vmatprep.subr.bf16.mxu0 0
  %419 = vmatpush1.bf16.msra.mxu0 %v123
  %420 = vmatprep.subr.bf16.mxu0 0
  %421 = vmatpush1.bf16.msra.mxu0 %v124
  %422 = vmatprep.subr.bf16.mxu0 0
  %423 = vmatpush1.bf16.msra.mxu0 %v150
  %424 = vmatprep.subr.bf16.mxu0 0
  %425 = vmatpush1.bf16.msra.mxu0 0
  %426 = vmatprep.subr.bf16.mxu0 0
  %427 = vmatpush1.bf16.msra.mxu0 0
  %428 = vmatprep.subr.bf16.mxu0 0
  %429 = vmatpush1.bf16.msra.mxu0 0
  %430 = vmatprep.subr.bf16.mxu0 0
  %431 = vmatpush1.bf16.msra.mxu0 0
  %432 = vmatprep.subr.bf16.mxu0 0
  %433 = vmatpush1.bf16.msra.mxu0 0
  %434 = vmatprep.subr.bf16.mxu0 0
  %435 = vmatpush1.bf16.msra.mxu0 0
  %436 = vmatprep.mubr.bf16.mxu0 %v393
  %437 = vmatmul.mubr.bf16.gmra.mrb[0].mxu0 %v380
  %v438 = vpop.f32.mrb[0].mxu0
  %v439 = vadd.f32 0.0, %v438
  %v440 = vpop.f32.mrb[0].mxu0
  %v441 = vpop.f32.mrb[0].mxu0
  %v442 = vadd.f32 0.0, %v441
  %v443 = vpop.f32.mrb[0].mxu0
  %444 = vmatprep.mubr.bf16.mxu0 %v396
  %445 = vmatmul.mubr.bf16.gmra.mrb[0].mxu0 %v382
  %v446 = vpop.f32.mrb[0].mxu0
  %v447 = vadd.f32 0.0, %v446
  %v448 = vpop.f32.mrb[0].mxu0
  %v449 = vpop.f32.mrb[0].mxu0
  %v450 = vadd.f32 0.0, %v449
  %v451 = vpop.f32.mrb[0].mxu0
  %452 = vmatprep.mubr.bf16.mxu0 %v399
  %453 = vmatmul.mubr.bf16.gmra.mrb[0].mxu0 %v384
  %v454 = vpop.f32.mrb[0].mxu0
  %v455 = vadd.f32 0.0, %v454
  %v456 = vpop.f32.mrb[0].mxu0
  %v457 = vpop.f32.mrb[0].mxu0
  %v458 = vadd.f32 0.0, %v457
  %v459 = vpop.f32.mrb[0].mxu0
  %460 = vmatprep.mubr.bf16.mxu0 %v402
  %461 = vmatmul.mubr.bf16.gmra.mrb[0].mxu0 %v386
  %v462 = vpop.f32.mrb[0].mxu0
  %v463 = vadd.f32 0.0, %v462
  %v464 = vpop.f32.mrb[0].mxu0
  %v465 = vpop.f32.mrb[0].mxu0
  %v466 = vadd.f32 0.0, %v465
  %v467 = vpop.f32.mrb[0].mxu0
  %468 = vdwg.mxu0
  %v469 = vmax.f32 %v339, %v439
  %v470 = vmax.f32 %v340, %v442
  %v471 = vmax.f32 %v341, %v447
  %v472 = vmax.f32 %v342, %v450
  %v473 = vmax.f32 %v343, %v455
  %v474 = vmax.f32 %v344, %v458
  %v475 = vmax.f32 %v345, %v463
  %v476 = vmax.f32 %v346, %v466
  %s477 = scalar_lea.vmem %s0, 192
  %v478 = vld [vmem:[%s477] sm:$0xff]
  %v479 = vld [vmem:[%s477 + $0x8] sm:$0xff]
  %v480 = vld [vmem:[%s477 + $0x10] sm:$0xff]
  %v481 = vld [vmem:[%s477 + $0x18] sm:$0xff]
  %v482 = vld [vmem:[%s477 + $0x20] sm:$0xff]
  %v483 = vld [vmem:[%s477 + $0x28] sm:$0xff]
  %v484 = vld [vmem:[%s477 + $0x30] sm:$0xff]
  %v485 = vld [vmem:[%s477 + $0x38] sm:$0xff]
  %v494 = vunpack.c.l.b16 %v478
  %v495 = vunpack.c.h.b16 %v478
  %v496 = vunpack.c.l.b16 %v479
  %v497 = vunpack.c.h.b16 %v479
  %v498 = vunpack.c.l.b16 %v480
  %v499 = vunpack.c.h.b16 %v480
  %v500 = vunpack.c.l.b16 %v481
  %v501 = vunpack.c.h.b16 %v481
  %v502 = vunpack.c.l.b16 %v482
  %v503 = vunpack.c.h.b16 %v482
  %v504 = vunpack.c.l.b16 %v483
  %v505 = vunpack.c.h.b16 %v483
  %v506 = vunpack.c.l.b16 %v484
  %v507 = vunpack.c.h.b16 %v484
  %v508 = vunpack.c.l.b16 %v485
  %v509 = vunpack.c.h.b16 %v485
  %v510 = vpack.c.b16 %v496, %v494
  %v511 = vpack.c.b16 %v497, %v495
  %v512 = vpack.c.b16 %v500, %v498
  %v513 = vpack.c.b16 %v501, %v499
  %v514 = vpack.c.b16 %v504, %v502
  %v515 = vpack.c.b16 %v505, %v503
  %v516 = vpack.c.b16 %v508, %v506
  %v517 = vpack.c.b16 %v509, %v507
  %v523 = vsel %vm135, %v511, 0
  %v526 = vsel %vm135, %v513, 0
  %v529 = vsel %vm135, %v515, 0
  %v532 = vsel %vm135, %v517, 0
  %534 = vmatprep.subr.bf16.mxu0 0
  %535 = vmatpush1.bf16.msra.mxu0 %v116
  %536 = vmatprep.subr.bf16.mxu0 0
  %537 = vmatpush1.bf16.msra.mxu0 %v117
  %538 = vmatprep.subr.bf16.mxu0 0
  %539 = vmatpush1.bf16.msra.mxu0 %v118
  %540 = vmatprep.subr.bf16.mxu0 0
  %541 = vmatpush1.bf16.msra.mxu0 %v119
  %542 = vmatprep.subr.bf16.mxu0 0
  %543 = vmatpush1.bf16.msra.mxu0 %v120
  %544 = vmatprep.subr.bf16.mxu0 0
  %545 = vmatpush1.bf16.msra.mxu0 %v121
  %546 = vmatprep.subr.bf16.mxu0 0
  %547 = vmatpush1.bf16.msra.mxu0 %v122
  %548 = vmatprep.subr.bf16.mxu0 0
  %549 = vmatpush1.bf16.msra.mxu0 %v123
  %550 = vmatprep.subr.bf16.mxu0 0
  %551 = vmatpush1.bf16.msra.mxu0 %v124
  %552 = vmatprep.subr.bf16.mxu0 0
  %553 = vmatpush1.bf16.msra.mxu0 %v150
  %554 = vmatprep.subr.bf16.mxu0 0
  %555 = vmatpush1.bf16.msra.mxu0 0
  %556 = vmatprep.subr.bf16.mxu0 0
  %557 = vmatpush1.bf16.msra.mxu0 0
  %558 = vmatprep.subr.bf16.mxu0 0
  %559 = vmatpush1.bf16.msra.mxu0 0
  %560 = vmatprep.subr.bf16.mxu0 0
  %561 = vmatpush1.bf16.msra.mxu0 0
  %562 = vmatprep.subr.bf16.mxu0 0
  %563 = vmatpush1.bf16.msra.mxu0 0
  %564 = vmatprep.subr.bf16.mxu0 0
  %565 = vmatpush1.bf16.msra.mxu0 0
  %566 = vmatprep.mubr.bf16.mxu0 %v523
  %567 = vmatmul.mubr.bf16.gmra.mrb[0].mxu0 %v510
  %v568 = vpop.f32.mrb[0].mxu0
  %v569 = vadd.f32 0.0, %v568
  %v570 = vpop.f32.mrb[0].mxu0
  %v571 = vpop.f32.mrb[0].mxu0
  %v572 = vadd.f32 0.0, %v571
  %v573 = vpop.f32.mrb[0].mxu0
  %574 = vmatprep.mubr.bf16.mxu0 %v526
  %575 = vmatmul.mubr.bf16.gmra.mrb[0].mxu0 %v512
  %v576 = vpop.f32.mrb[0].mxu0
  %v577 = vadd.f32 0.0, %v576
  %v578 = vpop.f32.mrb[0].mxu0
  %v579 = vpop.f32.mrb[0].mxu0
  %v580 = vadd.f32 0.0, %v579
  %v581 = vpop.f32.mrb[0].mxu0
  %582 = vmatprep.mubr.bf16.mxu0 %v529
  %583 = vmatmul.mubr.bf16.gmra.mrb[0].mxu0 %v514
  %v584 = vpop.f32.mrb[0].mxu0
  %v585 = vadd.f32 0.0, %v584
  %v586 = vpop.f32.mrb[0].mxu0
  %v587 = vpop.f32.mrb[0].mxu0
  %v588 = vadd.f32 0.0, %v587
  %v589 = vpop.f32.mrb[0].mxu0
  %590 = vmatprep.mubr.bf16.mxu0 %v532
  %591 = vmatmul.mubr.bf16.gmra.mrb[0].mxu0 %v516
  %v592 = vpop.f32.mrb[0].mxu0
  %v593 = vadd.f32 0.0, %v592
  %v594 = vpop.f32.mrb[0].mxu0
  %v595 = vpop.f32.mrb[0].mxu0
  %v596 = vadd.f32 0.0, %v595
  %v597 = vpop.f32.mrb[0].mxu0
  %598 = vdwg.mxu0
  %v599 = vmax.f32 %v469, %v569
  %v600 = vmax.f32 %v470, %v572
  %v601 = vmax.f32 %v471, %v577
  %v602 = vmax.f32 %v472, %v580
  %v603 = vmax.f32 %v473, %v585
  %v604 = vmax.f32 %v474, %v588
  %v605 = vmax.f32 %v475, %v593
  %v606 = vmax.f32 %v476, %v596
  %v607 = vld [vmem:[%s2] sm:$0x1]
  %v609 = vlaneseq
  %v610 = vshrl.u32 %v609, 7
  %v611 = vsub.s32 0, %v610
  %v612 = vrot.slane %v607, %v611
  %v614 = vadd.f32 %v599, %v612
  %v615 = vadd.f32 %v600, %v612
  %v616 = vadd.f32 %v601, %v612
  %v617 = vadd.f32 %v602, %v612
  %v618 = vadd.f32 %v603, %v612
  %v619 = vadd.f32 %v604, %v612
  %v620 = vadd.f32 %v605, %v612
  %v621 = vadd.f32 %v606, %v612
  %v622 = vmax.f32 %v614, 0.0
  %v623 = vmax.f32 %v615, 0.0
  %v624 = vmax.f32 %v616, 0.0
  %v625 = vmax.f32 %v617, 0.0
  %v626 = vmax.f32 %v618, 0.0
  %v627 = vmax.f32 %v619, 0.0
  %v628 = vmax.f32 %v620, 0.0
  %v629 = vmax.f32 %v621, 0.0
  %v630 = vpack.c.bf16 %v623, %v622
  %v631 = vpack.c.bf16 %v625, %v624
  %v632 = vpack.c.bf16 %v627, %v626
  %v633 = vpack.c.bf16 %v629, %v628
  %v638 = vunpack.c.l.b16 %v630
  %v639 = vunpack.c.h.b16 %v630
  %v640 = vunpack.c.l.b16 %v631
  %v641 = vunpack.c.h.b16 %v631
  %v642 = vunpack.c.l.b16 %v632
  %v643 = vunpack.c.h.b16 %v632
  %v644 = vunpack.c.l.b16 %v633
  %v645 = vunpack.c.h.b16 %v633
  %v646 = vpack.c.b16 %v638, %v638
  %v647 = vpack.c.b16 %v639, %v639
  %v648 = vpack.c.b16 %v640, %v640
  %v649 = vpack.c.b16 %v641, %v641
  %v650 = vpack.c.b16 %v642, %v642
  %v651 = vpack.c.b16 %v643, %v643
  %v652 = vpack.c.b16 %v644, %v644
  %v653 = vpack.c.b16 %v645, %v645
  %662 = vst [vmem:[%s3] sm:$0xf] %v646
  %663 = vst [vmem:[%s3 + $0x4] sm:$0xf] %v647
  %664 = vst [vmem:[%s3 + $0x8] sm:$0xf] %v648
  %665 = vst [vmem:[%s3 + $0xc] sm:$0xf] %v649
  %666 = vst [vmem:[%s3 + $0x10] sm:$0xf] %v650
  %667 = vst [vmem:[%s3 + $0x14] sm:$0xf] %v651
  %668 = vst [vmem:[%s3 + $0x18] sm:$0xf] %v652
  %669 = vst [vmem:[%s3 + $0x1c] sm:$0xf] %v653
  // Predicated region
  $region14: #{net_forward.4} parent=0 // pred_check
    _
  $region15: #{net_forward.4} parent=0 // pred_check_branch
    %671 = sbr.rel (0) target = $region17
  $region16: #{net_forward.4} parent=0 // pred_region
    _
  $region17: #{net_forward.4} parent=0 // pred_fallthru
    _
  // Predicated region
  $region18: #{net_forward.4} parent=0 // pred_check
    _
  $region19: #{net_forward.4} parent=0 // pred_check_branch
    %673 = sbr.rel (0) target = $region21
  $region20: #{net_forward.4} parent=0 // pred_region
    _
  $region21: #{net_forward.4} parent=0 // pred_fallthru
    _

// kernel: net_forward.5
$region0: #{net_forward.5}
  #allocation0 [shape = 'u32[]', space=smem, size = 0x4, offset = 0x4, fixed_abs, tag = 'smem constant byte address 0x4 - core index']
  #allocation1 [shape = 'u32[144,128]{1,0:T(1,128)}', space=vmem, size = 0x12000, scoped, tag = 'internal scratch']
  %s0 = inlined_call_operand.vmem [shape: bf16[16,3200], index: 0, kind: input, shape index: {}]
  %s1 = inlined_call_operand.vmem [shape: bf16[3200,128], index: 1, kind: input, shape index: {}]
  %s2 = inlined_call_operand.vmem [shape: f32[1,128], index: 2, kind: input, shape index: {}]
  %s3 = inlined_call_operand.vmem [shape: bf16[128,128], index: 3, kind: input, shape index: {}]
  %s4 = inlined_call_operand.vmem [shape: f32[1,128], index: 4, kind: input, shape index: {}]
  %s5 = inlined_call_operand.vmem [shape: bf16[128,128], index: 5, kind: input, shape index: {}]
  %s6 = inlined_call_operand.vmem [shape: f32[1,128], index: 6, kind: input, shape index: {}]
  %s7 = inlined_call_operand.vmem [shape: f32[16,128], index: 7, kind: output, shape index: {}]
  %s8 = sld [smem:[#allocation0]]
  $region38: #{net_forward.5} parent=0
    _
  %s10 = ssub.s32 1, %s8
  %s11 = scalar_select 0, %s10, %s8
  // Predicated region
  $region2: #{net_forward.5} parent=0 // pred_check
    _
  $region3: #{net_forward.5} parent=0 // pred_check_branch
    %13 = sbr.rel (0) target = $region5
  $region4: #{net_forward.5} parent=0 // pred_region
    _
  $region5: #{net_forward.5} parent=0 // pred_fallthru
    _
  // Predicated region
  $region6: #{net_forward.5} parent=0 // pred_check
    _
  $region7: #{net_forward.5} parent=0 // pred_check_branch
    %15 = sbr.rel (0) target = $region9
  $region8: #{net_forward.5} parent=0 // pred_region
    _
  $region9: #{net_forward.5} parent=0 // pred_fallthru
    _
  // Predicated region
  $region10: #{net_forward.5} parent=0 // pred_check
    _
  $region11: #{net_forward.5} parent=0 // pred_check_branch
    %17 = sbr.rel (0) target = $region13
  $region12: #{net_forward.5} parent=0 // pred_region
    _
  $region13: #{net_forward.5} parent=0 // pred_fallthru
    _
  // Predicated region
  $region14: #{net_forward.5} parent=0 // pred_check
    _
  $region15: #{net_forward.5} parent=0 // pred_check_branch
    %19 = sbr.rel (0) target = $region17
  $region16: #{net_forward.5} parent=0 // pred_region
    _
  $region17: #{net_forward.5} parent=0 // pred_fallthru
    _
  // Predicated region
  $region18: #{net_forward.5} parent=0 // pred_check
    _
  $region19: #{net_forward.5} parent=0 // pred_check_branch
    %21 = sbr.rel (0) target = $region21
  $region20: #{net_forward.5} parent=0 // pred_region
    _
  $region21: #{net_forward.5} parent=0 // pred_fallthru
    _
  // Predicated region
  $region22: #{net_forward.5} parent=0 // pred_check
    _
  $region23: #{net_forward.5} parent=0 // pred_check_branch
    %23 = sbr.rel (0) target = $region25
  $region24: #{net_forward.5} parent=0 // pred_region
    _
  $region25: #{net_forward.5} parent=0 // pred_fallthru
    _
  // Predicated region
  $region26: #{net_forward.5} parent=0 // pred_check
    _
  $region27: #{net_forward.5} parent=0 // pred_check_branch
    %25 = sbr.rel (0) target = $region29
  $region28: #{net_forward.5} parent=0 // pred_region
    _
  $region29: #{net_forward.5} parent=0 // pred_fallthru
    _
  %v27 = vld [vmem:[%s0] sm:$0xff]
  %v28 = vld [vmem:[%s0 + $0x8] sm:$0xff]
  %v29 = vld [vmem:[%s0 + $0x10] sm:$0xff]
  %v30 = vld [vmem:[%s0 + $0x18] sm:$0xff]
  %v31 = vld [vmem:[%s0 + $0x20] sm:$0xff]
  %v32 = vld [vmem:[%s0 + $0x28] sm:$0xff]
  %v33 = vld [vmem:[%s0 + $0x30] sm:$0xff]
  %v34 = vld [vmem:[%s0 + $0x38] sm:$0xff]
  %v35 = vld [vmem:[%s0 + $0x40] sm:$0xff]
  %v36 = vld [vmem:[%s0 + $0x48] sm:$0xff]
  %v37 = vld [vmem:[%s0 + $0x50] sm:$0xff]
  %v38 = vld [vmem:[%s0 + $0x58] sm:$0xff]
  %v39 = vld [vmem:[%s0 + $0x60] sm:$0xf]
  %v40 = vld [vmem:[%s0 + $0x64] sm:$0xff]
  %v41 = vld [vmem:[%s0 + $0x6c] sm:$0xff]
  %v42 = vld [vmem:[%s0 + $0x74] sm:$0xff]
  %v43 = vld [vmem:[%s0 + $0x7c] sm:$0xff]
  %v44 = vld [vmem:[%s0 + $0x84] sm:$0xff]
  %v45 = vld [vmem:[%s0 + $0x8c] sm:$0xff]
  %v46 = vld [vmem:[%s0 + $0x94] sm:$0xff]
  %v47 = vld [vmem:[%s0 + $0x9c] sm:$0xff]
  %v48 = vld [vmem:[%s0 + $0xa4] sm:$0xff]
  %v49 = vld [vmem:[%s0 + $0xac] sm:$0xff]
  %v50 = vld [vmem:[%s0 + $0xb4] sm:$0xff]
  %v51 = vld [vmem:[%s0 + $0xbc] sm:$0xff]
  %v52 = vld [vmem:[%s0 + $0xc4] sm:$0xf]
  %v53 = vld [vmem:[%s1] sm:$0xf]
  %v54 = vld [vmem:[%s1 + $0x4] sm:$0xf]
  %v55 = vld [vmem:[%s1 + $0x8] sm:$0xf]
  %v56 = vld [vmem:[%s1 + $0xc] sm:$0xf]
  %v57 = vld [vmem:[%s1 + $0x10] sm:$0xf]
  %v58 = vld [vmem:[%s1 + $0x14] sm:$0xf]
  %v59 = vld [vmem:[%s1 + $0x18] sm:$0xf]
  %v60 = vld [vmem:[%s1 + $0x1c] sm:$0xf]
  %v61 = vld [vmem:[%s1 + $0x20] sm:$0xf]
  %v62 = vld [vmem:[%s1 + $0x24] sm:$0xf]
  %v63 = vld [vmem:[%s1 + $0x28] sm:$0xf]
  %v64 = vld [vmem:[%s1 + $0x2c] sm:$0xf]
  %v65 = vld [vmem:[%s1 + $0x30] sm:$0xf]
  %v66 = vld [vmem:[%s1 + $0x34] sm:$0xf]
  %v67 = vld [vmem:[%s1 + $0x38] sm:$0xf]
  %v68 = vld [vmem:[%s1 + $0x3c] sm:$0xf]
  %v69 = vld [vmem:[%s1 + $0x40] sm:$0xf]
  %v70 = vld [vmem:[%s1 + $0x44] sm:$0xf]
  %v71 = vld [vmem:[%s1 + $0x48] sm:$0xf]
  %v72 = vld [vmem:[%s1 + $0x4c] sm:$0xf]
  %v73 = vld [vmem:[%s1 + $0x50] sm:$0xf]
  %v74 = vld [vmem:[%s1 + $0x54] sm:$0xf]
  %v75 = vld [vmem:[%s1 + $0x58] sm:$0xf]
  %v76 = vld [vmem:[%s1 + $0x5c] sm:$0xf]
  %v77 = vld [vmem:[%s1 + $0x60] sm:$0xf]
  %v78 = vld [vmem:[%s1 + $0x64] sm:$0xf]
  %v79 = vld [vmem:[%s1 + $0x68] sm:$0xf]
  %v80 = vld [vmem:[%s1 + $0x6c] sm:$0xf]
  %v81 = vld [vmem:[%s1 + $0x70] sm:$0xf]
  %v82 = vld [vmem:[%s1 + $0x74] sm:$0xf]
  %v83 = vld [vmem:[%s1 + $0x78] sm:$0xf]
  %v84 = vld [vmem:[%s1 + $0x7c] sm:$0xf]
  %v85 = vld [vmem:[%s1 + $0x80] sm:$0xf]
  %v86 = vld [vmem:[%s1 + $0x84] sm:$0xf]
  %v87 = vld [vmem:[%s1 + $0x88] sm:$0xf]
  %v88 = vld [vmem:[%s1 + $0x8c] sm:$0xf]
  %v89 = vld [vmem:[%s1 + $0x90] sm:$0xf]
  %v90 = vld [vmem:[%s1 + $0x94] sm:$0xf]
  %v91 = vld [vmem:[%s1 + $0x98] sm:$0xf]
  %v92 = vld [vmem:[%s1 + $0x9c] sm:$0xf]
  %v93 = vld [vmem:[%s1 + $0xa0] sm:$0xf]
  %v94 = vld [vmem:[%s1 + $0xa4] sm:$0xf]
  %v95 = vld [vmem:[%s1 + $0xa8] sm:$0xf]
  %v96 = vld [vmem:[%s1 + $0xac] sm:$0xf]
  %v97 = vld [vmem:[%s1 + $0xb0] sm:$0xf]
  %v98 = vld [vmem:[%s1 + $0xb4] sm:$0xf]
  %v99 = vld [vmem:[%s1 + $0xb8] sm:$0xf]
  %v100 = vld [vmem:[%s1 + $0xbc] sm:$0xf]
  %v101 = vld [vmem:[%s1 + $0xc0] sm:$0xf]
  %v102 = vld [vmem:[%s1 + $0xc4] sm:$0xf]
  %v103 = vld [vmem:[%s1 + $0xc8] sm:$0xf]
  %v104 = vld [vmem:[%s1 + $0xcc] sm:$0xf]
  %v105 = vld [vmem:[%s1 + $0xd0] sm:$0xf]
  %v106 = vld [vmem:[%s1 + $0xd4] sm:$0xf]
  %v107 = vld [vmem:[%s1 + $0xd8] sm:$0xf]
  %v108 = vld [vmem:[%s1 + $0xdc] sm:$0xf]
  %v109 = vld [vmem:[%s1 + $0xe0] sm:$0xf]
  %v110 = vld [vmem:[%s1 + $0xe4] sm:$0xf]
  %v111 = vld [vmem:[%s1 + $0xe8] sm:$0xf]
  %v112 = vld [vmem:[%s1 + $0xec] sm:$0xf]
  %v113 = vld [vmem:[%s1 + $0xf0] sm:$0xf]
  %v114 = vld [vmem:[%s1 + $0xf4] sm:$0xf]
  %v115 = vld [vmem:[%s1 + $0xf8] sm:$0xf]
  %v116 = vld [vmem:[%s1 + $0xfc] sm:$0xf]
  %v117 = vld [vmem:[%s1 + $0x100] sm:$0xf]
  %v118 = vld [vmem:[%s1 + $0x104] sm:$0xf]
  %v119 = vld [vmem:[%s1 + $0x108] sm:$0xf]
  %v120 = vld [vmem:[%s1 + $0x10c] sm:$0xf]
  %v121 = vld [vmem:[%s1 + $0x110] sm:$0xf]
  %v122 = vld [vmem:[%s1 + $0x114] sm:$0xf]
  %v123 = vld [vmem:[%s1 + $0x118] sm:$0xf]
  %v124 = vld [vmem:[%s1 + $0x11c] sm:$0xf]
  %v125 = vld [vmem:[%s1 + $0x120] sm:$0xf]
  %v126 = vld [vmem:[%s1 + $0x124] sm:$0xf]
  %v127 = vld [vmem:[%s1 + $0x128] sm:$0xf]
  %v128 = vld [vmem:[%s1 + $0x12c] sm:$0xf]
  %v129 = vld [vmem:[%s1 + $0x130] sm:$0xf]
  %v130 = vld [vmem:[%s1 + $0x134] sm:$0xf]
  %v131 = vld [vmem:[%s1 + $0x138] sm:$0xf]
  %v132 = vld [vmem:[%s1 + $0x13c] sm:$0xf]
  %v133 = vld [vmem:[%s1 + $0x140] sm:$0xf]
  %v134 = vld [vmem:[%s1 + $0x144] sm:$0xf]
  %v135 = vld [vmem:[%s1 + $0x148] sm:$0xf]
  %v136 = vld [vmem:[%s1 + $0x14c] sm:$0xf]
  %v137 = vld [vmem:[%s1 + $0x150] sm:$0xf]
  %v138 = vld [vmem:[%s1 + $0x154] sm:$0xf]
  %v139 = vld [vmem:[%s1 + $0x158] sm:$0xf]
  %v140 = vld [vmem:[%s1 + $0x15c] sm:$0xf]
  %v141 = vld [vmem:[%s1 + $0x160] sm:$0xf]
  %v142 = vld [vmem:[%s1 + $0x164] sm:$0xf]
  %v143 = vld [vmem:[%s1 + $0x168] sm:$0xf]
  %v144 = vld [vmem:[%s1 + $0x16c] sm:$0xf]
  %v145 = vld [vmem:[%s1 + $0x170] sm:$0xf]
  %v146 = vld [vmem:[%s1 + $0x174] sm:$0xf]
  %v147 = vld [vmem:[%s1 + $0x178] sm:$0xf]
  %v148 = vld [vmem:[%s1 + $0x17c] sm:$0xf]
  %v149 = vld [vmem:[%s1 + $0x180] sm:$0xf]
  %v150 = vld [vmem:[%s1 + $0x184] sm:$0xf]
  %v151 = vld [vmem:[%s1 + $0x188] sm:$0xf]
  %v152 = vld [vmem:[%s1 + $0x18c] sm:$0xf]
  %v153 = vld [vmem:[%s1 + $0x190] sm:$0xf]
  %v154 = vld [vmem:[%s1 + $0x194] sm:$0xf]
  %v155 = vld [vmem:[%s1 + $0x198] sm:$0xf]
  %v156 = vld [vmem:[%s1 + $0x19c] sm:$0xf]
  %v157 = vld [vmem:[%s1 + $0x1a0] sm:$0xf]
  %v158 = vld [vmem:[%s1 + $0x1a4] sm:$0xf]
  %v159 = vld [vmem:[%s1 + $0x1a8] sm:$0xf]
  %v160 = vld [vmem:[%s1 + $0x1ac] sm:$0xf]
  %v161 = vld [vmem:[%s1 + $0x1b0] sm:$0xf]
  %v162 = vld [vmem:[%s1 + $0x1b4] sm:$0xf]
  %v163 = vld [vmem:[%s1 + $0x1b8] sm:$0xf]
  %v164 = vld [vmem:[%s1 + $0x1bc] sm:$0xf]
  %v165 = vld [vmem:[%s1 + $0x1c0] sm:$0xf]
  %v166 = vld [vmem:[%s1 + $0x1c4] sm:$0xf]
  %v167 = vld [vmem:[%s1 + $0x1c8] sm:$0xf]
  %v168 = vld [vmem:[%s1 + $0x1cc] sm:$0xf]
  %v169 = vld [vmem:[%s1 + $0x1d0] sm:$0xf]
  %v170 = vld [vmem:[%s1 + $0x1d4] sm:$0xf]
  %v171 = vld [vmem:[%s1 + $0x1d8] sm:$0xf]
  %v172 = vld [vmem:[%s1 + $0x1dc] sm:$0xf]
  %v173 = vld [vmem:[%s1 + $0x1e0] sm:$0xf]
  %v174 = vld [vmem:[%s1 + $0x1e4] sm:$0xf]
  %v175 = vld [vmem:[%s1 + $0x1e8] sm:$0xf]
  %v176 = vld [vmem:[%s1 + $0x1ec] sm:$0xf]
  %v177 = vld [vmem:[%s1 + $0x1f0] sm:$0xf]
  %v178 = vld [vmem:[%s1 + $0x1f4] sm:$0xf]
  %v179 = vld [vmem:[%s1 + $0x1f8] sm:$0xf]
  %v180 = vld [vmem:[%s1 + $0x1fc] sm:$0xf]
  %v181 = vld [vmem:[%s1 + $0x200] sm:$0xf]
  %v182 = vld [vmem:[%s1 + $0x204] sm:$0xf]
  %v183 = vld [vmem:[%s1 + $0x208] sm:$0xf]
  %v184 = vld [vmem:[%s1 + $0x20c] sm:$0xf]
  %v185 = vld [vmem:[%s1 + $0x210] sm:$0xf]
  %v186 = vld [vmem:[%s1 + $0x214] sm:$0xf]
  %v187 = vld [vmem:[%s1 + $0x218] sm:$0xf]
  %v188 = vld [vmem:[%s1 + $0x21c] sm:$0xf]
  %v189 = vld [vmem:[%s1 + $0x220] sm:$0xf]
  %v190 = vld [vmem:[%s1 + $0x224] sm:$0xf]
  %v191 = vld [vmem:[%s1 + $0x228] sm:$0xf]
  %v192 = vld [vmem:[%s1 + $0x22c] sm:$0xf]
  %v193 = vld [vmem:[%s1 + $0x230] sm:$0xf]
  %v194 = vld [vmem:[%s1 + $0x234] sm:$0xf]
  %v195 = vld [vmem:[%s1 + $0x238] sm:$0xf]
  %v196 = vld [vmem:[%s1 + $0x23c] sm:$0xf]
  %v197 = vld [vmem:[%s1 + $0x240] sm:$0xf]
  %v198 = vld [vmem:[%s1 + $0x244] sm:$0xf]
  %v199 = vld [vmem:[%s1 + $0x248] sm:$0xf]
  %v200 = vld [vmem:[%s1 + $0x24c] sm:$0xf]
  %v201 = vld [vmem:[%s1 + $0x250] sm:$0xf]
  %v202 = vld [vmem:[%s1 + $0x254] sm:$0xf]
  %v203 = vld [vmem:[%s1 + $0x258] sm:$0xf]
  %v204 = vld [vmem:[%s1 + $0x25c] sm:$0xf]
  %v205 = vld [vmem:[%s1 + $0x260] sm:$0xf]
  %v206 = vld [vmem:[%s1 + $0x264] sm:$0xf]
  %v207 = vld [vmem:[%s1 + $0x268] sm:$0xf]
  %v208 = vld [vmem:[%s1 + $0x26c] sm:$0xf]
  %v209 = vld [vmem:[%s1 + $0x270] sm:$0xf]
  %v210 = vld [vmem:[%s1 + $0x274] sm:$0xf]
  %v211 = vld [vmem:[%s1 + $0x278] sm:$0xf]
  %v212 = vld [vmem:[%s1 + $0x27c] sm:$0xf]
  %v213 = vld [vmem:[%s1 + $0x280] sm:$0xf]
  %v214 = vld [vmem:[%s1 + $0x284] sm:$0xf]
  %v215 = vld [vmem:[%s1 + $0x288] sm:$0xf]
  %v216 = vld [vmem:[%s1 + $0x28c] sm:$0xf]
  %v217 = vld [vmem:[%s1 + $0x290] sm:$0xf]
  %v218 = vld [vmem:[%s1 + $0x294] sm:$0xf]
  %v219 = vld [vmem:[%s1 + $0x298] sm:$0xf]
  %v220 = vld [vmem:[%s1 + $0x29c] sm:$0xf]
  %v221 = vld [vmem:[%s1 + $0x2a0] sm:$0xf]
  %v222 = vld [vmem:[%s1 + $0x2a4] sm:$0xf]
  %v223 = vld [vmem:[%s1 + $0x2a8] sm:$0xf]
  %v224 = vld [vmem:[%s1 + $0x2ac] sm:$0xf]
  %v225 = vld [vmem:[%s1 + $0x2b0] sm:$0xf]
  %v226 = vld [vmem:[%s1 + $0x2b4] sm:$0xf]
  %v227 = vld [vmem:[%s1 + $0x2b8] sm:$0xf]
  %v228 = vld [vmem:[%s1 + $0x2bc] sm:$0xf]
  %v229 = vld [vmem:[%s1 + $0x2c0] sm:$0xf]
  %v230 = vld [vmem:[%s1 + $0x2c4] sm:$0xf]
  %v231 = vld [vmem:[%s1 + $0x2c8] sm:$0xf]
  %v232 = vld [vmem:[%s1 + $0x2cc] sm:$0xf]
  %v233 = vld [vmem:[%s1 + $0x2d0] sm:$0xf]
  %v234 = vld [vmem:[%s1 + $0x2d4] sm:$0xf]
  %v235 = vld [vmem:[%s1 + $0x2d8] sm:$0xf]
  %v236 = vld [vmem:[%s1 + $0x2dc] sm:$0xf]
  %v237 = vld [vmem:[%s1 + $0x2e0] sm:$0xf]
  %v238 = vld [vmem:[%s1 + $0x2e4] sm:$0xf]
  %v239 = vld [vmem:[%s1 + $0x2e8] sm:$0xf]
  %v240 = vld [vmem:[%s1 + $0x2ec] sm:$0xf]
  %v241 = vld [vmem:[%s1 + $0x2f0] sm:$0xf]
  %v242 = vld [vmem:[%s1 + $0x2f4] sm:$0xf]
  %v243 = vld [vmem:[%s1 + $0x2f8] sm:$0xf]
  %v244 = vld [vmem:[%s1 + $0x2fc] sm:$0xf]
  %v245 = vld [vmem:[%s1 + $0x300] sm:$0xf]
  %v246 = vld [vmem:[%s1 + $0x304] sm:$0xf]
  %v247 = vld [vmem:[%s1 + $0x308] sm:$0xf]
  %v248 = vld [vmem:[%s1 + $0x30c] sm:$0xf]
  %v249 = vld [vmem:[%s1 + $0x310] sm:$0xf]
  %v250 = vld [vmem:[%s1 + $0x314] sm:$0xf]
  %v251 = vld [vmem:[%s1 + $0x318] sm:$0xf]
  %v252 = vld [vmem:[%s1 + $0x31c] sm:$0xf]
  %v253 = vld [vmem:[%s1 + $0x320] sm:$0xf]
  %v254 = vld [vmem:[%s1 + $0x324] sm:$0xf]
  %v255 = vld [vmem:[%s1 + $0x328] sm:$0xf]
  %v256 = vld [vmem:[%s1 + $0x32c] sm:$0xf]
  %v257 = vld [vmem:[%s1 + $0x330] sm:$0xf]
  %v258 = vld [vmem:[%s1 + $0x334] sm:$0xf]
  %v259 = vld [vmem:[%s1 + $0x338] sm:$0xf]
  %v260 = vld [vmem:[%s1 + $0x33c] sm:$0xf]
  %v261 = vld [vmem:[%s1 + $0x340] sm:$0xf]
  %v262 = vld [vmem:[%s1 + $0x344] sm:$0xf]
  %v263 = vld [vmem:[%s1 + $0x348] sm:$0xf]
  %v264 = vld [vmem:[%s1 + $0x34c] sm:$0xf]
  %v265 = vld [vmem:[%s1 + $0x350] sm:$0xf]
  %v266 = vld [vmem:[%s1 + $0x354] sm:$0xf]
  %v267 = vld [vmem:[%s1 + $0x358] sm:$0xf]
  %v268 = vld [vmem:[%s1 + $0x35c] sm:$0xf]
  %v269 = vld [vmem:[%s1 + $0x360] sm:$0xf]
  %v270 = vld [vmem:[%s1 + $0x364] sm:$0xf]
  %v271 = vld [vmem:[%s1 + $0x368] sm:$0xf]
  %v272 = vld [vmem:[%s1 + $0x36c] sm:$0xf]
  %v273 = vld [vmem:[%s1 + $0x370] sm:$0xf]
  %v274 = vld [vmem:[%s1 + $0x374] sm:$0xf]
  %v275 = vld [vmem:[%s1 + $0x378] sm:$0xf]
  %v276 = vld [vmem:[%s1 + $0x37c] sm:$0xf]
  %v277 = vld [vmem:[%s1 + $0x380] sm:$0xf]
  %v278 = vld [vmem:[%s1 + $0x384] sm:$0xf]
  %v279 = vld [vmem:[%s1 + $0x388] sm:$0xf]
  %v280 = vld [vmem:[%s1 + $0x38c] sm:$0xf]
  %v281 = vld [vmem:[%s1 + $0x390] sm:$0xf]
  %v282 = vld [vmem:[%s1 + $0x394] sm:$0xf]
  %v283 = vld [vmem:[%s1 + $0x398] sm:$0xf]
  %v284 = vld [vmem:[%s1 + $0x39c] sm:$0xf]
  %v285 = vld [vmem:[%s1 + $0x3a0] sm:$0xf]
  %v286 = vld [vmem:[%s1 + $0x3a4] sm:$0xf]
  %v287 = vld [vmem:[%s1 + $0x3a8] sm:$0xf]
  %v288 = vld [vmem:[%s1 + $0x3ac] sm:$0xf]
  %v289 = vld [vmem:[%s1 + $0x3b0] sm:$0xf]
  %v290 = vld [vmem:[%s1 + $0x3b4] sm:$0xf]
  %v291 = vld [vmem:[%s1 + $0x3b8] sm:$0xf]
  %v292 = vld [vmem:[%s1 + $0x3bc] sm:$0xf]
  %v293 = vld [vmem:[%s1 + $0x3c0] sm:$0xf]
  %v294 = vld [vmem:[%s1 + $0x3c4] sm:$0xf]
  %v295 = vld [vmem:[%s1 + $0x3c8] sm:$0xf]
  %v296 = vld [vmem:[%s1 + $0x3cc] sm:$0xf]
  %v297 = vld [vmem:[%s1 + $0x3d0] sm:$0xf]
  %v298 = vld [vmem:[%s1 + $0x3d4] sm:$0xf]
  %v299 = vld [vmem:[%s1 + $0x3d8] sm:$0xf]
  %v300 = vld [vmem:[%s1 + $0x3dc] sm:$0xf]
  %v301 = vld [vmem:[%s1 + $0x3e0] sm:$0xf]
  %v302 = vld [vmem:[%s1 + $0x3e4] sm:$0xf]
  %v303 = vld [vmem:[%s1 + $0x3e8] sm:$0xf]
  %v304 = vld [vmem:[%s1 + $0x3ec] sm:$0xf]
  %v305 = vld [vmem:[%s1 + $0x3f0] sm:$0xf]
  %v306 = vld [vmem:[%s1 + $0x3f4] sm:$0xf]
  %v307 = vld [vmem:[%s1 + $0x3f8] sm:$0xf]
  %v308 = vld [vmem:[%s1 + $0x3fc] sm:$0xf]
  %v309 = vld [vmem:[%s1 + $0x400] sm:$0xf]
  %v310 = vld [vmem:[%s1 + $0x404] sm:$0xf]
  %v311 = vld [vmem:[%s1 + $0x408] sm:$0xf]
  %v312 = vld [vmem:[%s1 + $0x40c] sm:$0xf]
  %v313 = vld [vmem:[%s1 + $0x410] sm:$0xf]
  %v314 = vld [vmem:[%s1 + $0x414] sm:$0xf]
  %v315 = vld [vmem:[%s1 + $0x418] sm:$0xf]
  %v316 = vld [vmem:[%s1 + $0x41c] sm:$0xf]
  %v317 = vld [vmem:[%s1 + $0x420] sm:$0xf]
  %v318 = vld [vmem:[%s1 + $0x424] sm:$0xf]
  %v319 = vld [vmem:[%s1 + $0x428] sm:$0xf]
  %v320 = vld [vmem:[%s1 + $0x42c] sm:$0xf]
  %v321 = vld [vmem:[%s1 + $0x430] sm:$0xf]
  %v322 = vld [vmem:[%s1 + $0x434] sm:$0xf]
  %v323 = vld [vmem:[%s1 + $0x438] sm:$0xf]
  %v324 = vld [vmem:[%s1 + $0x43c] sm:$0xf]
  %v325 = vld [vmem:[%s1 + $0x440] sm:$0xf]
  %v326 = vld [vmem:[%s1 + $0x444] sm:$0xf]
  %v327 = vld [vmem:[%s1 + $0x448] sm:$0xf]
  %v328 = vld [vmem:[%s1 + $0x44c] sm:$0xf]
  %v329 = vld [vmem:[%s1 + $0x450] sm:$0xf]
  %v330 = vld [vmem:[%s1 + $0x454] sm:$0xf]
  %v331 = vld [vmem:[%s1 + $0x458] sm:$0xf]
  %v332 = vld [vmem:[%s1 + $0x45c] sm:$0xf]
  %v333 = vld [vmem:[%s1 + $0x460] sm:$0xf]
  %v334 = vld [vmem:[%s1 + $0x464] sm:$0xf]
  %v335 = vld [vmem:[%s1 + $0x468] sm:$0xf]
  %v336 = vld [vmem:[%s1 + $0x46c] sm:$0xf]
  %v337 = vld [vmem:[%s1 + $0x470] sm:$0xf]
  %v338 = vld [vmem:[%s1 + $0x474] sm:$0xf]
  %v339 = vld [vmem:[%s1 + $0x478] sm:$0xf]
  %v340 = vld [vmem:[%s1 + $0x47c] sm:$0xf]
  %v341 = vld [vmem:[%s1 + $0x480] sm:$0xf]
  %v342 = vld [vmem:[%s1 + $0x484] sm:$0xf]
  %v343 = vld [vmem:[%s1 + $0x488] sm:$0xf]
  %v344 = vld [vmem:[%s1 + $0x48c] sm:$0xf]
  %v345 = vld [vmem:[%s1 + $0x490] sm:$0xf]
  %v346 = vld [vmem:[%s1 + $0x494] sm:$0xf]
  %v347 = vld [vmem:[%s1 + $0x498] sm:$0xf]
  %v348 = vld [vmem:[%s1 + $0x49c] sm:$0xf]
  %v349 = vld [vmem:[%s1 + $0x4a0] sm:$0xf]
  %v350 = vld [vmem:[%s1 + $0x4a4] sm:$0xf]
  %v351 = vld [vmem:[%s1 + $0x4a8] sm:$0xf]
  %v352 = vld [vmem:[%s1 + $0x4ac] sm:$0xf]
  %v353 = vld [vmem:[%s1 + $0x4b0] sm:$0xf]
  %v354 = vld [vmem:[%s1 + $0x4b4] sm:$0xf]
  %v355 = vld [vmem:[%s1 + $0x4b8] sm:$0xf]
  %v356 = vld [vmem:[%s1 + $0x4bc] sm:$0xf]
  %v357 = vld [vmem:[%s1 + $0x4c0] sm:$0xf]
  %v358 = vld [vmem:[%s1 + $0x4c4] sm:$0xf]
  %v359 = vld [vmem:[%s1 + $0x4c8] sm:$0xf]
  %v360 = vld [vmem:[%s1 + $0x4cc] sm:$0xf]
  %v361 = vld [vmem:[%s1 + $0x4d0] sm:$0xf]
  %v362 = vld [vmem:[%s1 + $0x4d4] sm:$0xf]
  %v363 = vld [vmem:[%s1 + $0x4d8] sm:$0xf]
  %v364 = vld [vmem:[%s1 + $0x4dc] sm:$0xf]
  %v365 = vld [vmem:[%s1 + $0x4e0] sm:$0xf]
  %v366 = vld [vmem:[%s1 + $0x4e4] sm:$0xf]
  %v367 = vld [vmem:[%s1 + $0x4e8] sm:$0xf]
  %v368 = vld [vmem:[%s1 + $0x4ec] sm:$0xf]
  %v369 = vld [vmem:[%s1 + $0x4f0] sm:$0xf]
  %v370 = vld [vmem:[%s1 + $0x4f4] sm:$0xf]
  %v371 = vld [vmem:[%s1 + $0x4f8] sm:$0xf]
  %v372 = vld [vmem:[%s1 + $0x4fc] sm:$0xf]
  %v373 = vld [vmem:[%s1 + $0x500] sm:$0xf]
  %v374 = vld [vmem:[%s1 + $0x504] sm:$0xf]
  %v375 = vld [vmem:[%s1 + $0x508] sm:$0xf]
  %v376 = vld [vmem:[%s1 + $0x50c] sm:$0xf]
  %v377 = vld [vmem:[%s1 + $0x510] sm:$0xf]
  %v378 = vld [vmem:[%s1 + $0x514] sm:$0xf]
  %v379 = vld [vmem:[%s1 + $0x518] sm:$0xf]
  %v380 = vld [vmem:[%s1 + $0x51c] sm:$0xf]
  %v381 = vld [vmem:[%s1 + $0x520] sm:$0xf]
  %v382 = vld [vmem:[%s1 + $0x524] sm:$0xf]
  %v383 = vld [vmem:[%s1 + $0x528] sm:$0xf]
  %v384 = vld [vmem:[%s1 + $0x52c] sm:$0xf]
  %v385 = vld [vmem:[%s1 + $0x530] sm:$0xf]
  %v386 = vld [vmem:[%s1 + $0x534] sm:$0xf]
  %v387 = vld [vmem:[%s1 + $0x538] sm:$0xf]
  %v388 = vld [vmem:[%s1 + $0x53c] sm:$0xf]
  %v389 = vld [vmem:[%s1 + $0x540] sm:$0xf]
  %v390 = vld [vmem:[%s1 + $0x544] sm:$0xf]
  %v391 = vld [vmem:[%s1 + $0x548] sm:$0xf]
  %v392 = vld [vmem:[%s1 + $0x54c] sm:$0xf]
  %v393 = vld [vmem:[%s1 + $0x550] sm:$0xf]
  %v394 = vld [vmem:[%s1 + $0x554] sm:$0xf]
  %v395 = vld [vmem:[%s1 + $0x558] sm:$0xf]
  %v396 = vld [vmem:[%s1 + $0x55c] sm:$0xf]
  %v397 = vld [vmem:[%s1 + $0x560] sm:$0xf]
  %v398 = vld [vmem:[%s1 + $0x564] sm:$0xf]
  %v399 = vld [vmem:[%s1 + $0x568] sm:$0xf]
  %v400 = vld [vmem:[%s1 + $0x56c] sm:$0xf]
  %v401 = vld [vmem:[%s1 + $0x570] sm:$0xf]
  %v402 = vld [vmem:[%s1 + $0x574] sm:$0xf]
  %v403 = vld [vmem:[%s1 + $0x578] sm:$0xf]
  %v404 = vld [vmem:[%s1 + $0x57c] sm:$0xf]
  %v405 = vld [vmem:[%s1 + $0x580] sm:$0xf]
  %v406 = vld [vmem:[%s1 + $0x584] sm:$0xf]
  %v407 = vld [vmem:[%s1 + $0x588] sm:$0xf]
  %v408 = vld [vmem:[%s1 + $0x58c] sm:$0xf]
  %v409 = vld [vmem:[%s1 + $0x590] sm:$0xf]
  %v410 = vld [vmem:[%s1 + $0x594] sm:$0xf]
  %v411 = vld [vmem:[%s1 + $0x598] sm:$0xf]
  %v412 = vld [vmem:[%s1 + $0x59c] sm:$0xf]
  %v413 = vld [vmem:[%s1 + $0x5a0] sm:$0xf]
  %v414 = vld [vmem:[%s1 + $0x5a4] sm:$0xf]
  %v415 = vld [vmem:[%s1 + $0x5a8] sm:$0xf]
  %v416 = vld [vmem:[%s1 + $0x5ac] sm:$0xf]
  %v417 = vld [vmem:[%s1 + $0x5b0] sm:$0xf]
  %v418 = vld [vmem:[%s1 + $0x5b4] sm:$0xf]
  %v419 = vld [vmem:[%s1 + $0x5b8] sm:$0xf]
  %v420 = vld [vmem:[%s1 + $0x5bc] sm:$0xf]
  %v421 = vld [vmem:[%s1 + $0x5c0] sm:$0xf]
  %v422 = vld [vmem:[%s1 + $0x5c4] sm:$0xf]
  %v423 = vld [vmem:[%s1 + $0x5c8] sm:$0xf]
  %v424 = vld [vmem:[%s1 + $0x5cc] sm:$0xf]
  %v425 = vld [vmem:[%s1 + $0x5d0] sm:$0xf]
  %v426 = vld [vmem:[%s1 + $0x5d4] sm:$0xf]
  %v427 = vld [vmem:[%s1 + $0x5d8] sm:$0xf]
  %v428 = vld [vmem:[%s1 + $0x5dc] sm:$0xf]
  %v429 = vld [vmem:[%s1 + $0x5e0] sm:$0xf]
  %v430 = vld [vmem:[%s1 + $0x5e4] sm:$0xf]
  %v431 = vld [vmem:[%s1 + $0x5e8] sm:$0xf]
  %v432 = vld [vmem:[%s1 + $0x5ec] sm:$0xf]
  %v433 = vld [vmem:[%s1 + $0x5f0] sm:$0xf]
  %v434 = vld [vmem:[%s1 + $0x5f4] sm:$0xf]
  %v435 = vld [vmem:[%s1 + $0x5f8] sm:$0xf]
  %v436 = vld [vmem:[%s1 + $0x5fc] sm:$0xf]
  %v437 = vld [vmem:[%s1 + $0x600] sm:$0xf]
  %v438 = vld [vmem:[%s1 + $0x604] sm:$0xf]
  %v439 = vld [vmem:[%s1 + $0x608] sm:$0xf]
  %v440 = vld [vmem:[%s1 + $0x60c] sm:$0xf]
  %v441 = vld [vmem:[%s1 + $0x610] sm:$0xf]
  %v442 = vld [vmem:[%s1 + $0x614] sm:$0xf]
  %v443 = vld [vmem:[%s1 + $0x618] sm:$0xf]
  %v444 = vld [vmem:[%s1 + $0x61c] sm:$0xf]
  %v445 = vld [vmem:[%s1 + $0x620] sm:$0xf]
  %v446 = vld [vmem:[%s1 + $0x624] sm:$0xf]
  %v447 = vld [vmem:[%s1 + $0x628] sm:$0xf]
  %v448 = vld [vmem:[%s1 + $0x62c] sm:$0xf]
  %v449 = vld [vmem:[%s1 + $0x630] sm:$0xf]
  %v450 = vld [vmem:[%s1 + $0x634] sm:$0xf]
  %v451 = vld [vmem:[%s1 + $0x638] sm:$0xf]
  %v452 = vld [vmem:[%s1 + $0x63c] sm:$0xf]
  %v453 = vld [vmem:[%s2] sm:$0x1]
  %v455 = vlaneseq
  %v456 = vshrl.u32 %v455, 7
  %v457 = vsub.s32 0, %v456
  %v458 = vrot.slane %v453, %v457
  %v486 = vunpack.c.l.b16 %v27
  %v487 = vunpack.c.h.b16 %v27
  %v488 = vunpack.c.l.b16 %v28
  %v489 = vunpack.c.h.b16 %v28
  %v490 = vunpack.c.l.b16 %v29
  %v491 = vunpack.c.h.b16 %v29
  %v492 = vunpack.c.l.b16 %v30
  %v493 = vunpack.c.h.b16 %v30
  %v494 = vunpack.c.l.b16 %v31
  %v495 = vunpack.c.h.b16 %v31
  %v496 = vunpack.c.l.b16 %v32
  %v497 = vunpack.c.h.b16 %v32
  %v498 = vunpack.c.l.b16 %v33
  %v499 = vunpack.c.h.b16 %v33
  %v500 = vunpack.c.l.b16 %v34
  %v501 = vunpack.c.h.b16 %v34
  %v502 = vunpack.c.l.b16 %v35
  %v503 = vunpack.c.h.b16 %v35
  %v504 = vunpack.c.l.b16 %v36
  %v505 = vunpack.c.h.b16 %v36
  %v506 = vunpack.c.l.b16 %v37
  %v507 = vunpack.c.h.b16 %v37
  %v508 = vunpack.c.l.b16 %v38
  %v509 = vunpack.c.h.b16 %v38
  %v510 = vunpack.c.l.b16 %v39
  %v511 = vunpack.c.l.b16 %v40
  %v512 = vunpack.c.h.b16 %v40
  %v513 = vunpack.c.l.b16 %v41
  %v514 = vunpack.c.h.b16 %v41
  %v515 = vunpack.c.l.b16 %v42
  %v516 = vunpack.c.h.b16 %v42
  %v517 = vunpack.c.l.b16 %v43
  %v518 = vunpack.c.h.b16 %v43
  %v519 = vunpack.c.l.b16 %v44
  %v520 = vunpack.c.h.b16 %v44
  %v521 = vunpack.c.l.b16 %v45
  %v522 = vunpack.c.h.b16 %v45
  %v523 = vunpack.c.l.b16 %v46
  %v524 = vunpack.c.h.b16 %v46
  %v525 = vunpack.c.l.b16 %v47
  %v526 = vunpack.c.h.b16 %v47
  %v527 = vunpack.c.l.b16 %v48
  %v528 = vunpack.c.h.b16 %v48
  %v529 = vunpack.c.l.b16 %v49
  %v530 = vunpack.c.h.b16 %v49
  %v531 = vunpack.c.l.b16 %v50
  %v532 = vunpack.c.h.b16 %v50
  %v533 = vunpack.c.l.b16 %v51
  %v534 = vunpack.c.h.b16 %v51
  %v535 = vunpack.c.l.b16 %v52
  %v536 = vpack.c.b16 %v511, %v486
  %v537 = vpack.c.b16 %v512, %v487
  %v538 = vpack.c.b16 %v513, %v488
  %v539 = vpack.c.b16 %v514, %v489
  %v540 = vpack.c.b16 %v515, %v490
  %v541 = vpack.c.b16 %v516, %v491
  %v542 = vpack.c.b16 %v517, %v492
  %v543 = vpack.c.b16 %v518, %v493
  %v544 = vpack.c.b16 %v519, %v494
  %v545 = vpack.c.b16 %v520, %v495
  %v546 = vpack.c.b16 %v521, %v496
  %v547 = vpack.c.b16 %v522, %v497
  %v548 = vpack.c.b16 %v523, %v498
  %v549 = vpack.c.b16 %v524, %v499
  %v550 = vpack.c.b16 %v525, %v500
  %v551 = vpack.c.b16 %v526, %v501
  %v552 = vpack.c.b16 %v527, %v502
  %v553 = vpack.c.b16 %v528, %v503
  %v554 = vpack.c.b16 %v529, %v504
  %v555 = vpack.c.b16 %v530, %v505
  %v556 = vpack.c.b16 %v531, %v506
  %v557 = vpack.c.b16 %v532, %v507
  %v558 = vpack.c.b16 %v533, %v508
  %v559 = vpack.c.b16 %v534, %v509
  %v560 = vpack.c.b16 %v535, %v510
  %v986 = vunpack.c.l.b16 %v53
  %v987 = vunpack.c.l.b16 %v54
  %v988 = vunpack.c.l.b16 %v55
  %v989 = vunpack.c.l.b16 %v56
  %v990 = vunpack.c.l.b16 %v57
  %v991 = vunpack.c.l.b16 %v58
  %v992 = vunpack.c.l.b16 %v59
  %v993 = vunpack.c.l.b16 %v60
  %v994 = vunpack.c.l.b16 %v61
  %v995 = vunpack.c.l.b16 %v62
  %v996 = vunpack.c.l.b16 %v63
  %v997 = vunpack.c.l.b16 %v64
  %v998 = vunpack.c.l.b16 %v65
  %v999 = vunpack.c.l.b16 %v66
  %v1000 = vunpack.c.l.b16 %v67
  %v1001 = vunpack.c.l.b16 %v68
  %v1002 = vunpack.c.l.b16 %v69
  %v1003 = vunpack.c.l.b16 %v70
  %v1004 = vunpack.c.l.b16 %v71
  %v1005 = vunpack.c.l.b16 %v72
  %v1006 = vunpack.c.l.b16 %v73
  %v1007 = vunpack.c.l.b16 %v74
  %v1008 = vunpack.c.l.b16 %v75
  %v1009 = vunpack.c.l.b16 %v76
  %v1010 = vunpack.c.l.b16 %v77
  %v1011 = vunpack.c.l.b16 %v78
  %v1012 = vunpack.c.l.b16 %v79
  %v1013 = vunpack.c.l.b16 %v80
  %v1014 = vunpack.c.l.b16 %v81
  %v1015 = vunpack.c.l.b16 %v82
  %v1016 = vunpack.c.l.b16 %v83
  %v1017 = vunpack.c.l.b16 %v84
  %v1018 = vunpack.c.l.b16 %v85
  %v1019 = vunpack.c.l.b16 %v86
  %v1020 = vunpack.c.l.b16 %v87
  %v1021 = vunpack.c.l.b16 %v88
  %v1022 = vunpack.c.l.b16 %v89
  %v1023 = vunpack.c.l.b16 %v90
  %v1024 = vunpack.c.l.b16 %v91
  %v1025 = vunpack.c.l.b16 %v92
  %v1026 = vunpack.c.l.b16 %v93
  %v1027 = vunpack.c.l.b16 %v94
  %v1028 = vunpack.c.l.b16 %v95
  %v1029 = vunpack.c.l.b16 %v96
  %v1030 = vunpack.c.l.b16 %v97
  %v1031 = vunpack.c.l.b16 %v98
  %v1032 = vunpack.c.l.b16 %v99
  %v1033 = vunpack.c.l.b16 %v100
  %v1034 = vunpack.c.l.b16 %v101
  %v1035 = vunpack.c.l.b16 %v102
  %v1036 = vunpack.c.l.b16 %v103
  %v1037 = vunpack.c.l.b16 %v104
  %v1038 = vunpack.c.l.b16 %v105
  %v1039 = vunpack.c.l.b16 %v106
  %v1040 = vunpack.c.l.b16 %v107
  %v1041 = vunpack.c.l.b16 %v108
  %v1042 = vunpack.c.l.b16 %v109
  %v1043 = vunpack.c.l.b16 %v110
  %v1044 = vunpack.c.l.b16 %v111
  %v1045 = vunpack.c.l.b16 %v112
  %v1046 = vunpack.c.l.b16 %v113
  %v1047 = vunpack.c.l.b16 %v114
  %v1048 = vunpack.c.l.b16 %v115
  %v1049 = vunpack.c.l.b16 %v116
  %v1050 = vunpack.c.l.b16 %v117
  %v1051 = vunpack.c.l.b16 %v118
  %v1052 = vunpack.c.l.b16 %v119
  %v1053 = vunpack.c.l.b16 %v120
  %v1054 = vunpack.c.l.b16 %v121
  %v1055 = vunpack.c.l.b16 %v122
  %v1056 = vunpack.c.l.b16 %v123
  %v1057 = vunpack.c.l.b16 %v124
  %v1058 = vunpack.c.l.b16 %v125
  %v1059 = vunpack.c.l.b16 %v126
  %v1060 = vunpack.c.l.b16 %v127
  %v1061 = vunpack.c.l.b16 %v128
  %v1062 = vunpack.c.l.b16 %v129
  %v1063 = vunpack.c.l.b16 %v130
  %v1064 = vunpack.c.l.b16 %v131
  %v1065 = vunpack.c.l.b16 %v132
  %v1066 = vunpack.c.l.b16 %v133
  %v1067 = vunpack.c.l.b16 %v134
  %v1068 = vunpack.c.l.b16 %v135
  %v1069 = vunpack.c.l.b16 %v136
  %v1070 = vunpack.c.l.b16 %v137
  %v1071 = vunpack.c.l.b16 %v138
  %v1072 = vunpack.c.l.b16 %v139
  %v1073 = vunpack.c.l.b16 %v140
  %v1074 = vunpack.c.l.b16 %v141
  %v1075 = vunpack.c.l.b16 %v142
  %v1076 = vunpack.c.l.b16 %v143
  %v1077 = vunpack.c.l.b16 %v144
  %v1078 = vunpack.c.l.b16 %v145
  %v1079 = vunpack.c.l.b16 %v146
  %v1080 = vunpack.c.l.b16 %v147
  %v1081 = vunpack.c.l.b16 %v148
  %v1082 = vunpack.c.l.b16 %v149
  %v1083 = vunpack.c.l.b16 %v150
  %v1084 = vunpack.c.l.b16 %v151
  %v1085 = vunpack.c.l.b16 %v152
  %v1086 = vunpack.c.l.b16 %v153
  %v1087 = vunpack.c.l.b16 %v154
  %v1088 = vunpack.c.l.b16 %v155
  %v1089 = vunpack.c.l.b16 %v156
  %v1090 = vunpack.c.l.b16 %v157
  %v1091 = vunpack.c.l.b16 %v158
  %v1092 = vunpack.c.l.b16 %v159
  %v1093 = vunpack.c.l.b16 %v160
  %v1094 = vunpack.c.l.b16 %v161
  %v1095 = vunpack.c.l.b16 %v162
  %v1096 = vunpack.c.l.b16 %v163
  %v1097 = vunpack.c.l.b16 %v164
  %v1098 = vunpack.c.l.b16 %v165
  %v1099 = vunpack.c.l.b16 %v166
  %v1100 = vunpack.c.l.b16 %v167
  %v1101 = vunpack.c.l.b16 %v168
  %v1102 = vunpack.c.l.b16 %v169
  %v1103 = vunpack.c.l.b16 %v170
  %v1104 = vunpack.c.l.b16 %v171
  %v1105 = vunpack.c.l.b16 %v172
  %v1106 = vunpack.c.l.b16 %v173
  %v1107 = vunpack.c.l.b16 %v174
  %v1108 = vunpack.c.l.b16 %v175
  %v1109 = vunpack.c.l.b16 %v176
  %v1110 = vunpack.c.l.b16 %v177
  %v1111 = vunpack.c.l.b16 %v178
  %v1112 = vunpack.c.l.b16 %v179
  %v1113 = vunpack.c.l.b16 %v180
  %v1114 = vunpack.c.l.b16 %v181
  %v1115 = vunpack.c.l.b16 %v182
  %v1116 = vunpack.c.l.b16 %v183
  %v1117 = vunpack.c.l.b16 %v184
  %v1118 = vunpack.c.l.b16 %v185
  %v1119 = vunpack.c.l.b16 %v186
  %v1120 = vunpack.c.l.b16 %v187
  %v1121 = vunpack.c.l.b16 %v188
  %v1122 = vunpack.c.l.b16 %v189
  %v1123 = vunpack.c.l.b16 %v190
  %v1124 = vunpack.c.l.b16 %v191
  %v1125 = vunpack.c.l.b16 %v192
  %v1126 = vunpack.c.l.b16 %v193
  %v1127 = vunpack.c.l.b16 %v194
  %v1128 = vunpack.c.l.b16 %v195
  %v1129 = vunpack.c.l.b16 %v196
  %v1130 = vunpack.c.l.b16 %v197
  %v1131 = vunpack.c.l.b16 %v198
  %v1132 = vunpack.c.l.b16 %v199
  %v1133 = vunpack.c.l.b16 %v200
  %v1134 = vunpack.c.l.b16 %v201
  %v1135 = vunpack.c.l.b16 %v202
  %v1136 = vunpack.c.l.b16 %v203
  %v1137 = vunpack.c.l.b16 %v204
  %v1138 = vunpack.c.l.b16 %v205
  %v1139 = vunpack.c.l.b16 %v206
  %v1140 = vunpack.c.l.b16 %v207
  %v1141 = vunpack.c.l.b16 %v208
  %v1142 = vunpack.c.l.b16 %v209
  %v1143 = vunpack.c.l.b16 %v210
  %v1144 = vunpack.c.l.b16 %v211
  %v1145 = vunpack.c.l.b16 %v212
  %v1146 = vunpack.c.l.b16 %v213
  %v1147 = vunpack.c.l.b16 %v214
  %v1148 = vunpack.c.l.b16 %v215
  %v1149 = vunpack.c.l.b16 %v216
  %v1150 = vunpack.c.l.b16 %v217
  %v1151 = vunpack.c.l.b16 %v218
  %v1152 = vunpack.c.l.b16 %v219
  %v1153 = vunpack.c.l.b16 %v220
  %v1154 = vunpack.c.l.b16 %v221
  %v1155 = vunpack.c.l.b16 %v222
  %v1156 = vunpack.c.l.b16 %v223
  %v1157 = vunpack.c.l.b16 %v224
  %v1158 = vunpack.c.l.b16 %v225
  %v1159 = vunpack.c.l.b16 %v226
  %v1160 = vunpack.c.l.b16 %v227
  %v1161 = vunpack.c.l.b16 %v228
  %v1162 = vunpack.c.l.b16 %v229
  %v1163 = vunpack.c.l.b16 %v230
  %v1164 = vunpack.c.l.b16 %v231
  %v1165 = vunpack.c.l.b16 %v232
  %v1166 = vunpack.c.l.b16 %v233
  %v1167 = vunpack.c.l.b16 %v234
  %v1168 = vunpack.c.l.b16 %v235
  %v1169 = vunpack.c.l.b16 %v236
  %v1170 = vunpack.c.l.b16 %v237
  %v1171 = vunpack.c.l.b16 %v238
  %v1172 = vunpack.c.l.b16 %v239
  %v1173 = vunpack.c.l.b16 %v240
  %v1174 = vunpack.c.l.b16 %v241
  %v1175 = vunpack.c.l.b16 %v242
  %v1176 = vunpack.c.l.b16 %v243
  %v1177 = vunpack.c.l.b16 %v244
  %v1178 = vunpack.c.l.b16 %v245
  %v1179 = vunpack.c.l.b16 %v246
  %v1180 = vunpack.c.l.b16 %v247
  %v1181 = vunpack.c.l.b16 %v248
  %v1182 = vunpack.c.l.b16 %v249
  %v1183 = vunpack.c.l.b16 %v250
  %v1184 = vunpack.c.l.b16 %v251
  %v1185 = vunpack.c.l.b16 %v252
  %v1186 = vunpack.c.l.b16 %v253
  %v1187 = vunpack.c.l.b16 %v254
  %v1188 = vunpack.c.l.b16 %v255
  %v1189 = vunpack.c.l.b16 %v256
  %v1190 = vunpack.c.l.b16 %v257
  %v1191 = vunpack.c.l.b16 %v258
  %v1192 = vunpack.c.l.b16 %v259
  %v1193 = vunpack.c.l.b16 %v260
  %v1194 = vunpack.c.l.b16 %v261
  %v1195 = vunpack.c.l.b16 %v262
  %v1196 = vunpack.c.l.b16 %v263
  %v1197 = vunpack.c.l.b16 %v264
  %v1198 = vunpack.c.l.b16 %v265
  %v1199 = vunpack.c.l.b16 %v266
  %v1200 = vunpack.c.l.b16 %v267
  %v1201 = vunpack.c.l.b16 %v268
  %v1202 = vunpack.c.l.b16 %v269
  %v1203 = vunpack.c.l.b16 %v270
  %v1204 = vunpack.c.l.b16 %v271
  %v1205 = vunpack.c.l.b16 %v272
  %v1206 = vunpack.c.l.b16 %v273
  %v1207 = vunpack.c.l.b16 %v274
  %v1208 = vunpack.c.l.b16 %v275
  %v1209 = vunpack.c.l.b16 %v276
  %v1210 = vunpack.c.l.b16 %v277
  %v1211 = vunpack.c.l.b16 %v278
  %v1212 = vunpack.c.l.b16 %v279
  %v1213 = vunpack.c.l.b16 %v280
  %v1214 = vunpack.c.l.b16 %v281
  %v1215 = vunpack.c.l.b16 %v282
  %v1216 = vunpack.c.l.b16 %v283
  %v1217 = vunpack.c.l.b16 %v284
  %v1218 = vunpack.c.l.b16 %v285
  %v1219 = vunpack.c.l.b16 %v286
  %v1220 = vunpack.c.l.b16 %v287
  %v1221 = vunpack.c.l.b16 %v288
  %v1222 = vunpack.c.l.b16 %v289
  %v1223 = vunpack.c.l.b16 %v290
  %v1224 = vunpack.c.l.b16 %v291
  %v1225 = vunpack.c.l.b16 %v292
  %v1226 = vunpack.c.l.b16 %v293
  %v1227 = vunpack.c.l.b16 %v294
  %v1228 = vunpack.c.l.b16 %v295
  %v1229 = vunpack.c.l.b16 %v296
  %v1230 = vunpack.c.l.b16 %v297
  %v1231 = vunpack.c.l.b16 %v298
  %v1232 = vunpack.c.l.b16 %v299
  %v1233 = vunpack.c.l.b16 %v300
  %v1234 = vunpack.c.l.b16 %v301
  %v1235 = vunpack.c.l.b16 %v302
  %v1236 = vunpack.c.l.b16 %v303
  %v1237 = vunpack.c.l.b16 %v304
  %v1238 = vunpack.c.l.b16 %v305
  %v1239 = vunpack.c.l.b16 %v306
  %v1240 = vunpack.c.l.b16 %v307
  %v1241 = vunpack.c.l.b16 %v308
  %v1242 = vunpack.c.l.b16 %v309
  %v1243 = vunpack.c.l.b16 %v310
  %v1244 = vunpack.c.l.b16 %v311
  %v1245 = vunpack.c.l.b16 %v312
  %v1246 = vunpack.c.l.b16 %v313
  %v1247 = vunpack.c.l.b16 %v314
  %v1248 = vunpack.c.l.b16 %v315
  %v1249 = vunpack.c.l.b16 %v316
  %v1250 = vunpack.c.l.b16 %v317
  %v1251 = vunpack.c.l.b16 %v318
  %v1252 = vunpack.c.l.b16 %v319
  %v1253 = vunpack.c.l.b16 %v320
  %v1254 = vunpack.c.l.b16 %v321
  %v1255 = vunpack.c.l.b16 %v322
  %v1256 = vunpack.c.l.b16 %v323
  %v1257 = vunpack.c.l.b16 %v324
  %v1258 = vunpack.c.l.b16 %v325
  %v1259 = vunpack.c.l.b16 %v326
  %v1260 = vunpack.c.l.b16 %v327
  %v1261 = vunpack.c.l.b16 %v328
  %v1262 = vunpack.c.l.b16 %v329
  %v1263 = vunpack.c.l.b16 %v330
  %v1264 = vunpack.c.l.b16 %v331
  %v1265 = vunpack.c.l.b16 %v332
  %v1266 = vunpack.c.l.b16 %v333
  %v1267 = vunpack.c.l.b16 %v334
  %v1268 = vunpack.c.l.b16 %v335
  %v1269 = vunpack.c.l.b16 %v336
  %v1270 = vunpack.c.l.b16 %v337
  %v1271 = vunpack.c.l.b16 %v338
  %v1272 = vunpack.c.l.b16 %v339
  %v1273 = vunpack.c.l.b16 %v340
  %v1274 = vunpack.c.l.b16 %v341
  %v1275 = vunpack.c.l.b16 %v342
  %v1276 = vunpack.c.l.b16 %v343
  %v1277 = vunpack.c.l.b16 %v344
  %v1278 = vunpack.c.l.b16 %v345
  %v1279 = vunpack.c.l.b16 %v346
  %v1280 = vunpack.c.l.b16 %v347
  %v1281 = vunpack.c.l.b16 %v348
  %v1282 = vunpack.c.l.b16 %v349
  %v1283 = vunpack.c.l.b16 %v350
  %v1284 = vunpack.c.l.b16 %v351
  %v1285 = vunpack.c.l.b16 %v352
  %v1286 = vunpack.c.l.b16 %v353
  %v1287 = vunpack.c.l.b16 %v354
  %v1288 = vunpack.c.l.b16 %v355
  %v1289 = vunpack.c.l.b16 %v356
  %v1290 = vunpack.c.l.b16 %v357
  %v1291 = vunpack.c.l.b16 %v358
  %v1292 = vunpack.c.l.b16 %v359
  %v1293 = vunpack.c.l.b16 %v360
  %v1294 = vunpack.c.l.b16 %v361
  %v1295 = vunpack.c.l.b16 %v362
  %v1296 = vunpack.c.l.b16 %v363
  %v1297 = vunpack.c.l.b16 %v364
  %v1298 = vunpack.c.l.b16 %v365
  %v1299 = vunpack.c.l.b16 %v366
  %v1300 = vunpack.c.l.b16 %v367
  %v1301 = vunpack.c.l.b16 %v368
  %v1302 = vunpack.c.l.b16 %v369
  %v1303 = vunpack.c.l.b16 %v370
  %v1304 = vunpack.c.l.b16 %v371
  %v1305 = vunpack.c.l.b16 %v372
  %v1306 = vunpack.c.l.b16 %v373
  %v1307 = vunpack.c.l.b16 %v374
  %v1308 = vunpack.c.l.b16 %v375
  %v1309 = vunpack.c.l.b16 %v376
  %v1310 = vunpack.c.l.b16 %v377
  %v1311 = vunpack.c.l.b16 %v378
  %v1312 = vunpack.c.l.b16 %v379
  %v1313 = vunpack.c.l.b16 %v380
  %v1314 = vunpack.c.l.b16 %v381
  %v1315 = vunpack.c.l.b16 %v382
  %v1316 = vunpack.c.l.b16 %v383
  %v1317 = vunpack.c.l.b16 %v384
  %v1318 = vunpack.c.l.b16 %v385
  %v1319 = vunpack.c.l.b16 %v386
  %v1320 = vunpack.c.l.b16 %v387
  %v1321 = vunpack.c.l.b16 %v388
  %v1322 = vunpack.c.l.b16 %v389
  %v1323 = vunpack.c.l.b16 %v390
  %v1324 = vunpack.c.l.b16 %v391
  %v1325 = vunpack.c.l.b16 %v392
  %v1326 = vunpack.c.l.b16 %v393
  %v1327 = vunpack.c.l.b16 %v394
  %v1328 = vunpack.c.l.b16 %v395
  %v1329 = vunpack.c.l.b16 %v396
  %v1330 = vunpack.c.l.b16 %v397
  %v1331 = vunpack.c.l.b16 %v398
  %v1332 = vunpack.c.l.b16 %v399
  %v1333 = vunpack.c.l.b16 %v400
  %v1334 = vunpack.c.l.b16 %v401
  %v1335 = vunpack.c.l.b16 %v402
  %v1336 = vunpack.c.l.b16 %v403
  %v1337 = vunpack.c.l.b16 %v404
  %v1338 = vunpack.c.l.b16 %v405
  %v1339 = vunpack.c.l.b16 %v406
  %v1340 = vunpack.c.l.b16 %v407
  %v1341 = vunpack.c.l.b16 %v408
  %v1342 = vunpack.c.l.b16 %v409
  %v1343 = vunpack.c.l.b16 %v410
  %v1344 = vunpack.c.l.b16 %v411
  %v1345 = vunpack.c.l.b16 %v412
  %v1346 = vunpack.c.l.b16 %v413
  %v1347 = vunpack.c.l.b16 %v414
  %v1348 = vunpack.c.l.b16 %v415
  %v1349 = vunpack.c.l.b16 %v416
  %v1350 = vunpack.c.l.b16 %v417
  %v1351 = vunpack.c.l.b16 %v418
  %v1352 = vunpack.c.l.b16 %v419
  %v1353 = vunpack.c.l.b16 %v420
  %v1354 = vunpack.c.l.b16 %v421
  %v1355 = vunpack.c.l.b16 %v422
  %v1356 = vunpack.c.l.b16 %v423
  %v1357 = vunpack.c.l.b16 %v424
  %v1358 = vunpack.c.l.b16 %v425
  %v1359 = vunpack.c.l.b16 %v426
  %v1360 = vunpack.c.l.b16 %v427
  %v1361 = vunpack.c.l.b16 %v428
  %v1362 = vunpack.c.l.b16 %v429
  %v1363 = vunpack.c.l.b16 %v430
  %v1364 = vunpack.c.l.b16 %v431
  %v1365 = vunpack.c.l.b16 %v432
  %v1366 = vunpack.c.l.b16 %v433
  %v1367 = vunpack.c.l.b16 %v434
  %v1368 = vunpack.c.l.b16 %v435
  %v1369 = vunpack.c.l.b16 %v436
  %v1370 = vunpack.c.l.b16 %v437
  %v1371 = vunpack.c.l.b16 %v438
  %v1372 = vunpack.c.l.b16 %v439
  %v1373 = vunpack.c.l.b16 %v440
  %v1374 = vunpack.c.l.b16 %v441
  %v1375 = vunpack.c.l.b16 %v442
  %v1376 = vunpack.c.l.b16 %v443
  %v1377 = vunpack.c.l.b16 %v444
  %v1378 = vunpack.c.l.b16 %v445
  %v1379 = vunpack.c.l.b16 %v446
  %v1380 = vunpack.c.l.b16 %v447
  %v1381 = vunpack.c.l.b16 %v448
  %v1382 = vunpack.c.l.b16 %v449
  %v1383 = vunpack.c.l.b16 %v450
  %v1384 = vunpack.c.l.b16 %v451
  %v1385 = vunpack.c.l.b16 %v452
  %v1386 = vpack.c.b16 %v987, %v986
  %v1387 = vpack.c.b16 %v989, %v988
  %v1388 = vpack.c.b16 %v991, %v990
  %v1389 = vpack.c.b16 %v993, %v992
  %v1390 = vpack.c.b16 %v995, %v994
  %v1391 = vpack.c.b16 %v997, %v996
  %v1392 = vpack.c.b16 %v999, %v998
  %v1393 = vpack.c.b16 %v1001, %v1000
  %v1394 = vpack.c.b16 %v1003, %v1002
  %v1395 = vpack.c.b16 %v1005, %v1004
  %v1396 = vpack.c.b16 %v1007, %v1006
  %v1397 = vpack.c.b16 %v1009, %v1008
  %v1398 = vpack.c.b16 %v1011, %v1010
  %v1399 = vpack.c.b16 %v1013, %v1012
  %v1400 = vpack.c.b16 %v1015, %v1014
  %v1401 = vpack.c.b16 %v1017, %v1016
  %v1402 = vpack.c.b16 %v1019, %v1018
  %v1403 = vpack.c.b16 %v1021, %v1020
  %v1404 = vpack.c.b16 %v1023, %v1022
  %v1405 = vpack.c.b16 %v1025, %v1024
  %v1406 = vpack.c.b16 %v1027, %v1026
  %v1407 = vpack.c.b16 %v1029, %v1028
  %v1408 = vpack.c.b16 %v1031, %v1030
  %v1409 = vpack.c.b16 %v1033, %v1032
  %v1410 = vpack.c.b16 %v1035, %v1034
  %v1411 = vpack.c.b16 %v1037, %v1036
  %v1412 = vpack.c.b16 %v1039, %v1038
  %v1413 = vpack.c.b16 %v1041, %v1040
  %v1414 = vpack.c.b16 %v1043, %v1042
  %v1415 = vpack.c.b16 %v1045, %v1044
  %v1416 = vpack.c.b16 %v1047, %v1046
  %v1417 = vpack.c.b16 %v1049, %v1048
  %v1418 = vpack.c.b16 %v1051, %v1050
  %v1419 = vpack.c.b16 %v1053, %v1052
  %v1420 = vpack.c.b16 %v1055, %v1054
  %v1421 = vpack.c.b16 %v1057, %v1056
  %v1422 = vpack.c.b16 %v1059, %v1058
  %v1423 = vpack.c.b16 %v1061, %v1060
  %v1424 = vpack.c.b16 %v1063, %v1062
  %v1425 = vpack.c.b16 %v1065, %v1064
  %v1426 = vpack.c.b16 %v1067, %v1066
  %v1427 = vpack.c.b16 %v1069, %v1068
  %v1428 = vpack.c.b16 %v1071, %v1070
  %v1429 = vpack.c.b16 %v1073, %v1072
  %v1430 = vpack.c.b16 %v1075, %v1074
  %v1431 = vpack.c.b16 %v1077, %v1076
  %v1432 = vpack.c.b16 %v1079, %v1078
  %v1433 = vpack.c.b16 %v1081, %v1080
  %v1434 = vpack.c.b16 %v1083, %v1082
  %v1435 = vpack.c.b16 %v1085, %v1084
  %v1436 = vpack.c.b16 %v1087, %v1086
  %v1437 = vpack.c.b16 %v1089, %v1088
  %v1438 = vpack.c.b16 %v1091, %v1090
  %v1439 = vpack.c.b16 %v1093, %v1092
  %v1440 = vpack.c.b16 %v1095, %v1094
  %v1441 = vpack.c.b16 %v1097, %v1096
  %v1442 = vpack.c.b16 %v1099, %v1098
  %v1443 = vpack.c.b16 %v1101, %v1100
  %v1444 = vpack.c.b16 %v1103, %v1102
  %v1445 = vpack.c.b16 %v1105, %v1104
  %v1446 = vpack.c.b16 %v1107, %v1106
  %v1447 = vpack.c.b16 %v1109, %v1108
  %v1448 = vpack.c.b16 %v1111, %v1110
  %v1449 = vpack.c.b16 %v1113, %v1112
  %v1450 = vpack.c.b16 %v1115, %v1114
  %v1451 = vpack.c.b16 %v1117, %v1116
  %v1452 = vpack.c.b16 %v1119, %v1118
  %v1453 = vpack.c.b16 %v1121, %v1120
  %v1454 = vpack.c.b16 %v1123, %v1122
  %v1455 = vpack.c.b16 %v1125, %v1124
  %v1456 = vpack.c.b16 %v1127, %v1126
  %v1457 = vpack.c.b16 %v1129, %v1128
  %v1458 = vpack.c.b16 %v1131, %v1130
  %v1459 = vpack.c.b16 %v1133, %v1132
  %v1460 = vpack.c.b16 %v1135, %v1134
  %v1461 = vpack.c.b16 %v1137, %v1136
  %v1462 = vpack.c.b16 %v1139, %v1138
  %v1463 = vpack.c.b16 %v1141, %v1140
  %v1464 = vpack.c.b16 %v1143, %v1142
  %v1465 = vpack.c.b16 %v1145, %v1144
  %v1466 = vpack.c.b16 %v1147, %v1146
  %v1467 = vpack.c.b16 %v1149, %v1148
  %v1468 = vpack.c.b16 %v1151, %v1150
  %v1469 = vpack.c.b16 %v1153, %v1152
  %v1470 = vpack.c.b16 %v1155, %v1154
  %v1471 = vpack.c.b16 %v1157, %v1156
  %v1472 = vpack.c.b16 %v1159, %v1158
  %v1473 = vpack.c.b16 %v1161, %v1160
  %v1474 = vpack.c.b16 %v1163, %v1162
  %v1475 = vpack.c.b16 %v1165, %v1164
  %v1476 = vpack.c.b16 %v1167, %v1166
  %v1477 = vpack.c.b16 %v1169, %v1168
  %v1478 = vpack.c.b16 %v1171, %v1170
  %v1479 = vpack.c.b16 %v1173, %v1172
  %v1480 = vpack.c.b16 %v1175, %v1174
  %v1481 = vpack.c.b16 %v1177, %v1176
  %v1482 = vpack.c.b16 %v1179, %v1178
  %v1483 = vpack.c.b16 %v1181, %v1180
  %v1484 = vpack.c.b16 %v1183, %v1182
  %v1485 = vpack.c.b16 %v1185, %v1184
  %v1486 = vpack.c.b16 %v1187, %v1186
  %v1487 = vpack.c.b16 %v1189, %v1188
  %v1488 = vpack.c.b16 %v1191, %v1190
  %v1489 = vpack.c.b16 %v1193, %v1192
  %v1490 = vpack.c.b16 %v1195, %v1194
  %v1491 = vpack.c.b16 %v1197, %v1196
  %v1492 = vpack.c.b16 %v1199, %v1198
  %v1493 = vpack.c.b16 %v1201, %v1200
  %v1494 = vpack.c.b16 %v1203, %v1202
  %v1495 = vpack.c.b16 %v1205, %v1204
  %v1496 = vpack.c.b16 %v1207, %v1206
  %v1497 = vpack.c.b16 %v1209, %v1208
  %v1498 = vpack.c.b16 %v1211, %v1210
  %v1499 = vpack.c.b16 %v1213, %v1212
  %v1500 = vpack.c.b16 %v1215, %v1214
  %v1501 = vpack.c.b16 %v1217, %v1216
  %v1502 = vpack.c.b16 %v1219, %v1218
  %v1503 = vpack.c.b16 %v1221, %v1220
  %v1504 = vpack.c.b16 %v1223, %v1222
  %v1505 = vpack.c.b16 %v1225, %v1224
  %v1506 = vpack.c.b16 %v1227, %v1226
  %v1507 = vpack.c.b16 %v1229, %v1228
  %v1508 = vpack.c.b16 %v1231, %v1230
  %v1509 = vpack.c.b16 %v1233, %v1232
  %v1510 = vpack.c.b16 %v1235, %v1234
  %v1511 = vpack.c.b16 %v1237, %v1236
  %v1512 = vpack.c.b16 %v1239, %v1238
  %v1513 = vpack.c.b16 %v1241, %v1240
  %v1514 = vpack.c.b16 %v1243, %v1242
  %v1515 = vpack.c.b16 %v1245, %v1244
  %v1516 = vpack.c.b16 %v1247, %v1246
  %v1517 = vpack.c.b16 %v1249, %v1248
  %v1518 = vpack.c.b16 %v1251, %v1250
  %v1519 = vpack.c.b16 %v1253, %v1252
  %v1520 = vpack.c.b16 %v1255, %v1254
  %v1521 = vpack.c.b16 %v1257, %v1256
  %v1522 = vpack.c.b16 %v1259, %v1258
  %v1523 = vpack.c.b16 %v1261, %v1260
  %v1524 = vpack.c.b16 %v1263, %v1262
  %v1525 = vpack.c.b16 %v1265, %v1264
  %v1526 = vpack.c.b16 %v1267, %v1266
  %v1527 = vpack.c.b16 %v1269, %v1268
  %v1528 = vpack.c.b16 %v1271, %v1270
  %v1529 = vpack.c.b16 %v1273, %v1272
  %v1530 = vpack.c.b16 %v1275, %v1274
  %v1531 = vpack.c.b16 %v1277, %v1276
  %v1532 = vpack.c.b16 %v1279, %v1278
  %v1533 = vpack.c.b16 %v1281, %v1280
  %v1534 = vpack.c.b16 %v1283, %v1282
  %v1535 = vpack.c.b16 %v1285, %v1284
  %v1536 = vpack.c.b16 %v1287, %v1286
  %v1537 = vpack.c.b16 %v1289, %v1288
  %v1538 = vpack.c.b16 %v1291, %v1290
  %v1539 = vpack.c.b16 %v1293, %v1292
  %v1540 = vpack.c.b16 %v1295, %v1294
  %v1541 = vpack.c.b16 %v1297, %v1296
  %v1542 = vpack.c.b16 %v1299, %v1298
  %v1543 = vpack.c.b16 %v1301, %v1300
  %v1544 = vpack.c.b16 %v1303, %v1302
  %v1545 = vpack.c.b16 %v1305, %v1304
  %v1546 = vpack.c.b16 %v1307, %v1306
  %v1547 = vpack.c.b16 %v1309, %v1308
  %v1548 = vpack.c.b16 %v1311, %v1310
  %v1549 = vpack.c.b16 %v1313, %v1312
  %v1550 = vpack.c.b16 %v1315, %v1314
  %v1551 = vpack.c.b16 %v1317, %v1316
  %v1552 = vpack.c.b16 %v1319, %v1318
  %v1553 = vpack.c.b16 %v1321, %v1320
  %v1554 = vpack.c.b16 %v1323, %v1322
  %v1555 = vpack.c.b16 %v1325, %v1324
  %v1556 = vpack.c.b16 %v1327, %v1326
  %v1557 = vpack.c.b16 %v1329, %v1328
  %v1558 = vpack.c.b16 %v1331, %v1330
  %v1559 = vpack.c.b16 %v1333, %v1332
  %v1560 = vpack.c.b16 %v1335, %v1334
  %v1561 = vpack.c.b16 %v1337, %v1336
  %v1562 = vpack.c.b16 %v1339, %v1338
  %v1563 = vpack.c.b16 %v1341, %v1340
  %v1564 = vpack.c.b16 %v1343, %v1342
  %v1565 = vpack.c.b16 %v1345, %v1344
  %v1566 = vpack.c.b16 %v1347, %v1346
  %v1567 = vpack.c.b16 %v1349, %v1348
  %v1568 = vpack.c.b16 %v1351, %v1350
  %v1569 = vpack.c.b16 %v1353, %v1352
  %v1570 = vpack.c.b16 %v1355, %v1354
  %v1571 = vpack.c.b16 %v1357, %v1356
  %v1572 = vpack.c.b16 %v1359, %v1358
  %v1573 = vpack.c.b16 %v1361, %v1360
  %v1574 = vpack.c.b16 %v1363, %v1362
  %v1575 = vpack.c.b16 %v1365, %v1364
  %v1576 = vpack.c.b16 %v1367, %v1366
  %v1577 = vpack.c.b16 %v1369, %v1368
  %v1578 = vpack.c.b16 %v1371, %v1370
  %v1579 = vpack.c.b16 %v1373, %v1372
  %v1580 = vpack.c.b16 %v1375, %v1374
  %v1581 = vpack.c.b16 %v1377, %v1376
  %v1582 = vpack.c.b16 %v1379, %v1378
  %v1583 = vpack.c.b16 %v1381, %v1380
  %v1584 = vpack.c.b16 %v1383, %v1382
  %v1585 = vpack.c.b16 %v1385, %v1384
  %1786 = vmatprep.subr.bf16.mxu0 0
  %1787 = vmatpush1.bf16.msra.mxu0 %v1386
  %1788 = vmatprep.subr.bf16.mxu0 0
  %1789 = vmatpush1.bf16.msra.mxu0 %v1387
  %1790 = vmatprep.subr.bf16.mxu0 0
  %1791 = vmatpush1.bf16.msra.mxu0 %v1388
  %1792 = vmatprep.subr.bf16.mxu0 0
  %1793 = vmatpush1.bf16.msra.mxu0 %v1389
  %1794 = vmatprep.subr.bf16.mxu0 0
  %1795 = vmatpush1.bf16.msra.mxu0 %v1390
  %1796 = vmatprep.subr.bf16.mxu0 0
  %1797 = vmatpush1.bf16.msra.mxu0 %v1391
  %1798 = vmatprep.subr.bf16.mxu0 0
  %1799 = vmatpush1.bf16.msra.mxu0 %v1392
  %1800 = vmatprep.subr.bf16.mxu0 0
  %1801 = vmatpush1.bf16.msra.mxu0 %v1393
  %1802 = vmatprep.subr.bf16.mxu0 0
  %1803 = vmatpush1.bf16.msra.mxu0 %v1394
  %1804 = vmatprep.subr.bf16.mxu0 0
  %1805 = vmatpush1.bf16.msra.mxu0 %v1395
  %1806 = vmatprep.subr.bf16.mxu0 0
  %1807 = vmatpush1.bf16.msra.mxu0 %v1396
  %1808 = vmatprep.subr.bf16.mxu0 0
  %1809 = vmatpush1.bf16.msra.mxu0 %v1397
  %1810 = vmatprep.subr.bf16.mxu0 0
  %1811 = vmatpush1.bf16.msra.mxu0 %v1398
  %1812 = vmatprep.subr.bf16.mxu0 0
  %1813 = vmatpush1.bf16.msra.mxu0 %v1399
  %1814 = vmatprep.subr.bf16.mxu0 0
  %1815 = vmatpush1.bf16.msra.mxu0 %v1400
  %1816 = vmatprep.subr.bf16.mxu0 0
  %1817 = vmatpush1.bf16.msra.mxu0 %v1401
  %1818 = vmatprep.mubr.bf16.mxu0 %v537
  %1819 = vmatmul.mubr.bf16.gmra.mrb[0].mxu0 %v536
  %v1820 = vpop.f32.mrb[0].mxu0
  %v1821 = vadd.f32 %v458, %v1820
  %v1822 = vpop.f32.mrb[0].mxu0
  %v1823 = vpop.f32.mrb[0].mxu0
  %v1824 = vadd.f32 %v458, %v1823
  %v1825 = vpop.f32.mrb[0].mxu0
  %1826 = vdwg.mxu0
  %1827 = vmatprep.subr.bf16.mxu0 0
  %1828 = vmatpush1.bf16.msra.mxu0 %v1402
  %1829 = vmatprep.subr.bf16.mxu0 0
  %1830 = vmatpush1.bf16.msra.mxu0 %v1403
  %1831 = vmatprep.subr.bf16.mxu0 0
  %1832 = vmatpush1.bf16.msra.mxu0 %v1404
  %1833 = vmatprep.subr.bf16.mxu0 0
  %1834 = vmatpush1.bf16.msra.mxu0 %v1405
  %1835 = vmatprep.subr.bf16.mxu0 0
  %1836 = vmatpush1.bf16.msra.mxu0 %v1406
  %1837 = vmatprep.subr.bf16.mxu0 0
  %1838 = vmatpush1.bf16.msra.mxu0 %v1407
  %1839 = vmatprep.subr.bf16.mxu0 0
  %1840 = vmatpush1.bf16.msra.mxu0 %v1408
  %1841 = vmatprep.subr.bf16.mxu0 0
  %1842 = vmatpush1.bf16.msra.mxu0 %v1409
  %1843 = vmatprep.subr.bf16.mxu0 0
  %1844 = vmatpush1.bf16.msra.mxu0 %v1410
  %1845 = vmatprep.subr.bf16.mxu0 0
  %1846 = vmatpush1.bf16.msra.mxu0 %v1411
  %1847 = vmatprep.subr.bf16.mxu0 0
  %1848 = vmatpush1.bf16.msra.mxu0 %v1412
  %1849 = vmatprep.subr.bf16.mxu0 0
  %1850 = vmatpush1.bf16.msra.mxu0 %v1413
  %1851 = vmatprep.subr.bf16.mxu0 0
  %1852 = vmatpush1.bf16.msra.mxu0 %v1414
  %1853 = vmatprep.subr.bf16.mxu0 0
  %1854 = vmatpush1.bf16.msra.mxu0 %v1415
  %1855 = vmatprep.subr.bf16.mxu0 0
  %1856 = vmatpush1.bf16.msra.mxu0 %v1416
  %1857 = vmatprep.subr.bf16.mxu0 0
  %1858 = vmatpush1.bf16.msra.mxu0 %v1417
  %1859 = vmatprep.mubr.bf16.mxu0 %v539
  %1860 = vmatmul.mubr.bf16.gmra.mrb[0].mxu0 %v538
  %v1861 = vpop.f32.mrb[0].mxu0
  %v1862 = vadd.f32 %v1821, %v1861
  %v1863 = vpop.f32.mrb[0].mxu0
  %v1864 = vpop.f32.mrb[0].mxu0
  %v1865 = vadd.f32 %v1824, %v1864
  %v1866 = vpop.f32.mrb[0].mxu0
  %1867 = vdwg.mxu0
  %1868 = vmatprep.subr.bf16.mxu0 0
  %1869 = vmatpush1.bf16.msra.mxu0 %v1418
  %1870 = vmatprep.subr.bf16.mxu0 0
  %1871 = vmatpush1.bf16.msra.mxu0 %v1419
  %1872 = vmatprep.subr.bf16.mxu0 0
  %1873 = vmatpush1.bf16.msra.mxu0 %v1420
  %1874 = vmatprep.subr.bf16.mxu0 0
  %1875 = vmatpush1.bf16.msra.mxu0 %v1421
  %1876 = vmatprep.subr.bf16.mxu0 0
  %1877 = vmatpush1.bf16.msra.mxu0 %v1422
  %1878 = vmatprep.subr.bf16.mxu0 0
  %1879 = vmatpush1.bf16.msra.mxu0 %v1423
  %1880 = vmatprep.subr.bf16.mxu0 0
  %1881 = vmatpush1.bf16.msra.mxu0 %v1424
  %1882 = vmatprep.subr.bf16.mxu0 0
  %1883 = vmatpush1.bf16.msra.mxu0 %v1425
  %1884 = vmatprep.subr.bf16.mxu0 0
  %1885 = vmatpush1.bf16.msra.mxu0 %v1426
  %1886 = vmatprep.subr.bf16.mxu0 0
  %1887 = vmatpush1.bf16.msra.mxu0 %v1427
  %1888 = vmatprep.subr.bf16.mxu0 0
  %1889 = vmatpush1.bf16.msra.mxu0 %v1428
  %1890 = vmatprep.subr.bf16.mxu0 0
  %1891 = vmatpush1.bf16.msra.mxu0 %v1429
  %1892 = vmatprep.subr.bf16.mxu0 0
  %1893 = vmatpush1.bf16.msra.mxu0 %v1430
  %1894 = vmatprep.subr.bf16.mxu0 0
  %1895 = vmatpush1.bf16.msra.mxu0 %v1431
  %1896 = vmatprep.subr.bf16.mxu0 0
  %1897 = vmatpush1.bf16.msra.mxu0 %v1432
  %1898 = vmatprep.subr.bf16.mxu0 0
  %1899 = vmatpush1.bf16.msra.mxu0 %v1433
  %1900 = vmatprep.mubr.bf16.mxu0 %v541
  %1901 = vmatmul.mubr.bf16.gmra.mrb[0].mxu0 %v540
  %v1902 = vpop.f32.mrb[0].mxu0
  %v1903 = vadd.f32 %v1862, %v1902
  %v1904 = vpop.f32.mrb[0].mxu0
  %v1905 = vpop.f32.mrb[0].mxu0
  %v1906 = vadd.f32 %v1865, %v1905
  %v1907 = vpop.f32.mrb[0].mxu0
  %1908 = vdwg.mxu0
  %1909 = vmatprep.subr.bf16.mxu0 0
  %1910 = vmatpush1.bf16.msra.mxu0 %v1434
  %1911 = vmatprep.subr.bf16.mxu0 0
  %1912 = vmatpush1.bf16.msra.mxu0 %v1435
  %1913 = vmatprep.subr.bf16.mxu0 0
  %1914 = vmatpush1.bf16.msra.mxu0 %v1436
  %1915 = vmatprep.subr.bf16.mxu0 0
  %1916 = vmatpush1.bf16.msra.mxu0 %v1437
  %1917 = vmatprep.subr.bf16.mxu0 0
  %1918 = vmatpush1.bf16.msra.mxu0 %v1438
  %1919 = vmatprep.subr.bf16.mxu0 0
  %1920 = vmatpush1.bf16.msra.mxu0 %v1439
  %1921 = vmatprep.subr.bf16.mxu0 0
  %1922 = vmatpush1.bf16.msra.mxu0 %v1440
  %1923 = vmatprep.subr.bf16.mxu0 0
  %1924 = vmatpush1.bf16.msra.mxu0 %v1441
  %1925 = vmatprep.subr.bf16.mxu0 0
  %1926 = vmatpush1.bf16.msra.mxu0 %v1442
  %1927 = vmatprep.subr.bf16.mxu0 0
  %1928 = vmatpush1.bf16.msra.mxu0 %v1443
  %1929 = vmatprep.subr.bf16.mxu0 0
  %1930 = vmatpush1.bf16.msra.mxu0 %v1444
  %1931 = vmatprep.subr.bf16.mxu0 0
  %1932 = vmatpush1.bf16.msra.mxu0 %v1445
  %1933 = vmatprep.subr.bf16.mxu0 0
  %1934 = vmatpush1.bf16.msra.mxu0 %v1446
  %1935 = vmatprep.subr.bf16.mxu0 0
  %1936 = vmatpush1.bf16.msra.mxu0 %v1447
  %1937 = vmatprep.subr.bf16.mxu0 0
  %1938 = vmatpush1.bf16.msra.mxu0 %v1448
  %1939 = vmatprep.subr.bf16.mxu0 0
  %1940 = vmatpush1.bf16.msra.mxu0 %v1449
  %1941 = vmatprep.mubr.bf16.mxu0 %v543
  %1942 = vmatmul.mubr.bf16.gmra.mrb[0].mxu0 %v542
  %v1943 = vpop.f32.mrb[0].mxu0
  %v1944 = vadd.f32 %v1903, %v1943
  %v1945 = vpop.f32.mrb[0].mxu0
  %v1946 = vpop.f32.mrb[0].mxu0
  %v1947 = vadd.f32 %v1906, %v1946
  %v1948 = vpop.f32.mrb[0].mxu0
  %1949 = vdwg.mxu0
  %1950 = vmatprep.subr.bf16.mxu0 0
  %1951 = vmatpush1.bf16.msra.mxu0 %v1450
  %1952 = vmatprep.subr.bf16.mxu0 0
  %1953 = vmatpush1.bf16.msra.mxu0 %v1451
  %1954 = vmatprep.subr.bf16.mxu0 0
  %1955 = vmatpush1.bf16.msra.mxu0 %v1452
  %1956 = vmatprep.subr.bf16.mxu0 0
  %1957 = vmatpush1.bf16.msra.mxu0 %v1453
  %1958 = vmatprep.subr.bf16.mxu0 0
  %1959 = vmatpush1.bf16.msra.mxu0 %v1454
  %1960 = vmatprep.subr.bf16.mxu0 0
  %1961 = vmatpush1.bf16.msra.mxu0 %v1455
  %1962 = vmatprep.subr.bf16.mxu0 0
  %1963 = vmatpush1.bf16.msra.mxu0 %v1456
  %1964 = vmatprep.subr.bf16.mxu0 0
  %1965 = vmatpush1.bf16.msra.mxu0 %v1457
  %1966 = vmatprep.subr.bf16.mxu0 0
  %1967 = vmatpush1.bf16.msra.mxu0 %v1458
  %1968 = vmatprep.subr.bf16.mxu0 0
  %1969 = vmatpush1.bf16.msra.mxu0 %v1459
  %1970 = vmatprep.subr.bf16.mxu0 0
  %1971 = vmatpush1.bf16.msra.mxu0 %v1460
  %1972 = vmatprep.subr.bf16.mxu0 0
  %1973 = vmatpush1.bf16.msra.mxu0 %v1461
  %1974 = vmatprep.subr.bf16.mxu0 0
  %1975 = vmatpush1.bf16.msra.mxu0 %v1462
  %1976 = vmatprep.subr.bf16.mxu0 0
  %1977 = vmatpush1.bf16.msra.mxu0 %v1463
  %1978 = vmatprep.subr.bf16.mxu0 0
  %1979 = vmatpush1.bf16.msra.mxu0 %v1464
  %1980 = vmatprep.subr.bf16.mxu0 0
  %1981 = vmatpush1.bf16.msra.mxu0 %v1465
  %1982 = vmatprep.mubr.bf16.mxu0 %v545
  %1983 = vmatmul.mubr.bf16.gmra.mrb[0].mxu0 %v544
  %v1984 = vpop.f32.mrb[0].mxu0
  %v1985 = vadd.f32 %v1944, %v1984
  %v1986 = vpop.f32.mrb[0].mxu0
  %v1987 = vpop.f32.mrb[0].mxu0
  %v1988 = vadd.f32 %v1947, %v1987
  %v1989 = vpop.f32.mrb[0].mxu0
  %1990 = vdwg.mxu0
  %1991 = vmatprep.subr.bf16.mxu0 0
  %1992 = vmatpush1.bf16.msra.mxu0 %v1466
  %1993 = vmatprep.subr.bf16.mxu0 0
  %1994 = vmatpush1.bf16.msra.mxu0 %v1467
  %1995 = vmatprep.subr.bf16.mxu0 0
  %1996 = vmatpush1.bf16.msra.mxu0 %v1468
  %1997 = vmatprep.subr.bf16.mxu0 0
  %1998 = vmatpush1.bf16.msra.mxu0 %v1469
  %1999 = vmatprep.subr.bf16.mxu0 0
  %2000 = vmatpush1.bf16.msra.mxu0 %v1470
  %2001 = vmatprep.subr.bf16.mxu0 0
  %2002 = vmatpush1.bf16.msra.mxu0 %v1471
  %2003 = vmatprep.subr.bf16.mxu0 0
  %2004 = vmatpush1.bf16.msra.mxu0 %v1472
  %2005 = vmatprep.subr.bf16.mxu0 0
  %2006 = vmatpush1.bf16.msra.mxu0 %v1473
  %2007 = vmatprep.subr.bf16.mxu0 0
  %2008 = vmatpush1.bf16.msra.mxu0 %v1474
  %2009 = vmatprep.subr.bf16.mxu0 0
  %2010 = vmatpush1.bf16.msra.mxu0 %v1475
  %2011 = vmatprep.subr.bf16.mxu0 0
  %2012 = vmatpush1.bf16.msra.mxu0 %v1476
  %2013 = vmatprep.subr.bf16.mxu0 0
  %2014 = vmatpush1.bf16.msra.mxu0 %v1477
  %2015 = vmatprep.subr.bf16.mxu0 0
  %2016 = vmatpush1.bf16.msra.mxu0 %v1478
  %2017 = vmatprep.subr.bf16.mxu0 0
  %2018 = vmatpush1.bf16.msra.mxu0 %v1479
  %2019 = vmatprep.subr.bf16.mxu0 0
  %2020 = vmatpush1.bf16.msra.mxu0 %v1480
  %2021 = vmatprep.subr.bf16.mxu0 0
  %2022 = vmatpush1.bf16.msra.mxu0 %v1481
  %2023 = vmatprep.mubr.bf16.mxu0 %v547
  %2024 = vmatmul.mubr.bf16.gmra.mrb[0].mxu0 %v546
  %v2025 = vpop.f32.mrb[0].mxu0
  %v2026 = vadd.f32 %v1985, %v2025
  %v2027 = vpop.f32.mrb[0].mxu0
  %v2028 = vpop.f32.mrb[0].mxu0
  %v2029 = vadd.f32 %v1988, %v2028
  %v2030 = vpop.f32.mrb[0].mxu0
  %2031 = vdwg.mxu0
  %2032 = vmatprep.subr.bf16.mxu0 0
  %2033 = vmatpush1.bf16.msra.mxu0 %v1482
  %2034 = vmatprep.subr.bf16.mxu0 0
  %2035 = vmatpush1.bf16.msra.mxu0 %v1483
  %2036 = vmatprep.subr.bf16.mxu0 0
  %2037 = vmatpush1.bf16.msra.mxu0 %v1484
  %2038 = vmatprep.subr.bf16.mxu0 0
  %2039 = vmatpush1.bf16.msra.mxu0 %v1485
  %2040 = vmatprep.subr.bf16.mxu0 0
  %2041 = vmatpush1.bf16.msra.mxu0 %v1486
  %2042 = vmatprep.subr.bf16.mxu0 0
  %2043 = vmatpush1.bf16.msra.mxu0 %v1487
  %2044 = vmatprep.subr.bf16.mxu0 0
  %2045 = vmatpush1.bf16.msra.mxu0 %v1488
  %2046 = vmatprep.subr.bf16.mxu0 0
  %2047 = vmatpush1.bf16.msra.mxu0 %v1489
  %2048 = vmatprep.subr.bf16.mxu0 0
  %2049 = vmatpush1.bf16.msra.mxu0 %v1490
  %2050 = vmatprep.subr.bf16.mxu0 0
  %2051 = vmatpush1.bf16.msra.mxu0 %v1491
  %2052 = vmatprep.subr.bf16.mxu0 0
  %2053 = vmatpush1.bf16.msra.mxu0 %v1492
  %2054 = vmatprep.subr.bf16.mxu0 0
  %2055 = vmatpush1.bf16.msra.mxu0 %v1493
  %2056 = vmatprep.subr.bf16.mxu0 0
  %2057 = vmatpush1.bf16.msra.mxu0 %v1494
  %2058 = vmatprep.subr.bf16.mxu0 0
  %2059 = vmatpush1.bf16.msra.mxu0 %v1495
  %2060 = vmatprep.subr.bf16.mxu0 0
  %2061 = vmatpush1.bf16.msra.mxu0 %v1496
  %2062 = vmatprep.subr.bf16.mxu0 0
  %2063 = vmatpush1.bf16.msra.mxu0 %v1497
  %2064 = vmatprep.mubr.bf16.mxu0 %v549
  %2065 = vmatmul.mubr.bf16.gmra.mrb[0].mxu0 %v548
  %v2066 = vpop.f32.mrb[0].mxu0
  %v2067 = vadd.f32 %v2026, %v2066
  %v2068 = vpop.f32.mrb[0].mxu0
  %v2069 = vpop.f32.mrb[0].mxu0
  %v2070 = vadd.f32 %v2029, %v2069
  %v2071 = vpop.f32.mrb[0].mxu0
  %2072 = vdwg.mxu0
  %2073 = vmatprep.subr.bf16.mxu0 0
  %2074 = vmatpush1.bf16.msra.mxu0 %v1498
  %2075 = vmatprep.subr.bf16.mxu0 0
  %2076 = vmatpush1.bf16.msra.mxu0 %v1499
  %2077 = vmatprep.subr.bf16.mxu0 0
  %2078 = vmatpush1.bf16.msra.mxu0 %v1500
  %2079 = vmatprep.subr.bf16.mxu0 0
  %2080 = vmatpush1.bf16.msra.mxu0 %v1501
  %2081 = vmatprep.subr.bf16.mxu0 0
  %2082 = vmatpush1.bf16.msra.mxu0 %v1502
  %2083 = vmatprep.subr.bf16.mxu0 0
  %2084 = vmatpush1.bf16.msra.mxu0 %v1503
  %2085 = vmatprep.subr.bf16.mxu0 0
  %2086 = vmatpush1.bf16.msra.mxu0 %v1504
  %2087 = vmatprep.subr.bf16.mxu0 0
  %2088 = vmatpush1.bf16.msra.mxu0 %v1505
  %2089 = vmatprep.subr.bf16.mxu0 0
  %2090 = vmatpush1.bf16.msra.mxu0 %v1506
  %2091 = vmatprep.subr.bf16.mxu0 0
  %2092 = vmatpush1.bf16.msra.mxu0 %v1507
  %2093 = vmatprep.subr.bf16.mxu0 0
  %2094 = vmatpush1.bf16.msra.mxu0 %v1508
  %2095 = vmatprep.subr.bf16.mxu0 0
  %2096 = vmatpush1.bf16.msra.mxu0 %v1509
  %2097 = vmatprep.subr.bf16.mxu0 0
  %2098 = vmatpush1.bf16.msra.mxu0 %v1510
  %2099 = vmatprep.subr.bf16.mxu0 0
  %2100 = vmatpush1.bf16.msra.mxu0 %v1511
  %2101 = vmatprep.subr.bf16.mxu0 0
  %2102 = vmatpush1.bf16.msra.mxu0 %v1512
  %2103 = vmatprep.subr.bf16.mxu0 0
  %2104 = vmatpush1.bf16.msra.mxu0 %v1513
  %2105 = vmatprep.mubr.bf16.mxu0 %v551
  %2106 = vmatmul.mubr.bf16.gmra.mrb[0].mxu0 %v550
  %v2107 = vpop.f32.mrb[0].mxu0
  %v2108 = vadd.f32 %v2067, %v2107
  %v2109 = vpop.f32.mrb[0].mxu0
  %v2110 = vpop.f32.mrb[0].mxu0
  %v2111 = vadd.f32 %v2070, %v2110
  %v2112 = vpop.f32.mrb[0].mxu0
  %2113 = vdwg.mxu0
  %2114 = vmatprep.subr.bf16.mxu0 0
  %2115 = vmatpush1.bf16.msra.mxu0 %v1514
  %2116 = vmatprep.subr.bf16.mxu0 0
  %2117 = vmatpush1.bf16.msra.mxu0 %v1515
  %2118 = vmatprep.subr.bf16.mxu0 0
  %2119 = vmatpush1.bf16.msra.mxu0 %v1516
  %2120 = vmatprep.subr.bf16.mxu0 0
  %2121 = vmatpush1.bf16.msra.mxu0 %v1517
  %2122 = vmatprep.subr.bf16.mxu0 0
  %2123 = vmatpush1.bf16.msra.mxu0 %v1518
  %2124 = vmatprep.subr.bf16.mxu0 0
  %2125 = vmatpush1.bf16.msra.mxu0 %v1519
  %2126 = vmatprep.subr.bf16.mxu0 0
  %2127 = vmatpush1.bf16.msra.mxu0 %v1520
  %2128 = vmatprep.subr.bf16.mxu0 0
  %2129 = vmatpush1.bf16.msra.mxu0 %v1521
  %2130 = vmatprep.subr.bf16.mxu0 0
  %2131 = vmatpush1.bf16.msra.mxu0 %v1522
  %2132 = vmatprep.subr.bf16.mxu0 0
  %2133 = vmatpush1.bf16.msra.mxu0 %v1523
  %2134 = vmatprep.subr.bf16.mxu0 0
  %2135 = vmatpush1.bf16.msra.mxu0 %v1524
  %2136 = vmatprep.subr.bf16.mxu0 0
  %2137 = vmatpush1.bf16.msra.mxu0 %v1525
  %2138 = vmatprep.subr.bf16.mxu0 0
  %2139 = vmatpush1.bf16.msra.mxu0 %v1526
  %2140 = vmatprep.subr.bf16.mxu0 0
  %2141 = vmatpush1.bf16.msra.mxu0 %v1527
  %2142 = vmatprep.subr.bf16.mxu0 0
  %2143 = vmatpush1.bf16.msra.mxu0 %v1528
  %2144 = vmatprep.subr.bf16.mxu0 0
  %2145 = vmatpush1.bf16.msra.mxu0 %v1529
  %2146 = vmatprep.mubr.bf16.mxu0 %v553
  %2147 = vmatmul.mubr.bf16.gmra.mrb[0].mxu0 %v552
  %v2148 = vpop.f32.mrb[0].mxu0
  %v2149 = vadd.f32 %v2108, %v2148
  %v2150 = vpop.f32.mrb[0].mxu0
  %v2151 = vpop.f32.mrb[0].mxu0
  %v2152 = vadd.f32 %v2111, %v2151
  %v2153 = vpop.f32.mrb[0].mxu0
  %2154 = vdwg.mxu0
  %2155 = vmatprep.subr.bf16.mxu0 0
  %2156 = vmatpush1.bf16.msra.mxu0 %v1530
  %2157 = vmatprep.subr.bf16.mxu0 0
  %2158 = vmatpush1.bf16.msra.mxu0 %v1531
  %2159 = vmatprep.subr.bf16.mxu0 0
  %2160 = vmatpush1.bf16.msra.mxu0 %v1532
  %2161 = vmatprep.subr.bf16.mxu0 0
  %2162 = vmatpush1.bf16.msra.mxu0 %v1533
  %2163 = vmatprep.subr.bf16.mxu0 0
  %2164 = vmatpush1.bf16.msra.mxu0 %v1534
  %2165 = vmatprep.subr.bf16.mxu0 0
  %2166 = vmatpush1.bf16.msra.mxu0 %v1535
  %2167 = vmatprep.subr.bf16.mxu0 0
  %2168 = vmatpush1.bf16.msra.mxu0 %v1536
  %2169 = vmatprep.subr.bf16.mxu0 0
  %2170 = vmatpush1.bf16.msra.mxu0 %v1537
  %2171 = vmatprep.subr.bf16.mxu0 0
  %2172 = vmatpush1.bf16.msra.mxu0 %v1538
  %2173 = vmatprep.subr.bf16.mxu0 0
  %2174 = vmatpush1.bf16.msra.mxu0 %v1539
  %2175 = vmatprep.subr.bf16.mxu0 0
  %2176 = vmatpush1.bf16.msra.mxu0 %v1540
  %2177 = vmatprep.subr.bf16.mxu0 0
  %2178 = vmatpush1.bf16.msra.mxu0 %v1541
  %2179 = vmatprep.subr.bf16.mxu0 0
  %2180 = vmatpush1.bf16.msra.mxu0 %v1542
  %2181 = vmatprep.subr.bf16.mxu0 0
  %2182 = vmatpush1.bf16.msra.mxu0 %v1543
  %2183 = vmatprep.subr.bf16.mxu0 0
  %2184 = vmatpush1.bf16.msra.mxu0 %v1544
  %2185 = vmatprep.subr.bf16.mxu0 0
  %2186 = vmatpush1.bf16.msra.mxu0 %v1545
  %2187 = vmatprep.mubr.bf16.mxu0 %v555
  %2188 = vmatmul.mubr.bf16.gmra.mrb[0].mxu0 %v554
  %v2189 = vpop.f32.mrb[0].mxu0
  %v2190 = vadd.f32 %v2149, %v2189
  %v2191 = vpop.f32.mrb[0].mxu0
  %v2192 = vpop.f32.mrb[0].mxu0
  %v2193 = vadd.f32 %v2152, %v2192
  %v2194 = vpop.f32.mrb[0].mxu0
  %2195 = vdwg.mxu0
  %2196 = vmatprep.subr.bf16.mxu0 0
  %2197 = vmatpush1.bf16.msra.mxu0 %v1546
  %2198 = vmatprep.subr.bf16.mxu0 0
  %2199 = vmatpush1.bf16.msra.mxu0 %v1547
  %2200 = vmatprep.subr.bf16.mxu0 0
  %2201 = vmatpush1.bf16.msra.mxu0 %v1548
  %2202 = vmatprep.subr.bf16.mxu0 0
  %2203 = vmatpush1.bf16.msra.mxu0 %v1549
  %2204 = vmatprep.subr.bf16.mxu0 0
  %2205 = vmatpush1.bf16.msra.mxu0 %v1550
  %2206 = vmatprep.subr.bf16.mxu0 0
  %2207 = vmatpush1.bf16.msra.mxu0 %v1551
  %2208 = vmatprep.subr.bf16.mxu0 0
  %2209 = vmatpush1.bf16.msra.mxu0 %v1552
  %2210 = vmatprep.subr.bf16.mxu0 0
  %2211 = vmatpush1.bf16.msra.mxu0 %v1553
  %2212 = vmatprep.subr.bf16.mxu0 0
  %2213 = vmatpush1.bf16.msra.mxu0 %v1554
  %2214 = vmatprep.subr.bf16.mxu0 0
  %2215 = vmatpush1.bf16.msra.mxu0 %v1555
  %2216 = vmatprep.subr.bf16.mxu0 0
  %2217 = vmatpush1.bf16.msra.mxu0 %v1556
  %2218 = vmatprep.subr.bf16.mxu0 0
  %2219 = vmatpush1.bf16.msra.mxu0 %v1557
  %2220 = vmatprep.subr.bf16.mxu0 0
  %2221 = vmatpush1.bf16.msra.mxu0 %v1558
  %2222 = vmatprep.subr.bf16.mxu0 0
  %2223 = vmatpush1.bf16.msra.mxu0 %v1559
  %2224 = vmatprep.subr.bf16.mxu0 0
  %2225 = vmatpush1.bf16.msra.mxu0 %v1560
  %2226 = vmatprep.subr.bf16.mxu0 0
  %2227 = vmatpush1.bf16.msra.mxu0 %v1561
  %2228 = vmatprep.mubr.bf16.mxu0 %v557
  %2229 = vmatmul.mubr.bf16.gmra.mrb[0].mxu0 %v556
  %v2230 = vpop.f32.mrb[0].mxu0
  %v2231 = vadd.f32 %v2190, %v2230
  %v2232 = vpop.f32.mrb[0].mxu0
  %v2233 = vpop.f32.mrb[0].mxu0
  %v2234 = vadd.f32 %v2193, %v2233
  %v2235 = vpop.f32.mrb[0].mxu0
  %2236 = vdwg.mxu0
  %2237 = vmatprep.subr.bf16.mxu0 0
  %2238 = vmatpush1.bf16.msra.mxu0 %v1562
  %2239 = vmatprep.subr.bf16.mxu0 0
  %2240 = vmatpush1.bf16.msra.mxu0 %v1563
  %2241 = vmatprep.subr.bf16.mxu0 0
  %2242 = vmatpush1.bf16.msra.mxu0 %v1564
  %2243 = vmatprep.subr.bf16.mxu0 0
  %2244 = vmatpush1.bf16.msra.mxu0 %v1565
  %2245 = vmatprep.subr.bf16.mxu0 0
  %2246 = vmatpush1.bf16.msra.mxu0 %v1566
  %2247 = vmatprep.subr.bf16.mxu0 0
  %2248 = vmatpush1.bf16.msra.mxu0 %v1567
  %2249 = vmatprep.subr.bf16.mxu0 0
  %2250 = vmatpush1.bf16.msra.mxu0 %v1568
  %2251 = vmatprep.subr.bf16.mxu0 0
  %2252 = vmatpush1.bf16.msra.mxu0 %v1569
  %2253 = vmatprep.subr.bf16.mxu0 0
  %2254 = vmatpush1.bf16.msra.mxu0 %v1570
  %2255 = vmatprep.subr.bf16.mxu0 0
  %2256 = vmatpush1.bf16.msra.mxu0 %v1571
  %2257 = vmatprep.subr.bf16.mxu0 0
  %2258 = vmatpush1.bf16.msra.mxu0 %v1572
  %2259 = vmatprep.subr.bf16.mxu0 0
  %2260 = vmatpush1.bf16.msra.mxu0 %v1573
  %2261 = vmatprep.subr.bf16.mxu0 0
  %2262 = vmatpush1.bf16.msra.mxu0 %v1574
  %2263 = vmatprep.subr.bf16.mxu0 0
  %2264 = vmatpush1.bf16.msra.mxu0 %v1575
  %2265 = vmatprep.subr.bf16.mxu0 0
  %2266 = vmatpush1.bf16.msra.mxu0 %v1576
  %2267 = vmatprep.subr.bf16.mxu0 0
  %2268 = vmatpush1.bf16.msra.mxu0 %v1577
  %2269 = vmatprep.mubr.bf16.mxu0 %v559
  %2270 = vmatmul.mubr.bf16.gmra.mrb[0].mxu0 %v558
  %v2271 = vpop.f32.mrb[0].mxu0
  %v2272 = vadd.f32 %v2231, %v2271
  %v2273 = vpop.f32.mrb[0].mxu0
  %v2274 = vpop.f32.mrb[0].mxu0
  %v2275 = vadd.f32 %v2234, %v2274
  %v2276 = vpop.f32.mrb[0].mxu0
  %2277 = vdwg.mxu0
  %2278 = vmatprep.subr.bf16.mxu0 0
  %2279 = vmatpush1.bf16.msra.mxu0 %v1578
  %2280 = vmatprep.subr.bf16.mxu0 0
  %2281 = vmatpush1.bf16.msra.mxu0 %v1579
  %2282 = vmatprep.subr.bf16.mxu0 0
  %2283 = vmatpush1.bf16.msra.mxu0 %v1580
  %2284 = vmatprep.subr.bf16.mxu0 0
  %2285 = vmatpush1.bf16.msra.mxu0 %v1581
  %2286 = vmatprep.subr.bf16.mxu0 0
  %2287 = vmatpush1.bf16.msra.mxu0 %v1582
  %2288 = vmatprep.subr.bf16.mxu0 0
  %2289 = vmatpush1.bf16.msra.mxu0 %v1583
  %2290 = vmatprep.subr.bf16.mxu0 0
  %2291 = vmatpush1.bf16.msra.mxu0 %v1584
  %2292 = vmatprep.subr.bf16.mxu0 0
  %2293 = vmatpush1.bf16.msra.mxu0 %v1585
  %2294 = vmatprep.subr.bf16.mxu0 0
  %2295 = vmatpush1.bf16.msra.mxu0 0
  %2296 = vmatprep.subr.bf16.mxu0 0
  %2297 = vmatpush1.bf16.msra.mxu0 0
  %2298 = vmatprep.subr.bf16.mxu0 0
  %2299 = vmatpush1.bf16.msra.mxu0 0
  %2300 = vmatprep.subr.bf16.mxu0 0
  %2301 = vmatpush1.bf16.msra.mxu0 0
  %2302 = vmatprep.subr.bf16.mxu0 0
  %2303 = vmatpush1.bf16.msra.mxu0 0
  %2304 = vmatprep.subr.bf16.mxu0 0
  %2305 = vmatpush1.bf16.msra.mxu0 0
  %2306 = vmatprep.subr.bf16.mxu0 0
  %2307 = vmatpush1.bf16.msra.mxu0 0
  %2308 = vmatprep.subr.bf16.mxu0 0
  %2309 = vmatpush1.bf16.msra.mxu0 0
  %2310 = vmatprep.mubr.bf16.mxu0 0
  %2311 = vmatmul.mubr.bf16.gmra.mrb[0].mxu0 %v560
  %v2312 = vpop.f32.mrb[0].mxu0
  %v2313 = vadd.f32 %v2272, %v2312
  %v2314 = vpop.f32.mrb[0].mxu0
  %v2315 = vpop.f32.mrb[0].mxu0
  %v2316 = vadd.f32 %v2275, %v2315
  %v2317 = vpop.f32.mrb[0].mxu0
  %2318 = vdwg.mxu0
  %v2319 = vmax.f32 %v2313, 0.0
  %v2320 = vmax.f32 %v2316, 0.0
  %v2321 = vpack.c.bf16 %v2320, %v2319
  %v2322 = vld [vmem:[%s3] sm:$0xf]
  %v2323 = vld [vmem:[%s3 + $0x4] sm:$0xf]
  %v2324 = vld [vmem:[%s3 + $0x8] sm:$0xf]
  %v2325 = vld [vmem:[%s3 + $0xc] sm:$0xf]
  %v2326 = vld [vmem:[%s3 + $0x10] sm:$0xf]
  %v2327 = vld [vmem:[%s3 + $0x14] sm:$0xf]
  %v2328 = vld [vmem:[%s3 + $0x18] sm:$0xf]
  %v2329 = vld [vmem:[%s3 + $0x1c] sm:$0xf]
  %v2330 = vld [vmem:[%s3 + $0x20] sm:$0xf]
  %v2331 = vld [vmem:[%s3 + $0x24] sm:$0xf]
  %v2332 = vld [vmem:[%s3 + $0x28] sm:$0xf]
  %v2333 = vld [vmem:[%s3 + $0x2c] sm:$0xf]
  %v2334 = vld [vmem:[%s3 + $0x30] sm:$0xf]
  %v2335 = vld [vmem:[%s3 + $0x34] sm:$0xf]
  %v2336 = vld [vmem:[%s3 + $0x38] sm:$0xf]
  %v2337 = vld [vmem:[%s3 + $0x3c] sm:$0xf]
  %v2338 = vld [vmem:[%s4] sm:$0x1]
  %v2340 = vlaneseq
  %v2341 = vshrl.u32 %v2340, 7
  %v2342 = vsub.s32 0, %v2341
  %v2343 = vrot.slane %v2338, %v2342
  %v2361 = vunpack.c.l.b16 %v2322
  %v2362 = vunpack.c.l.b16 %v2323
  %v2363 = vunpack.c.l.b16 %v2324
  %v2364 = vunpack.c.l.b16 %v2325
  %v2365 = vunpack.c.l.b16 %v2326
  %v2366 = vunpack.c.l.b16 %v2327
  %v2367 = vunpack.c.l.b16 %v2328
  %v2368 = vunpack.c.l.b16 %v2329
  %v2369 = vunpack.c.l.b16 %v2330
  %v2370 = vunpack.c.l.b16 %v2331
  %v2371 = vunpack.c.l.b16 %v2332
  %v2372 = vunpack.c.l.b16 %v2333
  %v2373 = vunpack.c.l.b16 %v2334
  %v2374 = vunpack.c.l.b16 %v2335
  %v2375 = vunpack.c.l.b16 %v2336
  %v2376 = vunpack.c.l.b16 %v2337
  %v2377 = vpack.c.b16 %v2362, %v2361
  %v2378 = vpack.c.b16 %v2364, %v2363
  %v2379 = vpack.c.b16 %v2366, %v2365
  %v2380 = vpack.c.b16 %v2368, %v2367
  %v2381 = vpack.c.b16 %v2370, %v2369
  %v2382 = vpack.c.b16 %v2372, %v2371
  %v2383 = vpack.c.b16 %v2374, %v2373
  %v2384 = vpack.c.b16 %v2376, %v2375
  %2393 = vmatprep.subr.bf16.mxu0 0
  %2394 = vmatpush1.bf16.msra.mxu0 %v2377
  %2395 = vmatprep.subr.bf16.mxu0 0
  %2396 = vmatpush1.bf16.msra.mxu0 %v2378
  %2397 = vmatprep.subr.bf16.mxu0 0
  %2398 = vmatpush1.bf16.msra.mxu0 %v2379
  %2399 = vmatprep.subr.bf16.mxu0 0
  %2400 = vmatpush1.bf16.msra.mxu0 %v2380
  %2401 = vmatprep.subr.bf16.mxu0 0
  %2402 = vmatpush1.bf16.msra.mxu0 %v2381
  %2403 = vmatprep.subr.bf16.mxu0 0
  %2404 = vmatpush1.bf16.msra.mxu0 %v2382
  %2405 = vmatprep.subr.bf16.mxu0 0
  %2406 = vmatpush1.bf16.msra.mxu0 %v2383
  %2407 = vmatprep.subr.bf16.mxu0 0
  %2408 = vmatpush1.bf16.msra.mxu0 %v2384
  %2409 = vmatprep.subr.bf16.mxu0 0
  %2410 = vmatpush1.bf16.msra.mxu0 0
  %2411 = vmatprep.subr.bf16.mxu0 0
  %2412 = vmatpush1.bf16.msra.mxu0 0
  %2413 = vmatprep.subr.bf16.mxu0 0
  %2414 = vmatpush1.bf16.msra.mxu0 0
  %2415 = vmatprep.subr.bf16.mxu0 0
  %2416 = vmatpush1.bf16.msra.mxu0 0
  %2417 = vmatprep.subr.bf16.mxu0 0
  %2418 = vmatpush1.bf16.msra.mxu0 0
  %2419 = vmatprep.subr.bf16.mxu0 0
  %2420 = vmatpush1.bf16.msra.mxu0 0
  %2421 = vmatprep.subr.bf16.mxu0 0
  %2422 = vmatpush1.bf16.msra.mxu0 0
  %2423 = vmatprep.subr.bf16.mxu0 0
  %2424 = vmatpush1.bf16.msra.mxu0 0
  %2425 = vmatprep.mubr.bf16.mxu0 0
  %2426 = vmatmul.mubr.bf16.gmra.mrb[0].mxu0 %v2321
  %v2427 = vpop.f32.mrb[0].mxu0
  %v2428 = vadd.f32 %v2343, %v2427
  %v2429 = vpop.f32.mrb[0].mxu0
  %v2430 = vpop.f32.mrb[0].mxu0
  %v2431 = vadd.f32 %v2343, %v2430
  %v2432 = vpop.f32.mrb[0].mxu0
  %2433 = vdwg.mxu0
  %v2434 = vmax.f32 %v2428, 0.0
  %v2435 = vmax.f32 %v2431, 0.0
  %v2436 = vpack.c.bf16 %v2435, %v2434
  %v2437 = vld [vmem:[%s5] sm:$0xf]
  %v2438 = vld [vmem:[%s5 + $0x4] sm:$0xf]
  %v2439 = vld [vmem:[%s5 + $0x8] sm:$0xf]
  %v2440 = vld [vmem:[%s5 + $0xc] sm:$0xf]
  %v2441 = vld [vmem:[%s5 + $0x10] sm:$0xf]
  %v2442 = vld [vmem:[%s5 + $0x14] sm:$0xf]
  %v2443 = vld [vmem:[%s5 + $0x18] sm:$0xf]
  %v2444 = vld [vmem:[%s5 + $0x1c] sm:$0xf]
  %v2445 = vld [vmem:[%s5 + $0x20] sm:$0xf]
  %v2446 = vld [vmem:[%s5 + $0x24] sm:$0xf]
  %v2447 = vld [vmem:[%s5 + $0x28] sm:$0xf]
  %v2448 = vld [vmem:[%s5 + $0x2c] sm:$0xf]
  %v2449 = vld [vmem:[%s5 + $0x30] sm:$0xf]
  %v2450 = vld [vmem:[%s5 + $0x34] sm:$0xf]
  %v2451 = vld [vmem:[%s5 + $0x38] sm:$0xf]
  %v2452 = vld [vmem:[%s5 + $0x3c] sm:$0xf]
  %v2453 = vld [vmem:[%s6] sm:$0x1]
  %v2455 = vlaneseq
  %v2456 = vshrl.u32 %v2455, 7
  %v2457 = vsub.s32 0, %v2456
  %v2458 = vrot.slane %v2453, %v2457
  %v2476 = vunpack.c.l.b16 %v2437
  %v2477 = vunpack.c.l.b16 %v2438
  %v2478 = vunpack.c.l.b16 %v2439
  %v2479 = vunpack.c.l.b16 %v2440
  %v2480 = vunpack.c.l.b16 %v2441
  %v2481 = vunpack.c.l.b16 %v2442
  %v2482 = vunpack.c.l.b16 %v2443
  %v2483 = vunpack.c.l.b16 %v2444
  %v2484 = vunpack.c.l.b16 %v2445
  %v2485 = vunpack.c.l.b16 %v2446
  %v2486 = vunpack.c.l.b16 %v2447
  %v2487 = vunpack.c.l.b16 %v2448
  %v2488 = vunpack.c.l.b16 %v2449
  %v2489 = vunpack.c.l.b16 %v2450
  %v2490 = vunpack.c.l.b16 %v2451
  %v2491 = vunpack.c.l.b16 %v2452
  %v2492 = vpack.c.b16 %v2477, %v2476
  %v2493 = vpack.c.b16 %v2479, %v2478
  %v2494 = vpack.c.b16 %v2481, %v2480
  %v2495 = vpack.c.b16 %v2483, %v2482
  %v2496 = vpack.c.b16 %v2485, %v2484
  %v2497 = vpack.c.b16 %v2487, %v2486
  %v2498 = vpack.c.b16 %v2489, %v2488
  %v2499 = vpack.c.b16 %v2491, %v2490
  %2508 = vmatprep.subr.bf16.mxu0 0
  %2509 = vmatpush1.bf16.msra.mxu0 %v2492
  %2510 = vmatprep.subr.bf16.mxu0 0
  %2511 = vmatpush1.bf16.msra.mxu0 %v2493
  %2512 = vmatprep.subr.bf16.mxu0 0
  %2513 = vmatpush1.bf16.msra.mxu0 %v2494
  %2514 = vmatprep.subr.bf16.mxu0 0
  %2515 = vmatpush1.bf16.msra.mxu0 %v2495
  %2516 = vmatprep.subr.bf16.mxu0 0
  %2517 = vmatpush1.bf16.msra.mxu0 %v2496
  %2518 = vmatprep.subr.bf16.mxu0 0
  %2519 = vmatpush1.bf16.msra.mxu0 %v2497
  %2520 = vmatprep.subr.bf16.mxu0 0
  %2521 = vmatpush1.bf16.msra.mxu0 %v2498
  %2522 = vmatprep.subr.bf16.mxu0 0
  %2523 = vmatpush1.bf16.msra.mxu0 %v2499
  %2524 = vmatprep.subr.bf16.mxu0 0
  %2525 = vmatpush1.bf16.msra.mxu0 0
  %2526 = vmatprep.subr.bf16.mxu0 0
  %2527 = vmatpush1.bf16.msra.mxu0 0
  %2528 = vmatprep.subr.bf16.mxu0 0
  %2529 = vmatpush1.bf16.msra.mxu0 0
  %2530 = vmatprep.subr.bf16.mxu0 0
  %2531 = vmatpush1.bf16.msra.mxu0 0
  %2532 = vmatprep.subr.bf16.mxu0 0
  %2533 = vmatpush1.bf16.msra.mxu0 0
  %2534 = vmatprep.subr.bf16.mxu0 0
  %2535 = vmatpush1.bf16.msra.mxu0 0
  %2536 = vmatprep.subr.bf16.mxu0 0
  %2537 = vmatpush1.bf16.msra.mxu0 0
  %2538 = vmatprep.subr.bf16.mxu0 0
  %2539 = vmatpush1.bf16.msra.mxu0 0
  %2540 = vmatprep.mubr.bf16.mxu0 0
  %2541 = vmatmul.mubr.bf16.gmra.mrb[0].mxu0 %v2436
  %v2542 = vpop.f32.mrb[0].mxu0
  %v2543 = vadd.f32 %v2458, %v2542
  %v2544 = vpop.f32.mrb[0].mxu0
  %v2545 = vpop.f32.mrb[0].mxu0
  %v2546 = vadd.f32 %v2458, %v2545
  %v2547 = vpop.f32.mrb[0].mxu0
  %2548 = vdwg.mxu0
  %2549 = vst [vmem:[%s7] sm:$0xff] %v2543
  %2550 = vst [vmem:[%s7 + $0x8] sm:$0xff] %v2546
  // Predicated region
  $region30: #{net_forward.5} parent=0 // pred_check
    _
  $region31: #{net_forward.5} parent=0 // pred_check_branch
    %2552 = sbr.rel (0) target = $region33
  $region32: #{net_forward.5} parent=0 // pred_region
    _
  $region33: #{net_forward.5} parent=0 // pred_fallthru
    _
  // Predicated region
  $region34: #{net_forward.5} parent=0 // pred_check
    _
  $region35: #{net_forward.5} parent=0 // pred_check_branch
    %2554 = sbr.rel (0) target = $region37
  $region36: #{net_forward.5} parent=0 // pred_region
    _
  $region37: #{net_forward.5} parent=0 // pred_fallthru
    _

</llo_original>
